<compile_context>
chip_gen: v6e
topology: v6e:2x2x1
jax: 0.10.0
libtpu: 0.0.40
codegen_flags: <defaults>
</compile_context>

<pallas_src>
import functools
import math

import jax
import jax.numpy as jnp
from jax import lax
from jax.experimental import pallas as pl
from jax.experimental.pallas import tpu as pltpu

NEG_INF = -1e30  # large finite negative: safe even if a row were fully masked


def transphono_kernel(x_ref, pe_ref,
                      inw_ref, inb_ref, ow_ref, ob_ref,
                      l1w_ref, l1b_ref, l2w_ref, l2b_ref,
                      n1w_ref, n1b_ref, n2w_ref, n2b_ref,
                      decw_ref, decb_ref,
                      out_ref,
                      *, seq, embed, nhead, nlayers, d_hid_scale, eps):
    S, E, H = seq, embed, nhead
    Dh = E // H
    CB = x_ref.shape[0]          # batch elements handled by this grid step
    R = CB * S                   # flattened row count for full-width matmuls
    bf16, f32 = jnp.bfloat16, jnp.float32

    def layer_norm(y, gamma, beta):
        mu = jnp.mean(y, axis=-1, keepdims=True)
        d = y - mu
        var = jnp.mean(d * d, axis=-1, keepdims=True)
        return d * lax.rsqrt(var + eps) * gamma + beta          # EUP rsqrt

    # Embedding scale + positional encoding, flattened to [CB*S, E] rows so
    # every projection / FFN / decoder matmul is one full-width MXU op.
    x = (x_ref[...] * d_hid_scale + pe_ref[...]).reshape(R, E)

    # Causal mask built in-kernel (VPU iota + select, no [S,S] input DMA).
    rows = lax.broadcasted_iota(jnp.int32, (S, S), 0)
    cols = lax.broadcasted_iota(jnp.int32, (S, S), 1)
    mask = jnp.where(cols > rows, NEG_INF, 0.0).astype(f32)      # [S, S]

    for l in range(nlayers):                                     # static unroll
        # ---- fused QKV projection: one [R,E] x [E,3E] matmul ----
        qkv = jnp.dot(x.astype(bf16), inw_ref[l],
                      preferred_element_type=f32) + inb_ref[l]   # [R, 3E]
        qkv_bf = qkv.astype(bf16).reshape(CB, S, 3 * E)

        # ---- per-head attention (score/PV math is inherently Dh-wide) ----
        heads = []
        for h in range(H):
            q_h = qkv_bf[:, :, h * Dh:(h + 1) * Dh]              # [CB, S, Dh]
            k_h = qkv_bf[:, :, E + h * Dh:E + (h + 1) * Dh]
            v_h = qkv_bf[:, :, 2 * E + h * Dh:2 * E + (h + 1) * Dh]
            sc = jnp.einsum('bqd,bkd->bqk', q_h, k_h,
                            preferred_element_type=f32) + mask[None]
            m = jnp.max(sc, axis=-1, keepdims=True)
            p = jnp.exp(sc - m)
            p = p * pl.reciprocal(jnp.sum(p, axis=-1, keepdims=True),
                                  approx=True)
            heads.append(jnp.einsum('bqk,bkd->bqd', p.astype(bf16), v_h,
                                    preferred_element_type=f32))
        # ---- head merge (lane concat) + ONE [R,E] x [E,E] out-projection ----
        o = jnp.concatenate(heads, axis=-1).reshape(R, E)
        attn = jnp.dot(o.astype(bf16), ow_ref[l],
                       preferred_element_type=f32) + ob_ref[l]
        x = layer_norm(x + attn, n1w_ref[l], n1b_ref[l])          # post-norm

        # ---- feed-forward (ReLU) ----
        ff = jnp.maximum(
            jnp.dot(x.astype(bf16), l1w_ref[l],
                    preferred_element_type=f32) + l1b_ref[l], 0.0)
        ff = jnp.dot(ff.astype(bf16), l2w_ref[l],
                     preferred_element_type=f32) + l2b_ref[l]
        x = layer_norm(x + ff, n2w_ref[l], n2b_ref[l])

    # ---- decoder linear (lane-dense: ntoken padded to a 128 multiple) ----
    dec = jnp.dot(x.astype(bf16), decw_ref[...],
                  preferred_element_type=f32) + decb_ref[...]
    out_ref[...] = dec.reshape(CB, S, decw_ref.shape[1])


def _num_batch_chunks(B):
    """2 parallel grid steps only on 2-TensorCore chips (v7x); else 1."""
    try:
        kind = jax.devices()[0].device_kind.lower()
    except Exception:
        kind = ""
    return 2 if ("v7" in kind and B % 2 == 0) else 1


def transphono_forward(src_tokens, params, *, nhead, d_hid, nlayers):
    """src_tokens: [S, B] int32 (PyTorch seq-first). Returns [S, B, ntoken] f32."""
    S, B = src_tokens.shape
    emb_w = params['emb_w']
    E = emb_w.shape[1]
    ntoken = params['dec_w'].shape[1]
    H = nhead
    Dh = E // H
    out_pad = ((ntoken + 127) // 128) * 128
    assert S <= params['pe'].shape[0], "seq length exceeds positional-encoding buffer"

    bf16 = jnp.bfloat16

    # --- host-side glue: embedding gather, positional table ---
    emb = jnp.transpose(emb_w[src_tokens], (1, 0, 2)).astype(jnp.float32)   # [B,S,E]
    pe = params['pe'][:S].astype(jnp.float32)                               # [S,E]

    # --- host-side weight packing: lane-dense fused layouts,
    #     1/sqrt(Dh) folded into the Q columns of the fused QKV weight/bias ---
    scale = 1.0 / math.sqrt(Dh)
    q_scale = jnp.concatenate([jnp.full((E,), scale, jnp.float32),
                               jnp.ones((2 * E,), jnp.float32)])            # [3E]
    inw = (params['in_w'] * q_scale[None, None, :]).astype(bf16)            # [L,E,3E]
    inb = params['in_b'] * q_scale[None, None, :]                           # [L,1,3E]

    decw = jnp.zeros((E, out_pad), jnp.float32).at[:, :ntoken].set(params['dec_w'])
    decb = jnp.zeros((1, out_pad), jnp.float32).at[:, :ntoken].set(params['dec_b'])

    weights = (inw, inb,
               params['out_w'].astype(bf16), params['out_b'],
               params['l1_w'].astype(bf16), params['l1_b'],
               params['l2_w'].astype(bf16), params['l2_b'],
               params['n1_w'], params['n1_b'], params['n2_w'], params['n2_b'],
               decw.astype(bf16), decb)

    num_chunks = _num_batch_chunks(B)
    CB = B // num_chunks

    kernel = functools.partial(
        transphono_kernel, seq=S, embed=E, nhead=H, nlayers=nlayers,
        d_hid_scale=math.sqrt(d_hid), eps=1e-5)

    def full_spec(arr):  # whole array resident in VMEM, same block every step
        zeros = (0,) * arr.ndim
        return pl.BlockSpec(arr.shape, lambda c, _z=zeros: _z)

    in_specs = [pl.BlockSpec((CB, S, E), lambda c: (c, 0, 0)),    # batch chunk
                pl.BlockSpec((S, E), lambda c: (0, 0))]           # pe
    in_specs += [full_spec(w) for w in weights]

    # advisory cost estimate (QKV + scores + PV + out-proj + FFN + decoder)
    flops = (2 * B * S * E * (4 * E) + 4 * B * S * S * E
             + 4 * B * S * E * d_hid) * nlayers + 2 * B * S * E * out_pad
    transc = B * nlayers * H * S * (S + 1) + 4 * B * S * nlayers
    bytes_acc = (emb.size * 4 + pe.size * 4 + B * S * out_pad * 4
                 + sum(int(w.size) * w.dtype.itemsize for w in weights))

    # TODO(synk): at production scale (large E / nlayers, v7x 64 MiB VMEM)
    # stream per-layer weights via an "arbitrary" grid axis over layers with
    # the activation carried in a VMEM scratch, instead of keeping all layers
    # resident.
    out = pl.pallas_call(
        kernel,
        out_shape=jax.ShapeDtypeStruct((B, S, out_pad), jnp.float32),
        grid=(num_chunks,),
        in_specs=in_specs,
        out_specs=pl.BlockSpec((CB, S, out_pad), lambda c: (c, 0, 0)),
        compiler_params=pltpu.CompilerParams(
            dimension_semantics=("parallel",)),
        cost_estimate=pl.CostEstimate(flops=flops, transcendentals=transc,
                                      bytes_accessed=bytes_acc),
    )(emb, pe, *weights)

    return jnp.transpose(out[..., :ntoken], (1, 0, 2))             # [S, B, ntoken]


def init_params(key, ntoken, E, d_hid, nlayers, max_len):
    keys = jax.random.split(key, 10)
    initrange = 0.1

    def u(k, shape, scale):
        return jax.random.uniform(k, shape, jnp.float32, -scale, scale)

    se = 1.0 / math.sqrt(E)
    sh = 1.0 / math.sqrt(d_hid)
    params = {
        'emb_w': u(keys[0], (ntoken, E), initrange),
        # all weights stored pre-transposed: [in_features, out_features]
        'dec_w': u(keys[1], (E, ntoken), initrange),
        'dec_b': jnp.zeros((1, ntoken), jnp.float32),
        'in_w':  u(keys[2], (nlayers, E, 3 * E), se),
        'in_b':  u(keys[3], (nlayers, 1, 3 * E), se),
        'out_w': u(keys[4], (nlayers, E, E), se),
        'out_b': u(keys[5], (nlayers, 1, E), se),
        'l1_w':  u(keys[6], (nlayers, E, d_hid), se),
        'l1_b':  u(keys[7], (nlayers, 1, d_hid), se),
        'l2_w':  u(keys[8], (nlayers, d_hid, E), sh),
        'l2_b':  u(keys[9], (nlayers, 1, E), sh),
        'n1_w':  jnp.ones((nlayers, 1, E), jnp.float32),
        'n1_b':  jnp.zeros((nlayers, 1, E), jnp.float32),
        'n2_w':  jnp.ones((nlayers, 1, E), jnp.float32),
        'n2_b':  jnp.zeros((nlayers, 1, E), jnp.float32),
    }
    # PositionalEncoding buffer (max_len = config['batch_size'] in the module)
    position = jnp.arange(max_len, dtype=jnp.float32)[:, None]
    div_term = jnp.exp(jnp.arange(0, E, 2, dtype=jnp.float32)
                       * (-math.log(10000.0) / E))
    pe = jnp.zeros((max_len, E), jnp.float32)
    pe = pe.at[:, 0::2].set(jnp.sin(position * div_term))
    pe = pe.at[:, 1::2].set(jnp.cos(position * div_term))
    params['pe'] = pe
    return params


def ref_forward(src_tokens, params, *, nhead, d_hid, nlayers, eps=1e-5):
    """Pure-JAX f32 reference of the same forward pass (eval mode)."""
    S, B = src_tokens.shape
    E = params['emb_w'].shape[1]
    H, Dh = nhead, E // nhead
    x = jnp.transpose(params['emb_w'][src_tokens], (1, 0, 2))      # [B, S, E]
    x = x * math.sqrt(d_hid) + params['pe'][:S][None]
    idx = jnp.arange(S)
    mask = jnp.where(idx[None, :] > idx[:, None], NEG_INF, 0.0).astype(jnp.float32)

    def ln(y, g, b):
        mu = y.mean(-1, keepdims=True)
        var = ((y - mu) ** 2).mean(-1, keepdims=True)
        return (y - mu) / jnp.sqrt(var + eps) * g + b

    for l in range(nlayers):
        qkv = x @ params['in_w'][l] + params['in_b'][l]
        q, k, v = jnp.split(qkv, 3, axis=-1)
        qh = q.reshape(B, S, H, Dh).transpose(0, 2, 1, 3)
        kh = k.reshape(B, S, H, Dh).transpose(0, 2, 1, 3)
        vh = v.reshape(B, S, H, Dh).transpose(0, 2, 1, 3)
        sc = jnp.einsum('bhsd,bhtd->bhst', qh, kh) / math.sqrt(Dh) + mask
        p = jax.nn.softmax(sc, axis=-1)
        o = jnp.einsum('bhst,bhtd->bhsd', p, vh).transpose(0, 2, 1, 3).reshape(B, S, E)
        o = o @ params['out_w'][l] + params['out_b'][l]
        x = ln(x + o, params['n1_w'][l], params['n1_b'][l])
        ff = jax.nn.relu(x @ params['l1_w'][l] + params['l1_b'][l])
        ff = ff @ params['l2_w'][l] + params['l2_b'][l]
        x = ln(x + ff, params['n2_w'][l], params['n2_b'][l])
    out = x @ params['dec_w'] + params['dec_b']
    return jnp.transpose(out, (1, 0, 2))                           # [S, B, ntoken]


if __name__ == "__main__":
    # small config consistent with the module: ntoken = #phonemes, embed_size,
    # nhead, d_hid, nlayers; positional-encoding max_len = config['batch_size']
    ntoken, E, nhead, d_hid, nlayers = 12, 32, 4, 64, 2
    S, B = 8, 2
    max_len = 16

    key = jax.random.PRNGKey(0)
    pkey, dkey = jax.random.split(key)
    params = init_params(pkey, ntoken, E, d_hid, nlayers, max_len)
    src = jax.random.randint(dkey, (S, B), 0, ntoken, dtype=jnp.int32)

    out = transphono_forward(src, params, nhead=nhead, d_hid=d_hid, nlayers=nlayers)
    out = jax.block_until_ready(out)
    assert out.shape == (S, B, ntoken)

    ref = ref_forward(src, params, nhead=nhead, d_hid=d_hid, nlayers=nlayers)
    # bf16 MXU operands + approximate EUP reciprocal => loosened tolerance vs f32 ref
    if not jnp.allclose(out, ref, atol=5e-2, rtol=5e-2):
        raise AssertionError(
            f"kernel/reference mismatch, max abs diff "
            f"{float(jnp.max(jnp.abs(out - ref)))}")
    print("KERNEL_OK")
</pallas_src>

<mosaic_0001>
module attributes {stable_mosaic.version = 11 : i64} {
  func.func @transphono_kernel(%arg0: i32, %arg1: memref<2x8x32xf32, #tpu.memory_space<vmem>>, %arg2: memref<8x32xf32, #tpu.memory_space<vmem>>, %arg3: memref<2x32x96xbf16, #tpu.memory_space<vmem>>, %arg4: memref<2x1x96xf32, #tpu.memory_space<vmem>>, %arg5: memref<2x32x32xbf16, #tpu.memory_space<vmem>>, %arg6: memref<2x1x32xf32, #tpu.memory_space<vmem>>, %arg7: memref<2x32x64xbf16, #tpu.memory_space<vmem>>, %arg8: memref<2x1x64xf32, #tpu.memory_space<vmem>>, %arg9: memref<2x64x32xbf16, #tpu.memory_space<vmem>>, %arg10: memref<2x1x32xf32, #tpu.memory_space<vmem>>, %arg11: memref<2x1x32xf32, #tpu.memory_space<vmem>>, %arg12: memref<2x1x32xf32, #tpu.memory_space<vmem>>, %arg13: memref<2x1x32xf32, #tpu.memory_space<vmem>>, %arg14: memref<2x1x32xf32, #tpu.memory_space<vmem>>, %arg15: memref<32x128xbf16, #tpu.memory_space<vmem>>, %arg16: memref<1x128xf32, #tpu.memory_space<vmem>>, %arg17: memref<2x8x128xf32, #tpu.memory_space<vmem>>) attributes {dimension_semantics = [#tpu.dimension_semantics<parallel>], iteration_bounds = array<i64: 1>, scalar_prefetch = 0 : i64, scratch_operands = 0 : i64, tpu.core_type = #tpu.core_type<tc>, window_params = [{transform_indices = @transform_0, window_bounds = array<i64: 2, 8, 32>}, {pipeline_mode = #tpu.pipeline_mode<synchronous>, transform_indices = @transform_1, window_bounds = array<i64: 8, 32>}, {pipeline_mode = #tpu.pipeline_mode<synchronous>, transform_indices = @transform_2, window_bounds = array<i64: 2, 32, 96>}, {pipeline_mode = #tpu.pipeline_mode<synchronous>, transform_indices = @transform_3, window_bounds = array<i64: 2, 1, 96>}, {pipeline_mode = #tpu.pipeline_mode<synchronous>, transform_indices = @transform_4, window_bounds = array<i64: 2, 32, 32>}, {pipeline_mode = #tpu.pipeline_mode<synchronous>, transform_indices = @transform_5, window_bounds = array<i64: 2, 1, 32>}, {pipeline_mode = #tpu.pipeline_mode<synchronous>, transform_indices = @transform_6, window_bounds = array<i64: 2, 32, 64>}, {pipeline_mode = #tpu.pipeline_mode<synchronous>, transform_indices = @transform_7, window_bounds = array<i64: 2, 1, 64>}, {pipeline_mode = #tpu.pipeline_mode<synchronous>, transform_indices = @transform_8, window_bounds = array<i64: 2, 64, 32>}, {pipeline_mode = #tpu.pipeline_mode<synchronous>, transform_indices = @transform_9, window_bounds = array<i64: 2, 1, 32>}, {pipeline_mode = #tpu.pipeline_mode<synchronous>, transform_indices = @transform_10, window_bounds = array<i64: 2, 1, 32>}, {pipeline_mode = #tpu.pipeline_mode<synchronous>, transform_indices = @transform_11, window_bounds = array<i64: 2, 1, 32>}, {pipeline_mode = #tpu.pipeline_mode<synchronous>, transform_indices = @transform_12, window_bounds = array<i64: 2, 1, 32>}, {pipeline_mode = #tpu.pipeline_mode<synchronous>, transform_indices = @transform_13, window_bounds = array<i64: 2, 1, 32>}, {pipeline_mode = #tpu.pipeline_mode<synchronous>, transform_indices = @transform_14, window_bounds = array<i64: 32, 128>}, {pipeline_mode = #tpu.pipeline_mode<synchronous>, transform_indices = @transform_15, window_bounds = array<i64: 1, 128>}, {transform_indices = @transform_16, window_bounds = array<i64: 2, 8, 128>}]} {
    %c0 = arith.constant 0 : index
    %c0_0 = arith.constant 0 : index
    %c0_1 = arith.constant 0 : index
    %0 = vector.load %arg1[%c0, %c0_0, %c0_1] : memref<2x8x32xf32, #tpu.memory_space<vmem>>, vector<2x8x32xf32>
    %cst = arith.constant 8.000000e+00 : f32
    %1 = vector.broadcast %cst : f32 to vector<2x8x32xf32>
    %2 = arith.mulf %0, %1 : vector<2x8x32xf32>
    %c0_2 = arith.constant 0 : index
    %c0_3 = arith.constant 0 : index
    %3 = vector.load %arg2[%c0_2, %c0_3] : memref<8x32xf32, #tpu.memory_space<vmem>>, vector<8x32xf32>
    %4 = vector.shape_cast %3 : vector<8x32xf32> to vector<1x8x32xf32>
    %5 = vector.broadcast %4 : vector<1x8x32xf32> to vector<2x8x32xf32>
    %6 = arith.addf %2, %5 : vector<2x8x32xf32>
    %7 = vector.shape_cast %6 : vector<2x8x32xf32> to vector<16x32xf32>
    %8 = tpu.iota {dimensions = array<i32: 0>} : vector<8x8xi32>
    %9 = tpu.iota {dimensions = array<i32: 1>} : vector<8x8xi32>
    %10 = arith.cmpi sgt, %9, %8 : vector<8x8xi32>
    %cst_4 = arith.constant -1.000000e+30 : f32
    %cst_5 = arith.constant 0.000000e+00 : f32
    %11 = vector.broadcast %cst_4 : f32 to vector<8x8xf32>
    %12 = vector.broadcast %cst_5 : f32 to vector<8x8xf32>
    %13 = arith.select %10, %11, %12 : vector<8x8xi1>, vector<8x8xf32>
    %14 = arith.truncf %7 : vector<16x32xf32> to vector<16x32xbf16>
    %c0_6 = arith.constant 0 : index
    %c0_7 = arith.constant 0 : index
    %c0_8 = arith.constant 0 : index
    %15 = vector.load %arg3[%c0_6, %c0_7, %c0_8] : memref<2x32x96xbf16, #tpu.memory_space<vmem>>, vector<1x32x96xbf16>
    %16 = vector.shape_cast %15 : vector<1x32x96xbf16> to vector<32x96xbf16>
    %cst_9 = arith.constant dense<0.000000e+00> : vector<16x96xf32>
    %17 = tpu.matmul %14, %16, %cst_9 {dimension_numbers = #tpu.dot_dimension_numbers<[1], [0], [0], [1], [0, 0, 1, 1], [], []>} : vector<16x32xbf16>, vector<32x96xbf16>, vector<16x96xf32> -> vector<16x96xf32>
    %c0_10 = arith.constant 0 : index
    %c0_11 = arith.constant 0 : index
    %c0_12 = arith.constant 0 : index
    %18 = vector.load %arg4[%c0_10, %c0_11, %c0_12] : memref<2x1x96xf32, #tpu.memory_space<vmem>>, vector<1x1x96xf32>
    %19 = vector.shape_cast %18 : vector<1x1x96xf32> to vector<1x96xf32>
    %20 = vector.broadcast %19 : vector<1x96xf32> to vector<16x96xf32>
    %21 = arith.addf %17, %20 : vector<16x96xf32>
    %22 = arith.truncf %21 : vector<16x96xf32> to vector<16x96xbf16>
    %23 = vector.shape_cast %22 : vector<16x96xbf16> to vector<2x8x96xbf16>
    %24 = vector.extract_strided_slice %23 {offsets = [0, 0, 0], sizes = [2, 8, 8], strides = [1, 1, 1]} : vector<2x8x96xbf16> to vector<2x8x8xbf16>
    %25 = vector.extract_strided_slice %23 {offsets = [0, 0, 32], sizes = [2, 8, 8], strides = [1, 1, 1]} : vector<2x8x96xbf16> to vector<2x8x8xbf16>
    %26 = vector.extract_strided_slice %23 {offsets = [0, 0, 64], sizes = [2, 8, 8], strides = [1, 1, 1]} : vector<2x8x96xbf16> to vector<2x8x8xbf16>
    "tpu.trace_start"() <{level = 10 : i32, message = "bqd,bkd->bqk"}> : () -> ()
    %cst_13 = arith.constant dense<0.000000e+00> : vector<2x8x8xf32>
    %27 = tpu.matmul %24, %25, %cst_13 {dimension_numbers = #tpu.dot_dimension_numbers<[2], [2], [1], [1], [0, 0, 0, 1, 1, 1], [0], [0]>} : vector<2x8x8xbf16>, vector<2x8x8xbf16>, vector<2x8x8xf32> -> vector<2x8x8xf32>
    "tpu.trace_stop"() : () -> ()
    %28 = vector.shape_cast %13 : vector<8x8xf32> to vector<1x8x8xf32>
    %29 = vector.broadcast %28 : vector<1x8x8xf32> to vector<2x8x8xf32>
    %30 = arith.addf %27, %29 : vector<2x8x8xf32>
    %cst_14 = arith.constant dense<0xFF800000> : vector<2x8xf32>
    %31 = vector.multi_reduction <maximumf>, %30, %cst_14 [2] : vector<2x8x8xf32> to vector<2x8xf32>
    %32 = vector.shape_cast %31 : vector<2x8xf32> to vector<2x8x1xf32>
    %33 = vector.broadcast %32 : vector<2x8x1xf32> to vector<2x8x8xf32>
    %34 = arith.subf %30, %33 : vector<2x8x8xf32>
    %35 = math.exp %34 : vector<2x8x8xf32>
    %cst_15 = arith.constant dense<0.000000e+00> : vector<2x8xf32>
    %36 = vector.multi_reduction <add>, %35, %cst_15 [2] : vector<2x8x8xf32> to vector<2x8xf32>
    %37 = vector.shape_cast %36 : vector<2x8xf32> to vector<2x8x1xf32>
    %38 = tpu.reciprocal %37 {approx = true} : vector<2x8x1xf32> -> vector<2x8x1xf32>
    %39 = vector.broadcast %38 : vector<2x8x1xf32> to vector<2x8x8xf32>
    %40 = arith.mulf %35, %39 : vector<2x8x8xf32>
    %41 = arith.truncf %40 : vector<2x8x8xf32> to vector<2x8x8xbf16>
    "tpu.trace_start"() <{level = 10 : i32, message = "bqk,bkd->bqd"}> : () -> ()
    %cst_16 = arith.constant dense<0.000000e+00> : vector<2x8x8xf32>
    %42 = tpu.matmul %41, %26, %cst_16 {dimension_numbers = #tpu.dot_dimension_numbers<[2], [1], [1], [2], [0, 0, 0, 1, 1, 2], [0], [0]>} : vector<2x8x8xbf16>, vector<2x8x8xbf16>, vector<2x8x8xf32> -> vector<2x8x8xf32>
    "tpu.trace_stop"() : () -> ()
    %43 = vector.extract_strided_slice %23 {offsets = [0, 0, 8], sizes = [2, 8, 8], strides = [1, 1, 1]} : vector<2x8x96xbf16> to vector<2x8x8xbf16>
    %44 = vector.extract_strided_slice %23 {offsets = [0, 0, 40], sizes = [2, 8, 8], strides = [1, 1, 1]} : vector<2x8x96xbf16> to vector<2x8x8xbf16>
    %45 = vector.extract_strided_slice %23 {offsets = [0, 0, 72], sizes = [2, 8, 8], strides = [1, 1, 1]} : vector<2x8x96xbf16> to vector<2x8x8xbf16>
    "tpu.trace_start"() <{level = 10 : i32, message = "bqd,bkd->bqk"}> : () -> ()
    %cst_17 = arith.constant dense<0.000000e+00> : vector<2x8x8xf32>
    %46 = tpu.matmul %43, %44, %cst_17 {dimension_numbers = #tpu.dot_dimension_numbers<[2], [2], [1], [1], [0, 0, 0, 1, 1, 1], [0], [0]>} : vector<2x8x8xbf16>, vector<2x8x8xbf16>, vector<2x8x8xf32> -> vector<2x8x8xf32>
    "tpu.trace_stop"() : () -> ()
    %47 = vector.shape_cast %13 : vector<8x8xf32> to vector<1x8x8xf32>
    %48 = vector.broadcast %47 : vector<1x8x8xf32> to vector<2x8x8xf32>
    %49 = arith.addf %46, %48 : vector<2x8x8xf32>
    %cst_18 = arith.constant dense<0xFF800000> : vector<2x8xf32>
    %50 = vector.multi_reduction <maximumf>, %49, %cst_18 [2] : vector<2x8x8xf32> to vector<2x8xf32>
    %51 = vector.shape_cast %50 : vector<2x8xf32> to vector<2x8x1xf32>
    %52 = vector.broadcast %51 : vector<2x8x1xf32> to vector<2x8x8xf32>
    %53 = arith.subf %49, %52 : vector<2x8x8xf32>
    %54 = math.exp %53 : vector<2x8x8xf32>
    %cst_19 = arith.constant dense<0.000000e+00> : vector<2x8xf32>
    %55 = vector.multi_reduction <add>, %54, %cst_19 [2] : vector<2x8x8xf32> to vector<2x8xf32>
    %56 = vector.shape_cast %55 : vector<2x8xf32> to vector<2x8x1xf32>
    %57 = tpu.reciprocal %56 {approx = true} : vector<2x8x1xf32> -> vector<2x8x1xf32>
    %58 = vector.broadcast %57 : vector<2x8x1xf32> to vector<2x8x8xf32>
    %59 = arith.mulf %54, %58 : vector<2x8x8xf32>
    %60 = arith.truncf %59 : vector<2x8x8xf32> to vector<2x8x8xbf16>
    "tpu.trace_start"() <{level = 10 : i32, message = "bqk,bkd->bqd"}> : () -> ()
    %cst_20 = arith.constant dense<0.000000e+00> : vector<2x8x8xf32>
    %61 = tpu.matmul %60, %45, %cst_20 {dimension_numbers = #tpu.dot_dimension_numbers<[2], [1], [1], [2], [0, 0, 0, 1, 1, 2], [0], [0]>} : vector<2x8x8xbf16>, vector<2x8x8xbf16>, vector<2x8x8xf32> -> vector<2x8x8xf32>
    "tpu.trace_stop"() : () -> ()
    %62 = vector.extract_strided_slice %23 {offsets = [0, 0, 16], sizes = [2, 8, 8], strides = [1, 1, 1]} : vector<2x8x96xbf16> to vector<2x8x8xbf16>
    %63 = vector.extract_strided_slice %23 {offsets = [0, 0, 48], sizes = [2, 8, 8], strides = [1, 1, 1]} : vector<2x8x96xbf16> to vector<2x8x8xbf16>
    %64 = vector.extract_strided_slice %23 {offsets = [0, 0, 80], sizes = [2, 8, 8], strides = [1, 1, 1]} : vector<2x8x96xbf16> to vector<2x8x8xbf16>
    "tpu.trace_start"() <{level = 10 : i32, message = "bqd,bkd->bqk"}> : () -> ()
    %cst_21 = arith.constant dense<0.000000e+00> : vector<2x8x8xf32>
    %65 = tpu.matmul %62, %63, %cst_21 {dimension_numbers = #tpu.dot_dimension_numbers<[2], [2], [1], [1], [0, 0, 0, 1, 1, 1], [0], [0]>} : vector<2x8x8xbf16>, vector<2x8x8xbf16>, vector<2x8x8xf32> -> vector<2x8x8xf32>
    "tpu.trace_stop"() : () -> ()
    %66 = vector.shape_cast %13 : vector<8x8xf32> to vector<1x8x8xf32>
    %67 = vector.broadcast %66 : vector<1x8x8xf32> to vector<2x8x8xf32>
    %68 = arith.addf %65, %67 : vector<2x8x8xf32>
    %cst_22 = arith.constant dense<0xFF800000> : vector<2x8xf32>
    %69 = vector.multi_reduction <maximumf>, %68, %cst_22 [2] : vector<2x8x8xf32> to vector<2x8xf32>
    %70 = vector.shape_cast %69 : vector<2x8xf32> to vector<2x8x1xf32>
    %71 = vector.broadcast %70 : vector<2x8x1xf32> to vector<2x8x8xf32>
    %72 = arith.subf %68, %71 : vector<2x8x8xf32>
    %73 = math.exp %72 : vector<2x8x8xf32>
    %cst_23 = arith.constant dense<0.000000e+00> : vector<2x8xf32>
    %74 = vector.multi_reduction <add>, %73, %cst_23 [2] : vector<2x8x8xf32> to vector<2x8xf32>
    %75 = vector.shape_cast %74 : vector<2x8xf32> to vector<2x8x1xf32>
    %76 = tpu.reciprocal %75 {approx = true} : vector<2x8x1xf32> -> vector<2x8x1xf32>
    %77 = vector.broadcast %76 : vector<2x8x1xf32> to vector<2x8x8xf32>
    %78 = arith.mulf %73, %77 : vector<2x8x8xf32>
    %79 = arith.truncf %78 : vector<2x8x8xf32> to vector<2x8x8xbf16>
    "tpu.trace_start"() <{level = 10 : i32, message = "bqk,bkd->bqd"}> : () -> ()
    %cst_24 = arith.constant dense<0.000000e+00> : vector<2x8x8xf32>
    %80 = tpu.matmul %79, %64, %cst_24 {dimension_numbers = #tpu.dot_dimension_numbers<[2], [1], [1], [2], [0, 0, 0, 1, 1, 2], [0], [0]>} : vector<2x8x8xbf16>, vector<2x8x8xbf16>, vector<2x8x8xf32> -> vector<2x8x8xf32>
    "tpu.trace_stop"() : () -> ()
    %81 = vector.extract_strided_slice %23 {offsets = [0, 0, 24], sizes = [2, 8, 8], strides = [1, 1, 1]} : vector<2x8x96xbf16> to vector<2x8x8xbf16>
    %82 = vector.extract_strided_slice %23 {offsets = [0, 0, 56], sizes = [2, 8, 8], strides = [1, 1, 1]} : vector<2x8x96xbf16> to vector<2x8x8xbf16>
    %83 = vector.extract_strided_slice %23 {offsets = [0, 0, 88], sizes = [2, 8, 8], strides = [1, 1, 1]} : vector<2x8x96xbf16> to vector<2x8x8xbf16>
    "tpu.trace_start"() <{level = 10 : i32, message = "bqd,bkd->bqk"}> : () -> ()
    %cst_25 = arith.constant dense<0.000000e+00> : vector<2x8x8xf32>
    %84 = tpu.matmul %81, %82, %cst_25 {dimension_numbers = #tpu.dot_dimension_numbers<[2], [2], [1], [1], [0, 0, 0, 1, 1, 1], [0], [0]>} : vector<2x8x8xbf16>, vector<2x8x8xbf16>, vector<2x8x8xf32> -> vector<2x8x8xf32>
    "tpu.trace_stop"() : () -> ()
    %85 = vector.shape_cast %13 : vector<8x8xf32> to vector<1x8x8xf32>
    %86 = vector.broadcast %85 : vector<1x8x8xf32> to vector<2x8x8xf32>
    %87 = arith.addf %84, %86 : vector<2x8x8xf32>
    %cst_26 = arith.constant dense<0xFF800000> : vector<2x8xf32>
    %88 = vector.multi_reduction <maximumf>, %87, %cst_26 [2] : vector<2x8x8xf32> to vector<2x8xf32>
    %89 = vector.shape_cast %88 : vector<2x8xf32> to vector<2x8x1xf32>
    %90 = vector.broadcast %89 : vector<2x8x1xf32> to vector<2x8x8xf32>
    %91 = arith.subf %87, %90 : vector<2x8x8xf32>
    %92 = math.exp %91 : vector<2x8x8xf32>
    %cst_27 = arith.constant dense<0.000000e+00> : vector<2x8xf32>
    %93 = vector.multi_reduction <add>, %92, %cst_27 [2] : vector<2x8x8xf32> to vector<2x8xf32>
    %94 = vector.shape_cast %93 : vector<2x8xf32> to vector<2x8x1xf32>
    %95 = tpu.reciprocal %94 {approx = true} : vector<2x8x1xf32> -> vector<2x8x1xf32>
    %96 = vector.broadcast %95 : vector<2x8x1xf32> to vector<2x8x8xf32>
    %97 = arith.mulf %92, %96 : vector<2x8x8xf32>
    %98 = arith.truncf %97 : vector<2x8x8xf32> to vector<2x8x8xbf16>
    "tpu.trace_start"() <{level = 10 : i32, message = "bqk,bkd->bqd"}> : () -> ()
    %cst_28 = arith.constant dense<0.000000e+00> : vector<2x8x8xf32>
    %99 = tpu.matmul %98, %83, %cst_28 {dimension_numbers = #tpu.dot_dimension_numbers<[2], [1], [1], [2], [0, 0, 0, 1, 1, 2], [0], [0]>} : vector<2x8x8xbf16>, vector<2x8x8xbf16>, vector<2x8x8xf32> -> vector<2x8x8xf32>
    "tpu.trace_stop"() : () -> ()
    %100 = tpu.concatenate %42, %61, %80, %99 in 2 : vector<2x8x8xf32>, vector<2x8x8xf32>, vector<2x8x8xf32>, vector<2x8x8xf32> -> vector<2x8x32xf32>
    %101 = vector.shape_cast %100 : vector<2x8x32xf32> to vector<16x32xf32>
    %102 = arith.truncf %101 : vector<16x32xf32> to vector<16x32xbf16>
    %c0_29 = arith.constant 0 : index
    %c0_30 = arith.constant 0 : index
    %c0_31 = arith.constant 0 : index
    %103 = vector.load %arg5[%c0_29, %c0_30, %c0_31] : memref<2x32x32xbf16, #tpu.memory_space<vmem>>, vector<1x32x32xbf16>
    %104 = vector.shape_cast %103 : vector<1x32x32xbf16> to vector<32x32xbf16>
    %cst_32 = arith.constant dense<0.000000e+00> : vector<16x32xf32>
    %105 = tpu.matmul %102, %104, %cst_32 {dimension_numbers = #tpu.dot_dimension_numbers<[1], [0], [0], [1], [0, 0, 1, 1], [], []>} : vector<16x32xbf16>, vector<32x32xbf16>, vector<16x32xf32> -> vector<16x32xf32>
    %c0_33 = arith.constant 0 : index
    %c0_34 = arith.constant 0 : index
    %c0_35 = arith.constant 0 : index
    %106 = vector.load %arg6[%c0_33, %c0_34, %c0_35] : memref<2x1x32xf32, #tpu.memory_space<vmem>>, vector<1x1x32xf32>
    %107 = vector.shape_cast %106 : vector<1x1x32xf32> to vector<1x32xf32>
    %108 = vector.broadcast %107 : vector<1x32xf32> to vector<16x32xf32>
    %109 = arith.addf %105, %108 : vector<16x32xf32>
    %110 = arith.addf %7, %109 : vector<16x32xf32>
    %c0_36 = arith.constant 0 : index
    %c0_37 = arith.constant 0 : index
    %c0_38 = arith.constant 0 : index
    %111 = vector.load %arg11[%c0_36, %c0_37, %c0_38] : memref<2x1x32xf32, #tpu.memory_space<vmem>>, vector<1x1x32xf32>
    %112 = vector.shape_cast %111 : vector<1x1x32xf32> to vector<1x32xf32>
    %c0_39 = arith.constant 0 : index
    %c0_40 = arith.constant 0 : index
    %c0_41 = arith.constant 0 : index
    %113 = vector.load %arg12[%c0_39, %c0_40, %c0_41] : memref<2x1x32xf32, #tpu.memory_space<vmem>>, vector<1x1x32xf32>
    %114 = vector.shape_cast %113 : vector<1x1x32xf32> to vector<1x32xf32>
    %cst_42 = arith.constant dense<0.000000e+00> : vector<16xf32>
    %115 = vector.multi_reduction <add>, %110, %cst_42 [1] : vector<16x32xf32> to vector<16xf32>
    %116 = vector.shape_cast %115 : vector<16xf32> to vector<16x1xf32>
    %cst_43 = arith.constant 3.200000e+01 : f32
    %117 = vector.broadcast %cst_43 : f32 to vector<16x1xf32>
    %118 = arith.divf %116, %117 : vector<16x1xf32>
    %119 = vector.broadcast %118 : vector<16x1xf32> to vector<16x32xf32>
    %120 = arith.subf %110, %119 : vector<16x32xf32>
    %121 = arith.mulf %120, %120 : vector<16x32xf32>
    %cst_44 = arith.constant dense<0.000000e+00> : vector<16xf32>
    %122 = vector.multi_reduction <add>, %121, %cst_44 [1] : vector<16x32xf32> to vector<16xf32>
    %123 = vector.shape_cast %122 : vector<16xf32> to vector<16x1xf32>
    %cst_45 = arith.constant 3.200000e+01 : f32
    %124 = vector.broadcast %cst_45 : f32 to vector<16x1xf32>
    %125 = arith.divf %123, %124 : vector<16x1xf32>
    %cst_46 = arith.constant 9.99999974E-6 : f32
    %126 = vector.broadcast %cst_46 : f32 to vector<16x1xf32>
    %127 = arith.addf %125, %126 : vector<16x1xf32>
    %128 = math.rsqrt %127 : vector<16x1xf32>
    %129 = vector.broadcast %128 : vector<16x1xf32> to vector<16x32xf32>
    %130 = arith.mulf %120, %129 : vector<16x32xf32>
    %131 = vector.broadcast %112 : vector<1x32xf32> to vector<16x32xf32>
    %132 = arith.mulf %130, %131 : vector<16x32xf32>
    %133 = vector.broadcast %114 : vector<1x32xf32> to vector<16x32xf32>
    %134 = arith.addf %132, %133 : vector<16x32xf32>
    %135 = arith.truncf %134 : vector<16x32xf32> to vector<16x32xbf16>
    %c0_47 = arith.constant 0 : index
    %c0_48 = arith.constant 0 : index
    %c0_49 = arith.constant 0 : index
    %136 = vector.load %arg7[%c0_47, %c0_48, %c0_49] : memref<2x32x64xbf16, #tpu.memory_space<vmem>>, vector<1x32x64xbf16>
    %137 = vector.shape_cast %136 : vector<1x32x64xbf16> to vector<32x64xbf16>
    %cst_50 = arith.constant dense<0.000000e+00> : vector<16x64xf32>
    %138 = tpu.matmul %135, %137, %cst_50 {dimension_numbers = #tpu.dot_dimension_numbers<[1], [0], [0], [1], [0, 0, 1, 1], [], []>} : vector<16x32xbf16>, vector<32x64xbf16>, vector<16x64xf32> -> vector<16x64xf32>
    %c0_51 = arith.constant 0 : index
    %c0_52 = arith.constant 0 : index
    %c0_53 = arith.constant 0 : index
    %139 = vector.load %arg8[%c0_51, %c0_52, %c0_53] : memref<2x1x64xf32, #tpu.memory_space<vmem>>, vector<1x1x64xf32>
    %140 = vector.shape_cast %139 : vector<1x1x64xf32> to vector<1x64xf32>
    %141 = vector.broadcast %140 : vector<1x64xf32> to vector<16x64xf32>
    %142 = arith.addf %138, %141 : vector<16x64xf32>
    %cst_54 = arith.constant 0.000000e+00 : f32
    %143 = vector.broadcast %cst_54 : f32 to vector<16x64xf32>
    %144 = arith.maximumf %142, %143 : vector<16x64xf32>
    %145 = arith.truncf %144 : vector<16x64xf32> to vector<16x64xbf16>
    %c0_55 = arith.constant 0 : index
    %c0_56 = arith.constant 0 : index
    %c0_57 = arith.constant 0 : index
    %146 = vector.load %arg9[%c0_55, %c0_56, %c0_57] : memref<2x64x32xbf16, #tpu.memory_space<vmem>>, vector<1x64x32xbf16>
    %147 = vector.shape_cast %146 : vector<1x64x32xbf16> to vector<64x32xbf16>
    %cst_58 = arith.constant dense<0.000000e+00> : vector<16x32xf32>
    %148 = tpu.matmul %145, %147, %cst_58 {dimension_numbers = #tpu.dot_dimension_numbers<[1], [0], [0], [1], [0, 0, 1, 1], [], []>} : vector<16x64xbf16>, vector<64x32xbf16>, vector<16x32xf32> -> vector<16x32xf32>
    %c0_59 = arith.constant 0 : index
    %c0_60 = arith.constant 0 : index
    %c0_61 = arith.constant 0 : index
    %149 = vector.load %arg10[%c0_59, %c0_60, %c0_61] : memref<2x1x32xf32, #tpu.memory_space<vmem>>, vector<1x1x32xf32>
    %150 = vector.shape_cast %149 : vector<1x1x32xf32> to vector<1x32xf32>
    %151 = vector.broadcast %150 : vector<1x32xf32> to vector<16x32xf32>
    %152 = arith.addf %148, %151 : vector<16x32xf32>
    %153 = arith.addf %134, %152 : vector<16x32xf32>
    %c0_62 = arith.constant 0 : index
    %c0_63 = arith.constant 0 : index
    %c0_64 = arith.constant 0 : index
    %154 = vector.load %arg13[%c0_62, %c0_63, %c0_64] : memref<2x1x32xf32, #tpu.memory_space<vmem>>, vector<1x1x32xf32>
    %155 = vector.shape_cast %154 : vector<1x1x32xf32> to vector<1x32xf32>
    %c0_65 = arith.constant 0 : index
    %c0_66 = arith.constant 0 : index
    %c0_67 = arith.constant 0 : index
    %156 = vector.load %arg14[%c0_65, %c0_66, %c0_67] : memref<2x1x32xf32, #tpu.memory_space<vmem>>, vector<1x1x32xf32>
    %157 = vector.shape_cast %156 : vector<1x1x32xf32> to vector<1x32xf32>
    %cst_68 = arith.constant dense<0.000000e+00> : vector<16xf32>
    %158 = vector.multi_reduction <add>, %153, %cst_68 [1] : vector<16x32xf32> to vector<16xf32>
    %159 = vector.shape_cast %158 : vector<16xf32> to vector<16x1xf32>
    %cst_69 = arith.constant 3.200000e+01 : f32
    %160 = vector.broadcast %cst_69 : f32 to vector<16x1xf32>
    %161 = arith.divf %159, %160 : vector<16x1xf32>
    %162 = vector.broadcast %161 : vector<16x1xf32> to vector<16x32xf32>
    %163 = arith.subf %153, %162 : vector<16x32xf32>
    %164 = arith.mulf %163, %163 : vector<16x32xf32>
    %cst_70 = arith.constant dense<0.000000e+00> : vector<16xf32>
    %165 = vector.multi_reduction <add>, %164, %cst_70 [1] : vector<16x32xf32> to vector<16xf32>
    %166 = vector.shape_cast %165 : vector<16xf32> to vector<16x1xf32>
    %cst_71 = arith.constant 3.200000e+01 : f32
    %167 = vector.broadcast %cst_71 : f32 to vector<16x1xf32>
    %168 = arith.divf %166, %167 : vector<16x1xf32>
    %cst_72 = arith.constant 9.99999974E-6 : f32
    %169 = vector.broadcast %cst_72 : f32 to vector<16x1xf32>
    %170 = arith.addf %168, %169 : vector<16x1xf32>
    %171 = math.rsqrt %170 : vector<16x1xf32>
    %172 = vector.broadcast %171 : vector<16x1xf32> to vector<16x32xf32>
    %173 = arith.mulf %163, %172 : vector<16x32xf32>
    %174 = vector.broadcast %155 : vector<1x32xf32> to vector<16x32xf32>
    %175 = arith.mulf %173, %174 : vector<16x32xf32>
    %176 = vector.broadcast %157 : vector<1x32xf32> to vector<16x32xf32>
    %177 = arith.addf %175, %176 : vector<16x32xf32>
    %178 = arith.truncf %177 : vector<16x32xf32> to vector<16x32xbf16>
    %c1 = arith.constant 1 : index
    %c0_73 = arith.constant 0 : index
    %c0_74 = arith.constant 0 : index
    %179 = vector.load %arg3[%c1, %c0_73, %c0_74] : memref<2x32x96xbf16, #tpu.memory_space<vmem>>, vector<1x32x96xbf16>
    %180 = vector.shape_cast %179 : vector<1x32x96xbf16> to vector<32x96xbf16>
    %cst_75 = arith.constant dense<0.000000e+00> : vector<16x96xf32>
    %181 = tpu.matmul %178, %180, %cst_75 {dimension_numbers = #tpu.dot_dimension_numbers<[1], [0], [0], [1], [0, 0, 1, 1], [], []>} : vector<16x32xbf16>, vector<32x96xbf16>, vector<16x96xf32> -> vector<16x96xf32>
    %c1_76 = arith.constant 1 : index
    %c0_77 = arith.constant 0 : index
    %c0_78 = arith.constant 0 : index
    %182 = vector.load %arg4[%c1_76, %c0_77, %c0_78] : memref<2x1x96xf32, #tpu.memory_space<vmem>>, vector<1x1x96xf32>
    %183 = vector.shape_cast %182 : vector<1x1x96xf32> to vector<1x96xf32>
    %184 = vector.broadcast %183 : vector<1x96xf32> to vector<16x96xf32>
    %185 = arith.addf %181, %184 : vector<16x96xf32>
    %186 = arith.truncf %185 : vector<16x96xf32> to vector<16x96xbf16>
    %187 = vector.shape_cast %186 : vector<16x96xbf16> to vector<2x8x96xbf16>
    %188 = vector.extract_strided_slice %187 {offsets = [0, 0, 0], sizes = [2, 8, 8], strides = [1, 1, 1]} : vector<2x8x96xbf16> to vector<2x8x8xbf16>
    %189 = vector.extract_strided_slice %187 {offsets = [0, 0, 32], sizes = [2, 8, 8], strides = [1, 1, 1]} : vector<2x8x96xbf16> to vector<2x8x8xbf16>
    %190 = vector.extract_strided_slice %187 {offsets = [0, 0, 64], sizes = [2, 8, 8], strides = [1, 1, 1]} : vector<2x8x96xbf16> to vector<2x8x8xbf16>
    "tpu.trace_start"() <{level = 10 : i32, message = "bqd,bkd->bqk"}> : () -> ()
    %cst_79 = arith.constant dense<0.000000e+00> : vector<2x8x8xf32>
    %191 = tpu.matmul %188, %189, %cst_79 {dimension_numbers = #tpu.dot_dimension_numbers<[2], [2], [1], [1], [0, 0, 0, 1, 1, 1], [0], [0]>} : vector<2x8x8xbf16>, vector<2x8x8xbf16>, vector<2x8x8xf32> -> vector<2x8x8xf32>
    "tpu.trace_stop"() : () -> ()
    %192 = vector.shape_cast %13 : vector<8x8xf32> to vector<1x8x8xf32>
    %193 = vector.broadcast %192 : vector<1x8x8xf32> to vector<2x8x8xf32>
    %194 = arith.addf %191, %193 : vector<2x8x8xf32>
    %cst_80 = arith.constant dense<0xFF800000> : vector<2x8xf32>
    %195 = vector.multi_reduction <maximumf>, %194, %cst_80 [2] : vector<2x8x8xf32> to vector<2x8xf32>
    %196 = vector.shape_cast %195 : vector<2x8xf32> to vector<2x8x1xf32>
    %197 = vector.broadcast %196 : vector<2x8x1xf32> to vector<2x8x8xf32>
    %198 = arith.subf %194, %197 : vector<2x8x8xf32>
    %199 = math.exp %198 : vector<2x8x8xf32>
    %cst_81 = arith.constant dense<0.000000e+00> : vector<2x8xf32>
    %200 = vector.multi_reduction <add>, %199, %cst_81 [2] : vector<2x8x8xf32> to vector<2x8xf32>
    %201 = vector.shape_cast %200 : vector<2x8xf32> to vector<2x8x1xf32>
    %202 = tpu.reciprocal %201 {approx = true} : vector<2x8x1xf32> -> vector<2x8x1xf32>
    %203 = vector.broadcast %202 : vector<2x8x1xf32> to vector<2x8x8xf32>
    %204 = arith.mulf %199, %203 : vector<2x8x8xf32>
    %205 = arith.truncf %204 : vector<2x8x8xf32> to vector<2x8x8xbf16>
    "tpu.trace_start"() <{level = 10 : i32, message = "bqk,bkd->bqd"}> : () -> ()
    %cst_82 = arith.constant dense<0.000000e+00> : vector<2x8x8xf32>
    %206 = tpu.matmul %205, %190, %cst_82 {dimension_numbers = #tpu.dot_dimension_numbers<[2], [1], [1], [2], [0, 0, 0, 1, 1, 2], [0], [0]>} : vector<2x8x8xbf16>, vector<2x8x8xbf16>, vector<2x8x8xf32> -> vector<2x8x8xf32>
    "tpu.trace_stop"() : () -> ()
    %207 = vector.extract_strided_slice %187 {offsets = [0, 0, 8], sizes = [2, 8, 8], strides = [1, 1, 1]} : vector<2x8x96xbf16> to vector<2x8x8xbf16>
    %208 = vector.extract_strided_slice %187 {offsets = [0, 0, 40], sizes = [2, 8, 8], strides = [1, 1, 1]} : vector<2x8x96xbf16> to vector<2x8x8xbf16>
    %209 = vector.extract_strided_slice %187 {offsets = [0, 0, 72], sizes = [2, 8, 8], strides = [1, 1, 1]} : vector<2x8x96xbf16> to vector<2x8x8xbf16>
    "tpu.trace_start"() <{level = 10 : i32, message = "bqd,bkd->bqk"}> : () -> ()
    %cst_83 = arith.constant dense<0.000000e+00> : vector<2x8x8xf32>
    %210 = tpu.matmul %207, %208, %cst_83 {dimension_numbers = #tpu.dot_dimension_numbers<[2], [2], [1], [1], [0, 0, 0, 1, 1, 1], [0], [0]>} : vector<2x8x8xbf16>, vector<2x8x8xbf16>, vector<2x8x8xf32> -> vector<2x8x8xf32>
    "tpu.trace_stop"() : () -> ()
    %211 = vector.shape_cast %13 : vector<8x8xf32> to vector<1x8x8xf32>
    %212 = vector.broadcast %211 : vector<1x8x8xf32> to vector<2x8x8xf32>
    %213 = arith.addf %210, %212 : vector<2x8x8xf32>
    %cst_84 = arith.constant dense<0xFF800000> : vector<2x8xf32>
    %214 = vector.multi_reduction <maximumf>, %213, %cst_84 [2] : vector<2x8x8xf32> to vector<2x8xf32>
    %215 = vector.shape_cast %214 : vector<2x8xf32> to vector<2x8x1xf32>
    %216 = vector.broadcast %215 : vector<2x8x1xf32> to vector<2x8x8xf32>
    %217 = arith.subf %213, %216 : vector<2x8x8xf32>
    %218 = math.exp %217 : vector<2x8x8xf32>
    %cst_85 = arith.constant dense<0.000000e+00> : vector<2x8xf32>
    %219 = vector.multi_reduction <add>, %218, %cst_85 [2] : vector<2x8x8xf32> to vector<2x8xf32>
    %220 = vector.shape_cast %219 : vector<2x8xf32> to vector<2x8x1xf32>
    %221 = tpu.reciprocal %220 {approx = true} : vector<2x8x1xf32> -> vector<2x8x1xf32>
    %222 = vector.broadcast %221 : vector<2x8x1xf32> to vector<2x8x8xf32>
    %223 = arith.mulf %218, %222 : vector<2x8x8xf32>
    %224 = arith.truncf %223 : vector<2x8x8xf32> to vector<2x8x8xbf16>
    "tpu.trace_start"() <{level = 10 : i32, message = "bqk,bkd->bqd"}> : () -> ()
    %cst_86 = arith.constant dense<0.000000e+00> : vector<2x8x8xf32>
    %225 = tpu.matmul %224, %209, %cst_86 {dimension_numbers = #tpu.dot_dimension_numbers<[2], [1], [1], [2], [0, 0, 0, 1, 1, 2], [0], [0]>} : vector<2x8x8xbf16>, vector<2x8x8xbf16>, vector<2x8x8xf32> -> vector<2x8x8xf32>
    "tpu.trace_stop"() : () -> ()
    %226 = vector.extract_strided_slice %187 {offsets = [0, 0, 16], sizes = [2, 8, 8], strides = [1, 1, 1]} : vector<2x8x96xbf16> to vector<2x8x8xbf16>
    %227 = vector.extract_strided_slice %187 {offsets = [0, 0, 48], sizes = [2, 8, 8], strides = [1, 1, 1]} : vector<2x8x96xbf16> to vector<2x8x8xbf16>
    %228 = vector.extract_strided_slice %187 {offsets = [0, 0, 80], sizes = [2, 8, 8], strides = [1, 1, 1]} : vector<2x8x96xbf16> to vector<2x8x8xbf16>
    "tpu.trace_start"() <{level = 10 : i32, message = "bqd,bkd->bqk"}> : () -> ()
    %cst_87 = arith.constant dense<0.000000e+00> : vector<2x8x8xf32>
    %229 = tpu.matmul %226, %227, %cst_87 {dimension_numbers = #tpu.dot_dimension_numbers<[2], [2], [1], [1], [0, 0, 0, 1, 1, 1], [0], [0]>} : vector<2x8x8xbf16>, vector<2x8x8xbf16>, vector<2x8x8xf32> -> vector<2x8x8xf32>
    "tpu.trace_stop"() : () -> ()
    %230 = vector.shape_cast %13 : vector<8x8xf32> to vector<1x8x8xf32>
    %231 = vector.broadcast %230 : vector<1x8x8xf32> to vector<2x8x8xf32>
    %232 = arith.addf %229, %231 : vector<2x8x8xf32>
    %cst_88 = arith.constant dense<0xFF800000> : vector<2x8xf32>
    %233 = vector.multi_reduction <maximumf>, %232, %cst_88 [2] : vector<2x8x8xf32> to vector<2x8xf32>
    %234 = vector.shape_cast %233 : vector<2x8xf32> to vector<2x8x1xf32>
    %235 = vector.broadcast %234 : vector<2x8x1xf32> to vector<2x8x8xf32>
    %236 = arith.subf %232, %235 : vector<2x8x8xf32>
    %237 = math.exp %236 : vector<2x8x8xf32>
    %cst_89 = arith.constant dense<0.000000e+00> : vector<2x8xf32>
    %238 = vector.multi_reduction <add>, %237, %cst_89 [2] : vector<2x8x8xf32> to vector<2x8xf32>
    %239 = vector.shape_cast %238 : vector<2x8xf32> to vector<2x8x1xf32>
    %240 = tpu.reciprocal %239 {approx = true} : vector<2x8x1xf32> -> vector<2x8x1xf32>
    %241 = vector.broadcast %240 : vector<2x8x1xf32> to vector<2x8x8xf32>
    %242 = arith.mulf %237, %241 : vector<2x8x8xf32>
    %243 = arith.truncf %242 : vector<2x8x8xf32> to vector<2x8x8xbf16>
    "tpu.trace_start"() <{level = 10 : i32, message = "bqk,bkd->bqd"}> : () -> ()
    %cst_90 = arith.constant dense<0.000000e+00> : vector<2x8x8xf32>
    %244 = tpu.matmul %243, %228, %cst_90 {dimension_numbers = #tpu.dot_dimension_numbers<[2], [1], [1], [2], [0, 0, 0, 1, 1, 2], [0], [0]>} : vector<2x8x8xbf16>, vector<2x8x8xbf16>, vector<2x8x8xf32> -> vector<2x8x8xf32>
    "tpu.trace_stop"() : () -> ()
    %245 = vector.extract_strided_slice %187 {offsets = [0, 0, 24], sizes = [2, 8, 8], strides = [1, 1, 1]} : vector<2x8x96xbf16> to vector<2x8x8xbf16>
    %246 = vector.extract_strided_slice %187 {offsets = [0, 0, 56], sizes = [2, 8, 8], strides = [1, 1, 1]} : vector<2x8x96xbf16> to vector<2x8x8xbf16>
    %247 = vector.extract_strided_slice %187 {offsets = [0, 0, 88], sizes = [2, 8, 8], strides = [1, 1, 1]} : vector<2x8x96xbf16> to vector<2x8x8xbf16>
    "tpu.trace_start"() <{level = 10 : i32, message = "bqd,bkd->bqk"}> : () -> ()
    %cst_91 = arith.constant dense<0.000000e+00> : vector<2x8x8xf32>
    %248 = tpu.matmul %245, %246, %cst_91 {dimension_numbers = #tpu.dot_dimension_numbers<[2], [2], [1], [1], [0, 0, 0, 1, 1, 1], [0], [0]>} : vector<2x8x8xbf16>, vector<2x8x8xbf16>, vector<2x8x8xf32> -> vector<2x8x8xf32>
    "tpu.trace_stop"() : () -> ()
    %249 = vector.shape_cast %13 : vector<8x8xf32> to vector<1x8x8xf32>
    %250 = vector.broadcast %249 : vector<1x8x8xf32> to vector<2x8x8xf32>
    %251 = arith.addf %248, %250 : vector<2x8x8xf32>
    %cst_92 = arith.constant dense<0xFF800000> : vector<2x8xf32>
    %252 = vector.multi_reduction <maximumf>, %251, %cst_92 [2] : vector<2x8x8xf32> to vector<2x8xf32>
    %253 = vector.shape_cast %252 : vector<2x8xf32> to vector<2x8x1xf32>
    %254 = vector.broadcast %253 : vector<2x8x1xf32> to vector<2x8x8xf32>
    %255 = arith.subf %251, %254 : vector<2x8x8xf32>
    %256 = math.exp %255 : vector<2x8x8xf32>
    %cst_93 = arith.constant dense<0.000000e+00> : vector<2x8xf32>
    %257 = vector.multi_reduction <add>, %256, %cst_93 [2] : vector<2x8x8xf32> to vector<2x8xf32>
    %258 = vector.shape_cast %257 : vector<2x8xf32> to vector<2x8x1xf32>
    %259 = tpu.reciprocal %258 {approx = true} : vector<2x8x1xf32> -> vector<2x8x1xf32>
    %260 = vector.broadcast %259 : vector<2x8x1xf32> to vector<2x8x8xf32>
    %261 = arith.mulf %256, %260 : vector<2x8x8xf32>
    %262 = arith.truncf %261 : vector<2x8x8xf32> to vector<2x8x8xbf16>
    "tpu.trace_start"() <{level = 10 : i32, message = "bqk,bkd->bqd"}> : () -> ()
    %cst_94 = arith.constant dense<0.000000e+00> : vector<2x8x8xf32>
    %263 = tpu.matmul %262, %247, %cst_94 {dimension_numbers = #tpu.dot_dimension_numbers<[2], [1], [1], [2], [0, 0, 0, 1, 1, 2], [0], [0]>} : vector<2x8x8xbf16>, vector<2x8x8xbf16>, vector<2x8x8xf32> -> vector<2x8x8xf32>
    "tpu.trace_stop"() : () -> ()
    %264 = tpu.concatenate %206, %225, %244, %263 in 2 : vector<2x8x8xf32>, vector<2x8x8xf32>, vector<2x8x8xf32>, vector<2x8x8xf32> -> vector<2x8x32xf32>
    %265 = vector.shape_cast %264 : vector<2x8x32xf32> to vector<16x32xf32>
    %266 = arith.truncf %265 : vector<16x32xf32> to vector<16x32xbf16>
    %c1_95 = arith.constant 1 : index
    %c0_96 = arith.constant 0 : index
    %c0_97 = arith.constant 0 : index
    %267 = vector.load %arg5[%c1_95, %c0_96, %c0_97] : memref<2x32x32xbf16, #tpu.memory_space<vmem>>, vector<1x32x32xbf16>
    %268 = vector.shape_cast %267 : vector<1x32x32xbf16> to vector<32x32xbf16>
    %cst_98 = arith.constant dense<0.000000e+00> : vector<16x32xf32>
    %269 = tpu.matmul %266, %268, %cst_98 {dimension_numbers = #tpu.dot_dimension_numbers<[1], [0], [0], [1], [0, 0, 1, 1], [], []>} : vector<16x32xbf16>, vector<32x32xbf16>, vector<16x32xf32> -> vector<16x32xf32>
    %c1_99 = arith.constant 1 : index
    %c0_100 = arith.constant 0 : index
    %c0_101 = arith.constant 0 : index
    %270 = vector.load %arg6[%c1_99, %c0_100, %c0_101] : memref<2x1x32xf32, #tpu.memory_space<vmem>>, vector<1x1x32xf32>
    %271 = vector.shape_cast %270 : vector<1x1x32xf32> to vector<1x32xf32>
    %272 = vector.broadcast %271 : vector<1x32xf32> to vector<16x32xf32>
    %273 = arith.addf %269, %272 : vector<16x32xf32>
    %274 = arith.addf %177, %273 : vector<16x32xf32>
    %c1_102 = arith.constant 1 : index
    %c0_103 = arith.constant 0 : index
    %c0_104 = arith.constant 0 : index
    %275 = vector.load %arg11[%c1_102, %c0_103, %c0_104] : memref<2x1x32xf32, #tpu.memory_space<vmem>>, vector<1x1x32xf32>
    %276 = vector.shape_cast %275 : vector<1x1x32xf32> to vector<1x32xf32>
    %c1_105 = arith.constant 1 : index
    %c0_106 = arith.constant 0 : index
    %c0_107 = arith.constant 0 : index
    %277 = vector.load %arg12[%c1_105, %c0_106, %c0_107] : memref<2x1x32xf32, #tpu.memory_space<vmem>>, vector<1x1x32xf32>
    %278 = vector.shape_cast %277 : vector<1x1x32xf32> to vector<1x32xf32>
    %cst_108 = arith.constant dense<0.000000e+00> : vector<16xf32>
    %279 = vector.multi_reduction <add>, %274, %cst_108 [1] : vector<16x32xf32> to vector<16xf32>
    %280 = vector.shape_cast %279 : vector<16xf32> to vector<16x1xf32>
    %cst_109 = arith.constant 3.200000e+01 : f32
    %281 = vector.broadcast %cst_109 : f32 to vector<16x1xf32>
    %282 = arith.divf %280, %281 : vector<16x1xf32>
    %283 = vector.broadcast %282 : vector<16x1xf32> to vector<16x32xf32>
    %284 = arith.subf %274, %283 : vector<16x32xf32>
    %285 = arith.mulf %284, %284 : vector<16x32xf32>
    %cst_110 = arith.constant dense<0.000000e+00> : vector<16xf32>
    %286 = vector.multi_reduction <add>, %285, %cst_110 [1] : vector<16x32xf32> to vector<16xf32>
    %287 = vector.shape_cast %286 : vector<16xf32> to vector<16x1xf32>
    %cst_111 = arith.constant 3.200000e+01 : f32
    %288 = vector.broadcast %cst_111 : f32 to vector<16x1xf32>
    %289 = arith.divf %287, %288 : vector<16x1xf32>
    %cst_112 = arith.constant 9.99999974E-6 : f32
    %290 = vector.broadcast %cst_112 : f32 to vector<16x1xf32>
    %291 = arith.addf %289, %290 : vector<16x1xf32>
    %292 = math.rsqrt %291 : vector<16x1xf32>
    %293 = vector.broadcast %292 : vector<16x1xf32> to vector<16x32xf32>
    %294 = arith.mulf %284, %293 : vector<16x32xf32>
    %295 = vector.broadcast %276 : vector<1x32xf32> to vector<16x32xf32>
    %296 = arith.mulf %294, %295 : vector<16x32xf32>
    %297 = vector.broadcast %278 : vector<1x32xf32> to vector<16x32xf32>
    %298 = arith.addf %296, %297 : vector<16x32xf32>
    %299 = arith.truncf %298 : vector<16x32xf32> to vector<16x32xbf16>
    %c1_113 = arith.constant 1 : index
    %c0_114 = arith.constant 0 : index
    %c0_115 = arith.constant 0 : index
    %300 = vector.load %arg7[%c1_113, %c0_114, %c0_115] : memref<2x32x64xbf16, #tpu.memory_space<vmem>>, vector<1x32x64xbf16>
    %301 = vector.shape_cast %300 : vector<1x32x64xbf16> to vector<32x64xbf16>
    %cst_116 = arith.constant dense<0.000000e+00> : vector<16x64xf32>
    %302 = tpu.matmul %299, %301, %cst_116 {dimension_numbers = #tpu.dot_dimension_numbers<[1], [0], [0], [1], [0, 0, 1, 1], [], []>} : vector<16x32xbf16>, vector<32x64xbf16>, vector<16x64xf32> -> vector<16x64xf32>
    %c1_117 = arith.constant 1 : index
    %c0_118 = arith.constant 0 : index
    %c0_119 = arith.constant 0 : index
    %303 = vector.load %arg8[%c1_117, %c0_118, %c0_119] : memref<2x1x64xf32, #tpu.memory_space<vmem>>, vector<1x1x64xf32>
    %304 = vector.shape_cast %303 : vector<1x1x64xf32> to vector<1x64xf32>
    %305 = vector.broadcast %304 : vector<1x64xf32> to vector<16x64xf32>
    %306 = arith.addf %302, %305 : vector<16x64xf32>
    %cst_120 = arith.constant 0.000000e+00 : f32
    %307 = vector.broadcast %cst_120 : f32 to vector<16x64xf32>
    %308 = arith.maximumf %306, %307 : vector<16x64xf32>
    %309 = arith.truncf %308 : vector<16x64xf32> to vector<16x64xbf16>
    %c1_121 = arith.constant 1 : index
    %c0_122 = arith.constant 0 : index
    %c0_123 = arith.constant 0 : index
    %310 = vector.load %arg9[%c1_121, %c0_122, %c0_123] : memref<2x64x32xbf16, #tpu.memory_space<vmem>>, vector<1x64x32xbf16>
    %311 = vector.shape_cast %310 : vector<1x64x32xbf16> to vector<64x32xbf16>
    %cst_124 = arith.constant dense<0.000000e+00> : vector<16x32xf32>
    %312 = tpu.matmul %309, %311, %cst_124 {dimension_numbers = #tpu.dot_dimension_numbers<[1], [0], [0], [1], [0, 0, 1, 1], [], []>} : vector<16x64xbf16>, vector<64x32xbf16>, vector<16x32xf32> -> vector<16x32xf32>
    %c1_125 = arith.constant 1 : index
    %c0_126 = arith.constant 0 : index
    %c0_127 = arith.constant 0 : index
    %313 = vector.load %arg10[%c1_125, %c0_126, %c0_127] : memref<2x1x32xf32, #tpu.memory_space<vmem>>, vector<1x1x32xf32>
    %314 = vector.shape_cast %313 : vector<1x1x32xf32> to vector<1x32xf32>
    %315 = vector.broadcast %314 : vector<1x32xf32> to vector<16x32xf32>
    %316 = arith.addf %312, %315 : vector<16x32xf32>
    %317 = arith.addf %298, %316 : vector<16x32xf32>
    %c1_128 = arith.constant 1 : index
    %c0_129 = arith.constant 0 : index
    %c0_130 = arith.constant 0 : index
    %318 = vector.load %arg13[%c1_128, %c0_129, %c0_130] : memref<2x1x32xf32, #tpu.memory_space<vmem>>, vector<1x1x32xf32>
    %319 = vector.shape_cast %318 : vector<1x1x32xf32> to vector<1x32xf32>
    %c1_131 = arith.constant 1 : index
    %c0_132 = arith.constant 0 : index
    %c0_133 = arith.constant 0 : index
    %320 = vector.load %arg14[%c1_131, %c0_132, %c0_133] : memref<2x1x32xf32, #tpu.memory_space<vmem>>, vector<1x1x32xf32>
    %321 = vector.shape_cast %320 : vector<1x1x32xf32> to vector<1x32xf32>
    %cst_134 = arith.constant dense<0.000000e+00> : vector<16xf32>
    %322 = vector.multi_reduction <add>, %317, %cst_134 [1] : vector<16x32xf32> to vector<16xf32>
    %323 = vector.shape_cast %322 : vector<16xf32> to vector<16x1xf32>
    %cst_135 = arith.constant 3.200000e+01 : f32
    %324 = vector.broadcast %cst_135 : f32 to vector<16x1xf32>
    %325 = arith.divf %323, %324 : vector<16x1xf32>
    %326 = vector.broadcast %325 : vector<16x1xf32> to vector<16x32xf32>
    %327 = arith.subf %317, %326 : vector<16x32xf32>
    %328 = arith.mulf %327, %327 : vector<16x32xf32>
    %cst_136 = arith.constant dense<0.000000e+00> : vector<16xf32>
    %329 = vector.multi_reduction <add>, %328, %cst_136 [1] : vector<16x32xf32> to vector<16xf32>
    %330 = vector.shape_cast %329 : vector<16xf32> to vector<16x1xf32>
    %cst_137 = arith.constant 3.200000e+01 : f32
    %331 = vector.broadcast %cst_137 : f32 to vector<16x1xf32>
    %332 = arith.divf %330, %331 : vector<16x1xf32>
    %cst_138 = arith.constant 9.99999974E-6 : f32
    %333 = vector.broadcast %cst_138 : f32 to vector<16x1xf32>
    %334 = arith.addf %332, %333 : vector<16x1xf32>
    %335 = math.rsqrt %334 : vector<16x1xf32>
    %336 = vector.broadcast %335 : vector<16x1xf32> to vector<16x32xf32>
    %337 = arith.mulf %327, %336 : vector<16x32xf32>
    %338 = vector.broadcast %319 : vector<1x32xf32> to vector<16x32xf32>
    %339 = arith.mulf %337, %338 : vector<16x32xf32>
    %340 = vector.broadcast %321 : vector<1x32xf32> to vector<16x32xf32>
    %341 = arith.addf %339, %340 : vector<16x32xf32>
    %342 = arith.truncf %341 : vector<16x32xf32> to vector<16x32xbf16>
    %c0_139 = arith.constant 0 : index
    %c0_140 = arith.constant 0 : index
    %343 = vector.load %arg15[%c0_139, %c0_140] : memref<32x128xbf16, #tpu.memory_space<vmem>>, vector<32x128xbf16>
    %cst_141 = arith.constant dense<0.000000e+00> : vector<16x128xf32>
    %344 = tpu.matmul %342, %343, %cst_141 {dimension_numbers = #tpu.dot_dimension_numbers<[1], [0], [0], [1], [0, 0, 1, 1], [], []>} : vector<16x32xbf16>, vector<32x128xbf16>, vector<16x128xf32> -> vector<16x128xf32>
    %c0_142 = arith.constant 0 : index
    %c0_143 = arith.constant 0 : index
    %345 = vector.load %arg16[%c0_142, %c0_143] : memref<1x128xf32, #tpu.memory_space<vmem>>, vector<1x128xf32>
    %346 = vector.broadcast %345 : vector<1x128xf32> to vector<16x128xf32>
    %347 = arith.addf %344, %346 : vector<16x128xf32>
    %348 = vector.shape_cast %347 : vector<16x128xf32> to vector<2x8x128xf32>
    %c0_144 = arith.constant 0 : index
    %c0_145 = arith.constant 0 : index
    %c0_146 = arith.constant 0 : index
    %349 = vector.load %arg17[%c0_144, %c0_145, %c0_146] : memref<2x8x128xf32, #tpu.memory_space<vmem>>, vector<2x8x128xf32>
    tpu.vector_store %arg17[%c0_144, %c0_145, %c0_146], %348 {strides = array<i32>} : memref<2x8x128xf32, #tpu.memory_space<vmem>>, vector<2x8x128xf32>,
    return
  }
  func.func @transform_0(%arg0: i32) -> (i32, i32, i32) {
    %c0_i32 = arith.constant 0 : i32
    %c0_i32_0 = arith.constant 0 : i32
    %c0_i32_1 = arith.constant 0 : i32
    return %arg0, %c0_i32, %c0_i32_0 : i32, i32, i32
  }
  func.func @transform_1(%arg0: i32) -> (i32, i32) {
    %c0_i32 = arith.constant 0 : i32
    %c0_i32_0 = arith.constant 0 : i32
    %c0_i32_1 = arith.constant 0 : i32
    return %c0_i32, %c0_i32_0 : i32, i32
  }
  func.func @transform_2(%arg0: i32) -> (i32, i32, i32) {
    %c0_i32 = arith.constant 0 : i32
    %c0_i32_0 = arith.constant 0 : i32
    %c0_i32_1 = arith.constant 0 : i32
    %c0_i32_2 = arith.constant 0 : i32
    return %c0_i32, %c0_i32_0, %c0_i32_1 : i32, i32, i32
  }
  func.func @transform_3(%arg0: i32) -> (i32, i32, i32) {
    %c0_i32 = arith.constant 0 : i32
    %c0_i32_0 = arith.constant 0 : i32
    %c0_i32_1 = arith.constant 0 : i32
    %c0_i32_2 = arith.constant 0 : i32
    return %c0_i32, %c0_i32_0, %c0_i32_1 : i32, i32, i32
  }
  func.func @transform_4(%arg0: i32) -> (i32, i32, i32) {
    %c0_i32 = arith.constant 0 : i32
    %c0_i32_0 = arith.constant 0 : i32
    %c0_i32_1 = arith.constant 0 : i32
    %c0_i32_2 = arith.constant 0 : i32
    return %c0_i32, %c0_i32_0, %c0_i32_1 : i32, i32, i32
  }
  func.func @transform_5(%arg0: i32) -> (i32, i32, i32) {
    %c0_i32 = arith.constant 0 : i32
    %c0_i32_0 = arith.constant 0 : i32
    %c0_i32_1 = arith.constant 0 : i32
    %c0_i32_2 = arith.constant 0 : i32
    return %c0_i32, %c0_i32_0, %c0_i32_1 : i32, i32, i32
  }
  func.func @transform_6(%arg0: i32) -> (i32, i32, i32) {
    %c0_i32 = arith.constant 0 : i32
    %c0_i32_0 = arith.constant 0 : i32
    %c0_i32_1 = arith.constant 0 : i32
    %c0_i32_2 = arith.constant 0 : i32
    return %c0_i32, %c0_i32_0, %c0_i32_1 : i32, i32, i32
  }
  func.func @transform_7(%arg0: i32) -> (i32, i32, i32) {
    %c0_i32 = arith.constant 0 : i32
    %c0_i32_0 = arith.constant 0 : i32
    %c0_i32_1 = arith.constant 0 : i32
    %c0_i32_2 = arith.constant 0 : i32
    return %c0_i32, %c0_i32_0, %c0_i32_1 : i32, i32, i32
  }
  func.func @transform_8(%arg0: i32) -> (i32, i32, i32) {
    %c0_i32 = arith.constant 0 : i32
    %c0_i32_0 = arith.constant 0 : i32
    %c0_i32_1 = arith.constant 0 : i32
    %c0_i32_2 = arith.constant 0 : i32
    return %c0_i32, %c0_i32_0, %c0_i32_1 : i32, i32, i32
  }
  func.func @transform_9(%arg0: i32) -> (i32, i32, i32) {
    %c0_i32 = arith.constant 0 : i32
    %c0_i32_0 = arith.constant 0 : i32
    %c0_i32_1 = arith.constant 0 : i32
    %c0_i32_2 = arith.constant 0 : i32
    return %c0_i32, %c0_i32_0, %c0_i32_1 : i32, i32, i32
  }
  func.func @transform_10(%arg0: i32) -> (i32, i32, i32) {
    %c0_i32 = arith.constant 0 : i32
    %c0_i32_0 = arith.constant 0 : i32
    %c0_i32_1 = arith.constant 0 : i32
    %c0_i32_2 = arith.constant 0 : i32
    return %c0_i32, %c0_i32_0, %c0_i32_1 : i32, i32, i32
  }
  func.func @transform_11(%arg0: i32) -> (i32, i32, i32) {
    %c0_i32 = arith.constant 0 : i32
    %c0_i32_0 = arith.constant 0 : i32
    %c0_i32_1 = arith.constant 0 : i32
    %c0_i32_2 = arith.constant 0 : i32
    return %c0_i32, %c0_i32_0, %c0_i32_1 : i32, i32, i32
  }
  func.func @transform_12(%arg0: i32) -> (i32, i32, i32) {
    %c0_i32 = arith.constant 0 : i32
    %c0_i32_0 = arith.constant 0 : i32
    %c0_i32_1 = arith.constant 0 : i32
    %c0_i32_2 = arith.constant 0 : i32
    return %c0_i32, %c0_i32_0, %c0_i32_1 : i32, i32, i32
  }
  func.func @transform_13(%arg0: i32) -> (i32, i32, i32) {
    %c0_i32 = arith.constant 0 : i32
    %c0_i32_0 = arith.constant 0 : i32
    %c0_i32_1 = arith.constant 0 : i32
    %c0_i32_2 = arith.constant 0 : i32
    return %c0_i32, %c0_i32_0, %c0_i32_1 : i32, i32, i32
  }
  func.func @transform_14(%arg0: i32) -> (i32, i32) {
    %c0_i32 = arith.constant 0 : i32
    %c0_i32_0 = arith.constant 0 : i32
    %c0_i32_1 = arith.constant 0 : i32
    return %c0_i32, %c0_i32_0 : i32, i32
  }
  func.func @transform_15(%arg0: i32) -> (i32, i32) {
    %c0_i32 = arith.constant 0 : i32
    %c0_i32_0 = arith.constant 0 : i32
    %c0_i32_1 = arith.constant 0 : i32
    return %c0_i32, %c0_i32_0 : i32, i32
  }
  func.func @transform_16(%arg0: i32) -> (i32, i32, i32) {
    %c0_i32 = arith.constant 0 : i32
    %c0_i32_0 = arith.constant 0 : i32
    %c0_i32_1 = arith.constant 0 : i32
    return %arg0, %c0_i32, %c0_i32_0 : i32, i32, i32
  }
}

</mosaic_0001>

<llo_original>
// kernel: tpu_custom_call.1
$region0: #{tpu_custom_call.1}
  #allocation0 [shape = 'u32[]', space=smem, size = 0x4, offset = 0x4, fixed_abs, tag = 'smem constant byte address 0x4 - core index']
  #allocation1 [shape = 'u32[144,128]{1,0:T(1,128)}', space=vmem, size = 0x12000, scoped, tag = 'internal scratch']
  %s0 = inlined_call_operand.hbm [shape: f32[2,8,32], index: 0, kind: input, shape index: {}]
  %s1 = inlined_call_operand.hbm [shape: f32[8,32], index: 1, kind: input, shape index: {}]
  %s2 = inlined_call_operand.vmem [shape: bf16[2,32,96], index: 2, kind: input, shape index: {}]
  %s3 = inlined_call_operand.hbm [shape: f32[2,1,96], index: 3, kind: input, shape index: {}]
  %s4 = inlined_call_operand.vmem [shape: bf16[2,32,32], index: 4, kind: input, shape index: {}]
  %s5 = inlined_call_operand.hbm [shape: f32[2,1,32], index: 5, kind: input, shape index: {}]
  %s6 = inlined_call_operand.vmem [shape: bf16[2,32,64], index: 6, kind: input, shape index: {}]
  %s7 = inlined_call_operand.hbm [shape: f32[2,1,64], index: 7, kind: input, shape index: {}]
  %s8 = inlined_call_operand.vmem [shape: bf16[2,64,32], index: 8, kind: input, shape index: {}]
  %s9 = inlined_call_operand.hbm [shape: f32[2,1,32], index: 9, kind: input, shape index: {}]
  %s10 = inlined_call_operand.vmem [shape: f32[2,1,32], index: 10, kind: input, shape index: {}]
  %s11 = inlined_call_operand.vmem [shape: f32[2,1,32], index: 11, kind: input, shape index: {}]
  %s12 = inlined_call_operand.hbm [shape: f32[2,1,32], index: 12, kind: input, shape index: {}]
  %s13 = inlined_call_operand.vmem [shape: f32[2,1,32], index: 13, kind: input, shape index: {}]
  %s14 = inlined_call_operand.vmem [shape: bf16[32,128], index: 14, kind: input, shape index: {}]
  %s15 = inlined_call_operand.vmem [shape: f32[1,128], index: 15, kind: input, shape index: {}]
  %s16 = inlined_call_operand.hbm [shape: f32[2,8,128], index: 16, kind: output, shape index: {}]
  %s17 = sld [smem:[#allocation0]]
  $region102: #{tpu_custom_call.1} parent=0
    _
  %s19 = ssub.s32 1, %s17
  %s20 = scalar_select 0, %s19, %s17
  $region1: #{tpu_custom_call.1} parent=0
    #allocation2 [shape = 'u8[8192]{0}', space=vmem, size = 0x2000, scoped, tag = 'input window, operand 0, single buffered']
    #allocation3 [shape = 's32[1]{0}', space=sflag, size = 0x4, scoped, tag = 'scoped memory for tpu_custom_call.1']
    #allocation4 [shape = 's32[1]{0}', space=sflag, size = 0x4, scoped, tag = 'scoped memory for tpu_custom_call.1']
    #allocation5 [shape = 'u8[4096]{0}', space=vmem, size = 0x1000, scoped, tag = 'input window, operand 1, single buffered']
    #allocation6 [shape = 's32[1]{0}', space=sflag, size = 0x4, scoped, tag = 'scoped memory for tpu_custom_call.1']
    #allocation7 [shape = 'u8[1024]{0}', space=vmem, size = 0x400, scoped, tag = 'input window, operand 3, single buffered']
    #allocation8 [shape = 'u8[1024]{0}', space=vmem, size = 0x400, scoped, tag = 'input window, operand 5, single buffered']
    #allocation9 [shape = 's32[1]{0}', space=sflag, size = 0x4, scoped, tag = 'scoped memory for tpu_custom_call.1']
    #allocation10 [shape = 'u8[1024]{0}', space=vmem, size = 0x400, scoped, tag = 'input window, operand 7, single buffered']
    #allocation11 [shape = 'u8[1024]{0}', space=vmem, size = 0x400, scoped, tag = 'input window, operand 9, single buffered']
    #allocation12 [shape = 's32[1]{0}', space=sflag, size = 0x4, scoped, tag = 'scoped memory for tpu_custom_call.1']
    #allocation13 [shape = 'u8[1024]{0}', space=vmem, size = 0x400, scoped, tag = 'input window, operand 12, single buffered']
    #allocation14 [shape = 'u8[8192]{0}', space=vmem, size = 0x2000, scoped, tag = 'output window, operand 0, single buffered']
    %21 = vsyncpa [#allocation3], 0
    %22 = vsyncpa [#allocation6], 0
    %23 = vsyncpa [#allocation9], 0
    %24 = vsyncpa [#allocation12], 0
    %25 = vsyncpa [#allocation4], 0
    // Predicated region
    $region2: #{tpu_custom_call.1} parent=1 // pred_check
      _
    $region3: #{tpu_custom_call.1} parent=1 // pred_check_branch
      %27 = sbr.rel (0) target = $region5
    $region4: #{tpu_custom_call.1} parent=1 // pred_region
      %s29 = ssub.s32 256, 256
      %30 = vsyncadd [#allocation3], %s29
      %s31 = sshll.u32 [#allocation2], 4
      %s32 = int_to_ptr.vmem [resolvable:$true] %s31
      %37 = dma.hbm_to_vmem [thread:$0]  %s0, 256, %s32, [#allocation3], 128, 128, 8
    $region5: #{tpu_custom_call.1} parent=1 // pred_fallthru
      _
    // Predicated region
    $region6: #{tpu_custom_call.1} parent=1 // pred_check
      _
    $region7: #{tpu_custom_call.1} parent=1 // pred_check_branch
      %39 = sbr.rel (0) target = $region9
    $region8: #{tpu_custom_call.1} parent=1 // pred_region
      %s41 = ssub.s32 128, 128
      %42 = vsyncadd [#allocation6], %s41
      %s44 = sshll.u32 [#allocation5], 4
      %s45 = int_to_ptr.vmem [resolvable:$true] %s44
      %47 = dma.hbm_to_vmem [thread:$0]  %s1, 128, %s45, [#allocation6]
    $region9: #{tpu_custom_call.1} parent=1 // pred_fallthru
      _
    // Predicated region
    $region10: #{tpu_custom_call.1} parent=1 // pred_check
      _
    $region11: #{tpu_custom_call.1} parent=1 // pred_check_branch
      %49 = sbr.rel (0) target = $region13
    $region12: #{tpu_custom_call.1} parent=1 // pred_region
      _
    $region13: #{tpu_custom_call.1} parent=1 // pred_fallthru
      _
    // Predicated region
    $region14: #{tpu_custom_call.1} parent=1 // pred_check
      _
    $region15: #{tpu_custom_call.1} parent=1 // pred_check_branch
      %51 = sbr.rel (0) target = $region17
    $region16: #{tpu_custom_call.1} parent=1 // pred_region
      %s53 = ssub.s32 32, 32
      %54 = vsyncadd [#allocation6], %s53
      %s55 = sshll.u32 [#allocation7], 4
      %s56 = int_to_ptr.vmem [resolvable:$true] %s55
      %61 = dma.hbm_to_vmem [thread:$0]  %s3, 32, %s56, [#allocation6], 16, 16, 1
    $region17: #{tpu_custom_call.1} parent=1 // pred_fallthru
      _
    // Predicated region
    $region18: #{tpu_custom_call.1} parent=1 // pred_check
      _
    $region19: #{tpu_custom_call.1} parent=1 // pred_check_branch
      %63 = sbr.rel (0) target = $region21
    $region20: #{tpu_custom_call.1} parent=1 // pred_region
      _
    $region21: #{tpu_custom_call.1} parent=1 // pred_fallthru
      _
    // Predicated region
    $region22: #{tpu_custom_call.1} parent=1 // pred_check
      _
    $region23: #{tpu_custom_call.1} parent=1 // pred_check_branch
      %65 = sbr.rel (0) target = $region25
    $region24: #{tpu_custom_call.1} parent=1 // pred_region
      %s67 = ssub.s32 32, 32
      %68 = vsyncadd [#allocation9], %s67
      %s69 = sshll.u32 [#allocation8], 4
      %s70 = int_to_ptr.vmem [resolvable:$true] %s69
      %75 = dma.hbm_to_vmem [thread:$0]  %s5, 32, %s70, [#allocation9], 16, 16, 1
    $region25: #{tpu_custom_call.1} parent=1 // pred_fallthru
      _
    // Predicated region
    $region26: #{tpu_custom_call.1} parent=1 // pred_check
      _
    $region27: #{tpu_custom_call.1} parent=1 // pred_check_branch
      %77 = sbr.rel (0) target = $region29
    $region28: #{tpu_custom_call.1} parent=1 // pred_region
      _
    $region29: #{tpu_custom_call.1} parent=1 // pred_fallthru
      _
    // Predicated region
    $region30: #{tpu_custom_call.1} parent=1 // pred_check
      _
    $region31: #{tpu_custom_call.1} parent=1 // pred_check_branch
      %79 = sbr.rel (0) target = $region33
    $region32: #{tpu_custom_call.1} parent=1 // pred_region
      %s81 = ssub.s32 32, 32
      %82 = vsyncadd [#allocation9], %s81
      %s83 = sshll.u32 [#allocation10], 4
      %s84 = int_to_ptr.vmem [resolvable:$true] %s83
      %89 = dma.hbm_to_vmem [thread:$0]  %s7, 32, %s84, [#allocation9], 16, 16, 1
    $region33: #{tpu_custom_call.1} parent=1 // pred_fallthru
      _
    // Predicated region
    $region34: #{tpu_custom_call.1} parent=1 // pred_check
      _
    $region35: #{tpu_custom_call.1} parent=1 // pred_check_branch
      %91 = sbr.rel (0) target = $region37
    $region36: #{tpu_custom_call.1} parent=1 // pred_region
      _
    $region37: #{tpu_custom_call.1} parent=1 // pred_fallthru
      _
    // Predicated region
    $region38: #{tpu_custom_call.1} parent=1 // pred_check
      _
    $region39: #{tpu_custom_call.1} parent=1 // pred_check_branch
      %93 = sbr.rel (0) target = $region41
    $region40: #{tpu_custom_call.1} parent=1 // pred_region
      %s95 = ssub.s32 32, 32
      %96 = vsyncadd [#allocation12], %s95
      %s97 = sshll.u32 [#allocation11], 4
      %s98 = int_to_ptr.vmem [resolvable:$true] %s97
      %103 = dma.hbm_to_vmem [thread:$0]  %s9, 32, %s98, [#allocation12], 16, 16, 1
    $region41: #{tpu_custom_call.1} parent=1 // pred_fallthru
      _
    // Predicated region
    $region42: #{tpu_custom_call.1} parent=1 // pred_check
      _
    $region43: #{tpu_custom_call.1} parent=1 // pred_check_branch
      %105 = sbr.rel (0) target = $region45
    $region44: #{tpu_custom_call.1} parent=1 // pred_region
      _
    $region45: #{tpu_custom_call.1} parent=1 // pred_fallthru
      _
    // Predicated region
    $region46: #{tpu_custom_call.1} parent=1 // pred_check
      _
    $region47: #{tpu_custom_call.1} parent=1 // pred_check_branch
      %107 = sbr.rel (0) target = $region49
    $region48: #{tpu_custom_call.1} parent=1 // pred_region
      _
    $region49: #{tpu_custom_call.1} parent=1 // pred_fallthru
      _
    // Predicated region
    $region50: #{tpu_custom_call.1} parent=1 // pred_check
      _
    $region51: #{tpu_custom_call.1} parent=1 // pred_check_branch
      %109 = sbr.rel (0) target = $region53
    $region52: #{tpu_custom_call.1} parent=1 // pred_region
      %s111 = ssub.s32 32, 32
      %112 = vsyncadd [#allocation12], %s111
      %s113 = sshll.u32 [#allocation13], 4
      %s114 = int_to_ptr.vmem [resolvable:$true] %s113
      %119 = dma.hbm_to_vmem [thread:$0]  %s12, 32, %s114, [#allocation12], 16, 16, 1
    $region53: #{tpu_custom_call.1} parent=1 // pred_fallthru
      _
    // Predicated region
    $region54: #{tpu_custom_call.1} parent=1 // pred_check
      _
    $region55: #{tpu_custom_call.1} parent=1 // pred_check_branch
      %121 = sbr.rel (0) target = $region57
    $region56: #{tpu_custom_call.1} parent=1 // pred_region
      _
    $region57: #{tpu_custom_call.1} parent=1 // pred_fallthru
      _
    // Predicated region
    $region58: #{tpu_custom_call.1} parent=1 // pred_check
      _
    $region59: #{tpu_custom_call.1} parent=1 // pred_check_branch
      %123 = sbr.rel (0) target = $region61
    $region60: #{tpu_custom_call.1} parent=1 // pred_region
      _
    $region61: #{tpu_custom_call.1} parent=1 // pred_fallthru
      _
    // Predicated region
    $region62: #{tpu_custom_call.1} parent=1 // pred_check
      _
    $region63: #{tpu_custom_call.1} parent=1 // pred_check_branch
      %125 = sbr.rel (0) target = $region65
    $region64: #{tpu_custom_call.1} parent=1 // pred_region
      _
    $region65: #{tpu_custom_call.1} parent=1 // pred_fallthru
      _
    // Predicated region
    $region66: #{tpu_custom_call.1} parent=1 // pred_check
      _
    $region67: #{tpu_custom_call.1} parent=1 // pred_check_branch
      %127 = sbr.rel (0) target = $region69
    $region68: #{tpu_custom_call.1} parent=1 // pred_region
      %128 = dma.done [#allocation3], 256
    $region69: #{tpu_custom_call.1} parent=1 // pred_fallthru
      _
    // Predicated region
    $region70: #{tpu_custom_call.1} parent=1 // pred_check
      _
    $region71: #{tpu_custom_call.1} parent=1 // pred_check_branch
      %130 = sbr.rel (0) target = $region73
    $region72: #{tpu_custom_call.1} parent=1 // pred_region
      %131 = dma.done [#allocation6], 128
    $region73: #{tpu_custom_call.1} parent=1 // pred_fallthru
      _
    // Predicated region
    $region74: #{tpu_custom_call.1} parent=1 // pred_check
      _
    $region75: #{tpu_custom_call.1} parent=1 // pred_check_branch
      %133 = sbr.rel (0) target = $region77
    $region76: #{tpu_custom_call.1} parent=1 // pred_region
      %134 = dma.done [#allocation6], 32
    $region77: #{tpu_custom_call.1} parent=1 // pred_fallthru
      _
    // Predicated region
    $region78: #{tpu_custom_call.1} parent=1 // pred_check
      _
    $region79: #{tpu_custom_call.1} parent=1 // pred_check_branch
      %136 = sbr.rel (0) target = $region81
    $region80: #{tpu_custom_call.1} parent=1 // pred_region
      %137 = dma.done [#allocation9], 32
    $region81: #{tpu_custom_call.1} parent=1 // pred_fallthru
      _
    // Predicated region
    $region82: #{tpu_custom_call.1} parent=1 // pred_check
      _
    $region83: #{tpu_custom_call.1} parent=1 // pred_check_branch
      %139 = sbr.rel (0) target = $region85
    $region84: #{tpu_custom_call.1} parent=1 // pred_region
      %140 = dma.done [#allocation9], 32
    $region85: #{tpu_custom_call.1} parent=1 // pred_fallthru
      _
    // Predicated region
    $region86: #{tpu_custom_call.1} parent=1 // pred_check
      _
    $region87: #{tpu_custom_call.1} parent=1 // pred_check_branch
      %142 = sbr.rel (0) target = $region89
    $region88: #{tpu_custom_call.1} parent=1 // pred_region
      %143 = dma.done [#allocation12], 32
    $region89: #{tpu_custom_call.1} parent=1 // pred_fallthru
      _
    // Predicated region
    $region90: #{tpu_custom_call.1} parent=1 // pred_check
      _
    $region91: #{tpu_custom_call.1} parent=1 // pred_check_branch
      %145 = sbr.rel (0) target = $region93
    $region92: #{tpu_custom_call.1} parent=1 // pred_region
      %146 = dma.done [#allocation12], 32
    $region93: #{tpu_custom_call.1} parent=1 // pred_fallthru
      _
    %v148 = vld [vmem:[#allocation2] sm:$0xff]
    %v149 = vld [vmem:[#allocation2 + $0x8] sm:$0xff]
    %v150 = vmul.f32 %v148, 8.0
    %v151 = vmul.f32 %v149, 8.0
    %v152 = vld [vmem:[#allocation5] sm:$0xff]
    %v153 = vadd.f32 %v150, %v152
    %v154 = vadd.f32 %v151, %v152
    %v155 = vlaneseq
    %v156 = vshrl.u32 %v155, 7
    %v157 = vlaneseq
    %v158 = vand.u32 %v157, 127
    %vm159 = vcmp.gt.s32.totalorder %v158, %v156
    %v160 = vsel %vm159, -1e+30, 0.0
    %v161 = vpack.c.bf16 %v154, %v153
    %v162 = vld [vmem:[%s2] sm:$0xf]
    %v163 = vld [vmem:[%s2 + $0x4] sm:$0xf]
    %v164 = vld [vmem:[%s2 + $0x8] sm:$0xf]
    %v165 = vld [vmem:[%s2 + $0xc] sm:$0xf]
    %v166 = vld [vmem:[#allocation7] sm:$0x1]
    %v168 = vlaneseq
    %v169 = vshrl.u32 %v168, 7
    %v170 = vsub.s32 0, %v169
    %v171 = vrot.slane %v166, %v170
    %v177 = vunpack.c.l.b16 %v162
    %v178 = vunpack.c.l.b16 %v163
    %v179 = vunpack.c.l.b16 %v164
    %v180 = vunpack.c.l.b16 %v165
    %v181 = vpack.c.b16 %v178, %v177
    %v182 = vpack.c.b16 %v180, %v179
    %vm185 = vcmask 261120
    %v187 = vsel %vm185, %v161, 0
    %189 = vmatprep.subr.bf16.mxu0 0
    %190 = vmatpush1.bf16.msra.mxu0 0
    %191 = vmatprep.subr.bf16.mxu0 0
    %192 = vmatpush1.bf16.msra.mxu0 0
    %193 = vmatprep.subr.bf16.mxu0 0
    %194 = vmatpush1.bf16.msra.mxu0 0
    %195 = vmatprep.subr.bf16.mxu0 0
    %196 = vmatpush1.bf16.msra.mxu0 0
    %197 = vmatprep.subr.bf16.mxu0 0
    %198 = vmatpush1.bf16.msra.mxu0 0
    %199 = vmatprep.subr.bf16.mxu0 0
    %200 = vmatpush1.bf16.msra.mxu0 0
    %201 = vmatprep.subr.bf16.mxu0 0
    %202 = vmatpush1.bf16.msra.mxu0 %v182
    %203 = vmatprep.subr.bf16.mxu0 0
    %204 = vmatpush1.bf16.msra.mxu0 %v181
    %205 = vmatprep.subr.bf16.mxu0 0
    %206 = vmatpush2.bf16.msra.mxu0 0
    %207 = vmatprep.subr.bf16.mxu0 0
    %208 = vmatpush2.bf16.msra.mxu0 0
    %209 = vmatprep.subr.bf16.mxu0 0
    %210 = vmatpush2.bf16.msra.mxu0 0
    %211 = vmatprep.subr.bf16.mxu0 0
    %212 = vmatpush2.bf16.msra.mxu0 0
    %213 = vmatprep.subr.bf16.mxu0 0
    %214 = vmatpush2.bf16.msra.mxu0 0
    %215 = vmatprep.subr.bf16.mxu0 0
    %216 = vmatpush2.bf16.msra.mxu0 0
    %217 = vmatprep.subr.bf16.mxu0 0
    %218 = vmatpush2.bf16.msra.mxu0 0
    %219 = vmatprep.subr.bf16.mxu0 0
    %220 = vmatpush2.bf16.msra.mxu0 0
    %221 = vmatprep.mubr.bf16.mxu0 0
    %222 = vmatmul.mubr.bf16.gmra.mxu0 %v187
    %v223 = vpop.f32.mrf.mxu0
    %v224 = vadd.f32 %v171, %v223
    %v225 = vpop.f32.mrf.mxu0
    %v226 = vpop.f32.mrf.mxu0
    %v227 = vadd.f32 %v171, %v226
    %v228 = vpop.f32.mrf.mxu0
    %229 = vdwg.mxu0
    %v230 = vpack.c.bf16 %v227, %v224
    %v232 = vunpack.c.l.b16 %v230
    %v233 = vunpack.c.h.b16 %v230
    %v234 = vpack.c.b16 %v232, %v232
    %v235 = vpack.c.b16 %v233, %v233
    %236 = vrot.lane.b32.xlu0 %v234, 96
    %v237 = vpop.permute.xlu0 %236
    %vm238 = vcmask 64512
    %v240 = vsel %vm238, %v234, 0
    %v243 = vsel %vm238, %v237, 0
    %245 = vmatprep.subr.bf16.mxu0 0
    %246 = vmatpush1.bf16.xpose.msra.mxu0 0
    %247 = vmatprep.subr.bf16.mxu0 0
    %248 = vmatpush1.bf16.xpose.msra.mxu0 0
    %249 = vmatprep.subr.bf16.mxu0 0
    %250 = vmatpush1.bf16.xpose.msra.mxu0 0
    %251 = vmatprep.subr.bf16.mxu0 0
    %252 = vmatpush1.bf16.xpose.msra.mxu0 0
    %253 = vmatprep.subr.bf16.mxu0 0
    %254 = vmatpush1.bf16.xpose.msra.mxu0 0
    %255 = vmatprep.subr.bf16.mxu0 0
    %256 = vmatpush1.bf16.xpose.msra.mxu0 0
    %257 = vmatprep.subr.bf16.mxu0 0
    %258 = vmatpush1.bf16.xpose.msra.mxu0 0
    %259 = vmatprep.subr.bf16.mxu0 0
    %260 = vmatpush1.bf16.xpose.msra.mxu0 %v243
    %261 = vmatprep.subr.bf16.mxu0 0
    %262 = vmatpush2.bf16.xpose.msra.mxu0 0
    %263 = vmatprep.subr.bf16.mxu0 0
    %264 = vmatpush2.bf16.xpose.msra.mxu0 0
    %265 = vmatprep.subr.bf16.mxu0 0
    %266 = vmatpush2.bf16.xpose.msra.mxu0 0
    %267 = vmatprep.subr.bf16.mxu0 0
    %268 = vmatpush2.bf16.xpose.msra.mxu0 0
    %269 = vmatprep.subr.bf16.mxu0 0
    %270 = vmatpush2.bf16.xpose.msra.mxu0 0
    %271 = vmatprep.subr.bf16.mxu0 0
    %272 = vmatpush2.bf16.xpose.msra.mxu0 0
    %273 = vmatprep.subr.bf16.mxu0 0
    %274 = vmatpush2.bf16.xpose.msra.mxu0 0
    %275 = vmatprep.subr.bf16.mxu0 0
    %276 = vmatpush2.bf16.xpose.msra.mxu0 0
    %277 = vmatprep.mubr.bf16.mxu0 0
    %278 = vmatmul.mubr.bf16.gmra.mxu0 %v240
    %v279 = vpop.f32.mrf.mxu0
    %v280 = vadd.f32 %v160, %v279
    %v281 = vpop.f32.mrf.mxu0
    %v282 = vpop.f32.mrf.mxu0
    %v283 = vpop.f32.mrf.mxu0
    %284 = vdwg.mxu0
    %285 = vrot.lane.b32.xlu0 %v235, 96
    %v286 = vpop.permute.xlu0 %285
    %v288 = vsel %vm238, %v235, 0
    %v291 = vsel %vm238, %v286, 0
    %293 = vmatprep.subr.bf16.mxu0 0
    %294 = vmatpush1.bf16.xpose.msra.mxu0 0
    %295 = vmatprep.subr.bf16.mxu0 0
    %296 = vmatpush1.bf16.xpose.msra.mxu0 0
    %297 = vmatprep.subr.bf16.mxu0 0
    %298 = vmatpush1.bf16.xpose.msra.mxu0 0
    %299 = vmatprep.subr.bf16.mxu0 0
    %300 = vmatpush1.bf16.xpose.msra.mxu0 0
    %301 = vmatprep.subr.bf16.mxu0 0
    %302 = vmatpush1.bf16.xpose.msra.mxu0 0
    %303 = vmatprep.subr.bf16.mxu0 0
    %304 = vmatpush1.bf16.xpose.msra.mxu0 0
    %305 = vmatprep.subr.bf16.mxu0 0
    %306 = vmatpush1.bf16.xpose.msra.mxu0 0
    %307 = vmatprep.subr.bf16.mxu0 0
    %308 = vmatpush1.bf16.xpose.msra.mxu0 %v291
    %309 = vmatprep.subr.bf16.mxu0 0
    %310 = vmatpush2.bf16.xpose.msra.mxu0 0
    %311 = vmatprep.subr.bf16.mxu0 0
    %312 = vmatpush2.bf16.xpose.msra.mxu0 0
    %313 = vmatprep.subr.bf16.mxu0 0
    %314 = vmatpush2.bf16.xpose.msra.mxu0 0
    %315 = vmatprep.subr.bf16.mxu0 0
    %316 = vmatpush2.bf16.xpose.msra.mxu0 0
    %317 = vmatprep.subr.bf16.mxu0 0
    %318 = vmatpush2.bf16.xpose.msra.mxu0 0
    %319 = vmatprep.subr.bf16.mxu0 0
    %320 = vmatpush2.bf16.xpose.msra.mxu0 0
    %321 = vmatprep.subr.bf16.mxu0 0
    %322 = vmatpush2.bf16.xpose.msra.mxu0 0
    %323 = vmatprep.subr.bf16.mxu0 0
    %324 = vmatpush2.bf16.xpose.msra.mxu0 0
    %325 = vmatprep.mubr.bf16.mxu0 0
    %326 = vmatmul.mubr.bf16.gmra.mxu0 %v288
    %v327 = vpop.f32.mrf.mxu0
    %v328 = vadd.f32 %v160, %v327
    %v329 = vpop.f32.mrf.mxu0
    %v330 = vpop.f32.mrf.mxu0
    %v331 = vpop.f32.mrf.mxu0
    %332 = vdwg.mxu0
    %v333 = vsel %vm238, %v280, -inf
    %334 = vmax.xlane.f32.xlu0 %v333
    %v335 = vpop.xlane.xlu0 %334
    %v336 = vsel %vm238, %v328, -inf
    %337 = vmax.xlane.f32.xlu0 %v336
    %v338 = vpop.xlane.xlu0 %337
    %v339 = vsub.f32 %v280, %v335
    %v340 = vsub.f32 %v328, %v338
    %v341 = vmul.f32 %v339, 1.442695
    %v342 = vpow.pop %v341
    %v343 = vmul.f32 %v340, 1.442695
    %v344 = vpow.pop %v343
    %v345 = vsel %vm238, %v342, 0.0
    %346 = vadd.xlane.f32.xlu0 %v345
    %v347 = vpop.xlane.xlu0 %346
    %v348 = vsel %vm238, %v344, 0.0
    %349 = vadd.xlane.f32.xlu0 %v348
    %v350 = vpop.xlane.xlu0 %349
    %v351 = vrcp.pop %v347
    %v352 = vrcp.pop %v350
    %v353 = vmul.f32 %v342, %v351
    %v354 = vmul.f32 %v344, %v352
    %v355 = vpack.c.bf16 %v353, %v353
    %v356 = vpack.c.bf16 %v354, %v354
    %357 = vrot.lane.b32.xlu0 %v234, 64
    %v358 = vpop.permute.xlu0 %357
    %v360 = vsel %vm238, %v355, 0
    %vm362 = vcmask 1043456
    %v364 = vsel %vm362, %v358, 0
    %366 = vmatprep.subr.bf16.mxu0 0
    %367 = vmatpush1.bf16.msra.mxu0 0
    %368 = vmatprep.subr.bf16.mxu0 0
    %369 = vmatpush1.bf16.msra.mxu0 0
    %370 = vmatprep.subr.bf16.mxu0 0
    %371 = vmatpush1.bf16.msra.mxu0 0
    %372 = vmatprep.subr.bf16.mxu0 0
    %373 = vmatpush1.bf16.msra.mxu0 0
    %374 = vmatprep.subr.bf16.mxu0 0
    %375 = vmatpush1.bf16.msra.mxu0 0
    %376 = vmatprep.subr.bf16.mxu0 0
    %377 = vmatpush1.bf16.msra.mxu0 0
    %378 = vmatprep.subr.bf16.mxu0 0
    %379 = vmatpush1.bf16.msra.mxu0 0
    %380 = vmatprep.subr.bf16.mxu0 0
    %381 = vmatpush1.bf16.msra.mxu0 %v364
    %382 = vmatprep.subr.bf16.mxu0 0
    %383 = vmatpush2.bf16.msra.mxu0 0
    %384 = vmatprep.subr.bf16.mxu0 0
    %385 = vmatpush2.bf16.msra.mxu0 0
    %386 = vmatprep.subr.bf16.mxu0 0
    %387 = vmatpush2.bf16.msra.mxu0 0
    %388 = vmatprep.subr.bf16.mxu0 0
    %389 = vmatpush2.bf16.msra.mxu0 0
    %390 = vmatprep.subr.bf16.mxu0 0
    %391 = vmatpush2.bf16.msra.mxu0 0
    %392 = vmatprep.subr.bf16.mxu0 0
    %393 = vmatpush2.bf16.msra.mxu0 0
    %394 = vmatprep.subr.bf16.mxu0 0
    %395 = vmatpush2.bf16.msra.mxu0 0
    %396 = vmatprep.subr.bf16.mxu0 0
    %397 = vmatpush2.bf16.msra.mxu0 0
    %398 = vmatprep.mubr.bf16.mxu0 0
    %399 = vmatmul.mubr.bf16.gmra.mxu0 %v360
    %v400 = vpop.f32.mrf.mxu0
    %v401 = vadd.f32 0.0, %v400
    %v402 = vpop.f32.mrf.mxu0
    %v403 = vpop.f32.mrf.mxu0
    %v404 = vpop.f32.mrf.mxu0
    %405 = vdwg.mxu0
    %406 = vrot.lane.b32.xlu0 %v235, 64
    %v407 = vpop.permute.xlu0 %406
    %v409 = vsel %vm238, %v356, 0
    %v412 = vsel %vm362, %v407, 0
    %414 = vmatprep.subr.bf16.mxu0 0
    %415 = vmatpush1.bf16.msra.mxu0 0
    %416 = vmatprep.subr.bf16.mxu0 0
    %417 = vmatpush1.bf16.msra.mxu0 0
    %418 = vmatprep.subr.bf16.mxu0 0
    %419 = vmatpush1.bf16.msra.mxu0 0
    %420 = vmatprep.subr.bf16.mxu0 0
    %421 = vmatpush1.bf16.msra.mxu0 0
    %422 = vmatprep.subr.bf16.mxu0 0
    %423 = vmatpush1.bf16.msra.mxu0 0
    %424 = vmatprep.subr.bf16.mxu0 0
    %425 = vmatpush1.bf16.msra.mxu0 0
    %426 = vmatprep.subr.bf16.mxu0 0
    %427 = vmatpush1.bf16.msra.mxu0 0
    %428 = vmatprep.subr.bf16.mxu0 0
    %429 = vmatpush1.bf16.msra.mxu0 %v412
    %430 = vmatprep.subr.bf16.mxu0 0
    %431 = vmatpush2.bf16.msra.mxu0 0
    %432 = vmatprep.subr.bf16.mxu0 0
    %433 = vmatpush2.bf16.msra.mxu0 0
    %434 = vmatprep.subr.bf16.mxu0 0
    %435 = vmatpush2.bf16.msra.mxu0 0
    %436 = vmatprep.subr.bf16.mxu0 0
    %437 = vmatpush2.bf16.msra.mxu0 0
    %438 = vmatprep.subr.bf16.mxu0 0
    %439 = vmatpush2.bf16.msra.mxu0 0
    %440 = vmatprep.subr.bf16.mxu0 0
    %441 = vmatpush2.bf16.msra.mxu0 0
    %442 = vmatprep.subr.bf16.mxu0 0
    %443 = vmatpush2.bf16.msra.mxu0 0
    %444 = vmatprep.subr.bf16.mxu0 0
    %445 = vmatpush2.bf16.msra.mxu0 0
    %446 = vmatprep.mubr.bf16.mxu0 0
    %447 = vmatmul.mubr.bf16.gmra.mxu0 %v409
    %v448 = vpop.f32.mrf.mxu0
    %v449 = vadd.f32 0.0, %v448
    %v450 = vpop.f32.mrf.mxu0
    %v451 = vpop.f32.mrf.mxu0
    %v452 = vpop.f32.mrf.mxu0
    %453 = vdwg.mxu0
    %454 = vrot.lane.b32.xlu0 %v234, 120
    %v455 = vpop.permute.xlu0 %454
    %456 = vrot.lane.b32.xlu0 %v234, 88
    %v457 = vpop.permute.xlu0 %456
    %v459 = vsel %vm238, %v455, 0
    %v462 = vsel %vm238, %v457, 0
    %464 = vmatprep.subr.bf16.mxu0 0
    %465 = vmatpush1.bf16.xpose.msra.mxu0 0
    %466 = vmatprep.subr.bf16.mxu0 0
    %467 = vmatpush1.bf16.xpose.msra.mxu0 0
    %468 = vmatprep.subr.bf16.mxu0 0
    %469 = vmatpush1.bf16.xpose.msra.mxu0 0
    %470 = vmatprep.subr.bf16.mxu0 0
    %471 = vmatpush1.bf16.xpose.msra.mxu0 0
    %472 = vmatprep.subr.bf16.mxu0 0
    %473 = vmatpush1.bf16.xpose.msra.mxu0 0
    %474 = vmatprep.subr.bf16.mxu0 0
    %475 = vmatpush1.bf16.xpose.msra.mxu0 0
    %476 = vmatprep.subr.bf16.mxu0 0
    %477 = vmatpush1.bf16.xpose.msra.mxu0 0
    %478 = vmatprep.subr.bf16.mxu0 0
    %479 = vmatpush1.bf16.xpose.msra.mxu0 %v462
    %480 = vmatprep.subr.bf16.mxu0 0
    %481 = vmatpush2.bf16.xpose.msra.mxu0 0
    %482 = vmatprep.subr.bf16.mxu0 0
    %483 = vmatpush2.bf16.xpose.msra.mxu0 0
    %484 = vmatprep.subr.bf16.mxu0 0
    %485 = vmatpush2.bf16.xpose.msra.mxu0 0
    %486 = vmatprep.subr.bf16.mxu0 0
    %487 = vmatpush2.bf16.xpose.msra.mxu0 0
    %488 = vmatprep.subr.bf16.mxu0 0
    %489 = vmatpush2.bf16.xpose.msra.mxu0 0
    %490 = vmatprep.subr.bf16.mxu0 0
    %491 = vmatpush2.bf16.xpose.msra.mxu0 0
    %492 = vmatprep.subr.bf16.mxu0 0
    %493 = vmatpush2.bf16.xpose.msra.mxu0 0
    %494 = vmatprep.subr.bf16.mxu0 0
    %495 = vmatpush2.bf16.xpose.msra.mxu0 0
    %496 = vmatprep.mubr.bf16.mxu0 0
    %497 = vmatmul.mubr.bf16.gmra.mxu0 %v459
    %v498 = vpop.f32.mrf.mxu0
    %v499 = vadd.f32 %v160, %v498
    %v500 = vpop.f32.mrf.mxu0
    %v501 = vpop.f32.mrf.mxu0
    %v502 = vpop.f32.mrf.mxu0
    %503 = vdwg.mxu0
    %504 = vrot.lane.b32.xlu0 %v235, 120
    %v505 = vpop.permute.xlu0 %504
    %506 = vrot.lane.b32.xlu0 %v235, 88
    %v507 = vpop.permute.xlu0 %506
    %v509 = vsel %vm238, %v505, 0
    %v512 = vsel %vm238, %v507, 0
    %514 = vmatprep.subr.bf16.mxu0 0
    %515 = vmatpush1.bf16.xpose.msra.mxu0 0
    %516 = vmatprep.subr.bf16.mxu0 0
    %517 = vmatpush1.bf16.xpose.msra.mxu0 0
    %518 = vmatprep.subr.bf16.mxu0 0
    %519 = vmatpush1.bf16.xpose.msra.mxu0 0
    %520 = vmatprep.subr.bf16.mxu0 0
    %521 = vmatpush1.bf16.xpose.msra.mxu0 0
    %522 = vmatprep.subr.bf16.mxu0 0
    %523 = vmatpush1.bf16.xpose.msra.mxu0 0
    %524 = vmatprep.subr.bf16.mxu0 0
    %525 = vmatpush1.bf16.xpose.msra.mxu0 0
    %526 = vmatprep.subr.bf16.mxu0 0
    %527 = vmatpush1.bf16.xpose.msra.mxu0 0
    %528 = vmatprep.subr.bf16.mxu0 0
    %529 = vmatpush1.bf16.xpose.msra.mxu0 %v512
    %530 = vmatprep.subr.bf16.mxu0 0
    %531 = vmatpush2.bf16.xpose.msra.mxu0 0
    %532 = vmatprep.subr.bf16.mxu0 0
    %533 = vmatpush2.bf16.xpose.msra.mxu0 0
    %534 = vmatprep.subr.bf16.mxu0 0
    %535 = vmatpush2.bf16.xpose.msra.mxu0 0
    %536 = vmatprep.subr.bf16.mxu0 0
    %537 = vmatpush2.bf16.xpose.msra.mxu0 0
    %538 = vmatprep.subr.bf16.mxu0 0
    %539 = vmatpush2.bf16.xpose.msra.mxu0 0
    %540 = vmatprep.subr.bf16.mxu0 0
    %541 = vmatpush2.bf16.xpose.msra.mxu0 0
    %542 = vmatprep.subr.bf16.mxu0 0
    %543 = vmatpush2.bf16.xpose.msra.mxu0 0
    %544 = vmatprep.subr.bf16.mxu0 0
    %545 = vmatpush2.bf16.xpose.msra.mxu0 0
    %546 = vmatprep.mubr.bf16.mxu0 0
    %547 = vmatmul.mubr.bf16.gmra.mxu0 %v509
    %v548 = vpop.f32.mrf.mxu0
    %v549 = vadd.f32 %v160, %v548
    %v550 = vpop.f32.mrf.mxu0
    %v551 = vpop.f32.mrf.mxu0
    %v552 = vpop.f32.mrf.mxu0
    %553 = vdwg.mxu0
    %v554 = vsel %vm238, %v499, -inf
    %555 = vmax.xlane.f32.xlu0 %v554
    %v556 = vpop.xlane.xlu0 %555
    %v557 = vsel %vm238, %v549, -inf
    %558 = vmax.xlane.f32.xlu0 %v557
    %v559 = vpop.xlane.xlu0 %558
    %v560 = vsub.f32 %v499, %v556
    %v561 = vsub.f32 %v549, %v559
    %v562 = vmul.f32 %v560, 1.442695
    %v563 = vpow.pop %v562
    %v564 = vmul.f32 %v561, 1.442695
    %v565 = vpow.pop %v564
    %v566 = vsel %vm238, %v563, 0.0
    %567 = vadd.xlane.f32.xlu0 %v566
    %v568 = vpop.xlane.xlu0 %567
    %v569 = vsel %vm238, %v565, 0.0
    %570 = vadd.xlane.f32.xlu0 %v569
    %v571 = vpop.xlane.xlu0 %570
    %v572 = vrcp.pop %v568
    %v573 = vrcp.pop %v571
    %v574 = vmul.f32 %v563, %v572
    %v575 = vmul.f32 %v565, %v573
    %v576 = vpack.c.bf16 %v574, %v574
    %v577 = vpack.c.bf16 %v575, %v575
    %578 = vrot.lane.b32.xlu0 %v234, 56
    %v579 = vpop.permute.xlu0 %578
    %v581 = vsel %vm238, %v576, 0
    %v584 = vsel %vm362, %v579, 0
    %586 = vmatprep.subr.bf16.mxu0 0
    %587 = vmatpush1.bf16.msra.mxu0 0
    %588 = vmatprep.subr.bf16.mxu0 0
    %589 = vmatpush1.bf16.msra.mxu0 0
    %590 = vmatprep.subr.bf16.mxu0 0
    %591 = vmatpush1.bf16.msra.mxu0 0
    %592 = vmatprep.subr.bf16.mxu0 0
    %593 = vmatpush1.bf16.msra.mxu0 0
    %594 = vmatprep.subr.bf16.mxu0 0
    %595 = vmatpush1.bf16.msra.mxu0 0
    %596 = vmatprep.subr.bf16.mxu0 0
    %597 = vmatpush1.bf16.msra.mxu0 0
    %598 = vmatprep.subr.bf16.mxu0 0
    %599 = vmatpush1.bf16.msra.mxu0 0
    %600 = vmatprep.subr.bf16.mxu0 0
    %601 = vmatpush1.bf16.msra.mxu0 %v584
    %602 = vmatprep.subr.bf16.mxu0 0
    %603 = vmatpush2.bf16.msra.mxu0 0
    %604 = vmatprep.subr.bf16.mxu0 0
    %605 = vmatpush2.bf16.msra.mxu0 0
    %606 = vmatprep.subr.bf16.mxu0 0
    %607 = vmatpush2.bf16.msra.mxu0 0
    %608 = vmatprep.subr.bf16.mxu0 0
    %609 = vmatpush2.bf16.msra.mxu0 0
    %610 = vmatprep.subr.bf16.mxu0 0
    %611 = vmatpush2.bf16.msra.mxu0 0
    %612 = vmatprep.subr.bf16.mxu0 0
    %613 = vmatpush2.bf16.msra.mxu0 0
    %614 = vmatprep.subr.bf16.mxu0 0
    %615 = vmatpush2.bf16.msra.mxu0 0
    %616 = vmatprep.subr.bf16.mxu0 0
    %617 = vmatpush2.bf16.msra.mxu0 0
    %618 = vmatprep.mubr.bf16.mxu0 0
    %619 = vmatmul.mubr.bf16.gmra.mxu0 %v581
    %v620 = vpop.f32.mrf.mxu0
    %v621 = vadd.f32 0.0, %v620
    %v622 = vpop.f32.mrf.mxu0
    %v623 = vpop.f32.mrf.mxu0
    %v624 = vpop.f32.mrf.mxu0
    %625 = vdwg.mxu0
    %626 = vrot.lane.b32.xlu0 %v235, 56
    %v627 = vpop.permute.xlu0 %626
    %v629 = vsel %vm238, %v577, 0
    %v632 = vsel %vm362, %v627, 0
    %634 = vmatprep.subr.bf16.mxu0 0
    %635 = vmatpush1.bf16.msra.mxu0 0
    %636 = vmatprep.subr.bf16.mxu0 0
    %637 = vmatpush1.bf16.msra.mxu0 0
    %638 = vmatprep.subr.bf16.mxu0 0
    %639 = vmatpush1.bf16.msra.mxu0 0
    %640 = vmatprep.subr.bf16.mxu0 0
    %641 = vmatpush1.bf16.msra.mxu0 0
    %642 = vmatprep.subr.bf16.mxu0 0
    %643 = vmatpush1.bf16.msra.mxu0 0
    %644 = vmatprep.subr.bf16.mxu0 0
    %645 = vmatpush1.bf16.msra.mxu0 0
    %646 = vmatprep.subr.bf16.mxu0 0
    %647 = vmatpush1.bf16.msra.mxu0 0
    %648 = vmatprep.subr.bf16.mxu0 0
    %649 = vmatpush1.bf16.msra.mxu0 %v632
    %650 = vmatprep.subr.bf16.mxu0 0
    %651 = vmatpush2.bf16.msra.mxu0 0
    %652 = vmatprep.subr.bf16.mxu0 0
    %653 = vmatpush2.bf16.msra.mxu0 0
    %654 = vmatprep.subr.bf16.mxu0 0
    %655 = vmatpush2.bf16.msra.mxu0 0
    %656 = vmatprep.subr.bf16.mxu0 0
    %657 = vmatpush2.bf16.msra.mxu0 0
    %658 = vmatprep.subr.bf16.mxu0 0
    %659 = vmatpush2.bf16.msra.mxu0 0
    %660 = vmatprep.subr.bf16.mxu0 0
    %661 = vmatpush2.bf16.msra.mxu0 0
    %662 = vmatprep.subr.bf16.mxu0 0
    %663 = vmatpush2.bf16.msra.mxu0 0
    %664 = vmatprep.subr.bf16.mxu0 0
    %665 = vmatpush2.bf16.msra.mxu0 0
    %666 = vmatprep.mubr.bf16.mxu0 0
    %667 = vmatmul.mubr.bf16.gmra.mxu0 %v629
    %v668 = vpop.f32.mrf.mxu0
    %v669 = vadd.f32 0.0, %v668
    %v670 = vpop.f32.mrf.mxu0
    %v671 = vpop.f32.mrf.mxu0
    %v672 = vpop.f32.mrf.mxu0
    %673 = vdwg.mxu0
    %674 = vrot.lane.b32.xlu0 %v234, 112
    %v675 = vpop.permute.xlu0 %674
    %676 = vrot.lane.b32.xlu0 %v234, 80
    %v677 = vpop.permute.xlu0 %676
    %v679 = vsel %vm238, %v675, 0
    %v682 = vsel %vm238, %v677, 0
    %684 = vmatprep.subr.bf16.mxu0 0
    %685 = vmatpush1.bf16.xpose.msra.mxu0 0
    %686 = vmatprep.subr.bf16.mxu0 0
    %687 = vmatpush1.bf16.xpose.msra.mxu0 0
    %688 = vmatprep.subr.bf16.mxu0 0
    %689 = vmatpush1.bf16.xpose.msra.mxu0 0
    %690 = vmatprep.subr.bf16.mxu0 0
    %691 = vmatpush1.bf16.xpose.msra.mxu0 0
    %692 = vmatprep.subr.bf16.mxu0 0
    %693 = vmatpush1.bf16.xpose.msra.mxu0 0
    %694 = vmatprep.subr.bf16.mxu0 0
    %695 = vmatpush1.bf16.xpose.msra.mxu0 0
    %696 = vmatprep.subr.bf16.mxu0 0
    %697 = vmatpush1.bf16.xpose.msra.mxu0 0
    %698 = vmatprep.subr.bf16.mxu0 0
    %699 = vmatpush1.bf16.xpose.msra.mxu0 %v682
    %700 = vmatprep.subr.bf16.mxu0 0
    %701 = vmatpush2.bf16.xpose.msra.mxu0 0
    %702 = vmatprep.subr.bf16.mxu0 0
    %703 = vmatpush2.bf16.xpose.msra.mxu0 0
    %704 = vmatprep.subr.bf16.mxu0 0
    %705 = vmatpush2.bf16.xpose.msra.mxu0 0
    %706 = vmatprep.subr.bf16.mxu0 0
    %707 = vmatpush2.bf16.xpose.msra.mxu0 0
    %708 = vmatprep.subr.bf16.mxu0 0
    %709 = vmatpush2.bf16.xpose.msra.mxu0 0
    %710 = vmatprep.subr.bf16.mxu0 0
    %711 = vmatpush2.bf16.xpose.msra.mxu0 0
    %712 = vmatprep.subr.bf16.mxu0 0
    %713 = vmatpush2.bf16.xpose.msra.mxu0 0
    %714 = vmatprep.subr.bf16.mxu0 0
    %715 = vmatpush2.bf16.xpose.msra.mxu0 0
    %716 = vmatprep.mubr.bf16.mxu0 0
    %717 = vmatmul.mubr.bf16.gmra.mxu0 %v679
    %v718 = vpop.f32.mrf.mxu0
    %v719 = vadd.f32 %v160, %v718
    %v720 = vpop.f32.mrf.mxu0
    %v721 = vpop.f32.mrf.mxu0
    %v722 = vpop.f32.mrf.mxu0
    %723 = vdwg.mxu0
    %724 = vrot.lane.b32.xlu0 %v235, 112
    %v725 = vpop.permute.xlu0 %724
    %726 = vrot.lane.b32.xlu0 %v235, 80
    %v727 = vpop.permute.xlu0 %726
    %v729 = vsel %vm238, %v725, 0
    %v732 = vsel %vm238, %v727, 0
    %734 = vmatprep.subr.bf16.mxu0 0
    %735 = vmatpush1.bf16.xpose.msra.mxu0 0
    %736 = vmatprep.subr.bf16.mxu0 0
    %737 = vmatpush1.bf16.xpose.msra.mxu0 0
    %738 = vmatprep.subr.bf16.mxu0 0
    %739 = vmatpush1.bf16.xpose.msra.mxu0 0
    %740 = vmatprep.subr.bf16.mxu0 0
    %741 = vmatpush1.bf16.xpose.msra.mxu0 0
    %742 = vmatprep.subr.bf16.mxu0 0
    %743 = vmatpush1.bf16.xpose.msra.mxu0 0
    %744 = vmatprep.subr.bf16.mxu0 0
    %745 = vmatpush1.bf16.xpose.msra.mxu0 0
    %746 = vmatprep.subr.bf16.mxu0 0
    %747 = vmatpush1.bf16.xpose.msra.mxu0 0
    %748 = vmatprep.subr.bf16.mxu0 0
    %749 = vmatpush1.bf16.xpose.msra.mxu0 %v732
    %750 = vmatprep.subr.bf16.mxu0 0
    %751 = vmatpush2.bf16.xpose.msra.mxu0 0
    %752 = vmatprep.subr.bf16.mxu0 0
    %753 = vmatpush2.bf16.xpose.msra.mxu0 0
    %754 = vmatprep.subr.bf16.mxu0 0
    %755 = vmatpush2.bf16.xpose.msra.mxu0 0
    %756 = vmatprep.subr.bf16.mxu0 0
    %757 = vmatpush2.bf16.xpose.msra.mxu0 0
    %758 = vmatprep.subr.bf16.mxu0 0
    %759 = vmatpush2.bf16.xpose.msra.mxu0 0
    %760 = vmatprep.subr.bf16.mxu0 0
    %761 = vmatpush2.bf16.xpose.msra.mxu0 0
    %762 = vmatprep.subr.bf16.mxu0 0
    %763 = vmatpush2.bf16.xpose.msra.mxu0 0
    %764 = vmatprep.subr.bf16.mxu0 0
    %765 = vmatpush2.bf16.xpose.msra.mxu0 0
    %766 = vmatprep.mubr.bf16.mxu0 0
    %767 = vmatmul.mubr.bf16.gmra.mxu0 %v729
    %v768 = vpop.f32.mrf.mxu0
    %v769 = vadd.f32 %v160, %v768
    %v770 = vpop.f32.mrf.mxu0
    %v771 = vpop.f32.mrf.mxu0
    %v772 = vpop.f32.mrf.mxu0
    %773 = vdwg.mxu0
    %v774 = vsel %vm238, %v719, -inf
    %775 = vmax.xlane.f32.xlu0 %v774
    %v776 = vpop.xlane.xlu0 %775
    %v777 = vsel %vm238, %v769, -inf
    %778 = vmax.xlane.f32.xlu0 %v777
    %v779 = vpop.xlane.xlu0 %778
    %v780 = vsub.f32 %v719, %v776
    %v781 = vsub.f32 %v769, %v779
    %v782 = vmul.f32 %v780, 1.442695
    %v783 = vpow.pop %v782
    %v784 = vmul.f32 %v781, 1.442695
    %v785 = vpow.pop %v784
    %v786 = vsel %vm238, %v783, 0.0
    %787 = vadd.xlane.f32.xlu0 %v786
    %v788 = vpop.xlane.xlu0 %787
    %v789 = vsel %vm238, %v785, 0.0
    %790 = vadd.xlane.f32.xlu0 %v789
    %v791 = vpop.xlane.xlu0 %790
    %v792 = vrcp.pop %v788
    %v793 = vrcp.pop %v791
    %v794 = vmul.f32 %v783, %v792
    %v795 = vmul.f32 %v785, %v793
    %v796 = vpack.c.bf16 %v794, %v794
    %v797 = vpack.c.bf16 %v795, %v795
    %798 = vrot.lane.b32.xlu0 %v234, 48
    %v799 = vpop.permute.xlu0 %798
    %v801 = vsel %vm238, %v796, 0
    %v804 = vsel %vm362, %v799, 0
    %806 = vmatprep.subr.bf16.mxu0 0
    %807 = vmatpush1.bf16.msra.mxu0 0
    %808 = vmatprep.subr.bf16.mxu0 0
    %809 = vmatpush1.bf16.msra.mxu0 0
    %810 = vmatprep.subr.bf16.mxu0 0
    %811 = vmatpush1.bf16.msra.mxu0 0
    %812 = vmatprep.subr.bf16.mxu0 0
    %813 = vmatpush1.bf16.msra.mxu0 0
    %814 = vmatprep.subr.bf16.mxu0 0
    %815 = vmatpush1.bf16.msra.mxu0 0
    %816 = vmatprep.subr.bf16.mxu0 0
    %817 = vmatpush1.bf16.msra.mxu0 0
    %818 = vmatprep.subr.bf16.mxu0 0
    %819 = vmatpush1.bf16.msra.mxu0 0
    %820 = vmatprep.subr.bf16.mxu0 0
    %821 = vmatpush1.bf16.msra.mxu0 %v804
    %822 = vmatprep.subr.bf16.mxu0 0
    %823 = vmatpush2.bf16.msra.mxu0 0
    %824 = vmatprep.subr.bf16.mxu0 0
    %825 = vmatpush2.bf16.msra.mxu0 0
    %826 = vmatprep.subr.bf16.mxu0 0
    %827 = vmatpush2.bf16.msra.mxu0 0
    %828 = vmatprep.subr.bf16.mxu0 0
    %829 = vmatpush2.bf16.msra.mxu0 0
    %830 = vmatprep.subr.bf16.mxu0 0
    %831 = vmatpush2.bf16.msra.mxu0 0
    %832 = vmatprep.subr.bf16.mxu0 0
    %833 = vmatpush2.bf16.msra.mxu0 0
    %834 = vmatprep.subr.bf16.mxu0 0
    %835 = vmatpush2.bf16.msra.mxu0 0
    %836 = vmatprep.subr.bf16.mxu0 0
    %837 = vmatpush2.bf16.msra.mxu0 0
    %838 = vmatprep.mubr.bf16.mxu0 0
    %839 = vmatmul.mubr.bf16.gmra.mxu0 %v801
    %v840 = vpop.f32.mrf.mxu0
    %v841 = vadd.f32 0.0, %v840
    %v842 = vpop.f32.mrf.mxu0
    %v843 = vpop.f32.mrf.mxu0
    %v844 = vpop.f32.mrf.mxu0
    %845 = vdwg.mxu0
    %846 = vrot.lane.b32.xlu0 %v235, 48
    %v847 = vpop.permute.xlu0 %846
    %v849 = vsel %vm238, %v797, 0
    %v852 = vsel %vm362, %v847, 0
    %854 = vmatprep.subr.bf16.mxu0 0
    %855 = vmatpush1.bf16.msra.mxu0 0
    %856 = vmatprep.subr.bf16.mxu0 0
    %857 = vmatpush1.bf16.msra.mxu0 0
    %858 = vmatprep.subr.bf16.mxu0 0
    %859 = vmatpush1.bf16.msra.mxu0 0
    %860 = vmatprep.subr.bf16.mxu0 0
    %861 = vmatpush1.bf16.msra.mxu0 0
    %862 = vmatprep.subr.bf16.mxu0 0
    %863 = vmatpush1.bf16.msra.mxu0 0
    %864 = vmatprep.subr.bf16.mxu0 0
    %865 = vmatpush1.bf16.msra.mxu0 0
    %866 = vmatprep.subr.bf16.mxu0 0
    %867 = vmatpush1.bf16.msra.mxu0 0
    %868 = vmatprep.subr.bf16.mxu0 0
    %869 = vmatpush1.bf16.msra.mxu0 %v852
    %870 = vmatprep.subr.bf16.mxu0 0
    %871 = vmatpush2.bf16.msra.mxu0 0
    %872 = vmatprep.subr.bf16.mxu0 0
    %873 = vmatpush2.bf16.msra.mxu0 0
    %874 = vmatprep.subr.bf16.mxu0 0
    %875 = vmatpush2.bf16.msra.mxu0 0
    %876 = vmatprep.subr.bf16.mxu0 0
    %877 = vmatpush2.bf16.msra.mxu0 0
    %878 = vmatprep.subr.bf16.mxu0 0
    %879 = vmatpush2.bf16.msra.mxu0 0
    %880 = vmatprep.subr.bf16.mxu0 0
    %881 = vmatpush2.bf16.msra.mxu0 0
    %882 = vmatprep.subr.bf16.mxu0 0
    %883 = vmatpush2.bf16.msra.mxu0 0
    %884 = vmatprep.subr.bf16.mxu0 0
    %885 = vmatpush2.bf16.msra.mxu0 0
    %886 = vmatprep.mubr.bf16.mxu0 0
    %887 = vmatmul.mubr.bf16.gmra.mxu0 %v849
    %v888 = vpop.f32.mrf.mxu0
    %v889 = vadd.f32 0.0, %v888
    %v890 = vpop.f32.mrf.mxu0
    %v891 = vpop.f32.mrf.mxu0
    %v892 = vpop.f32.mrf.mxu0
    %893 = vdwg.mxu0
    %894 = vrot.lane.b32.xlu0 %v234, 104
    %v895 = vpop.permute.xlu0 %894
    %896 = vrot.lane.b32.xlu0 %v234, 72
    %v897 = vpop.permute.xlu0 %896
    %v899 = vsel %vm238, %v895, 0
    %v902 = vsel %vm238, %v897, 0
    %904 = vmatprep.subr.bf16.mxu0 0
    %905 = vmatpush1.bf16.xpose.msra.mxu0 0
    %906 = vmatprep.subr.bf16.mxu0 0
    %907 = vmatpush1.bf16.xpose.msra.mxu0 0
    %908 = vmatprep.subr.bf16.mxu0 0
    %909 = vmatpush1.bf16.xpose.msra.mxu0 0
    %910 = vmatprep.subr.bf16.mxu0 0
    %911 = vmatpush1.bf16.xpose.msra.mxu0 0
    %912 = vmatprep.subr.bf16.mxu0 0
    %913 = vmatpush1.bf16.xpose.msra.mxu0 0
    %914 = vmatprep.subr.bf16.mxu0 0
    %915 = vmatpush1.bf16.xpose.msra.mxu0 0
    %916 = vmatprep.subr.bf16.mxu0 0
    %917 = vmatpush1.bf16.xpose.msra.mxu0 0
    %918 = vmatprep.subr.bf16.mxu0 0
    %919 = vmatpush1.bf16.xpose.msra.mxu0 %v902
    %920 = vmatprep.subr.bf16.mxu0 0
    %921 = vmatpush2.bf16.xpose.msra.mxu0 0
    %922 = vmatprep.subr.bf16.mxu0 0
    %923 = vmatpush2.bf16.xpose.msra.mxu0 0
    %924 = vmatprep.subr.bf16.mxu0 0
    %925 = vmatpush2.bf16.xpose.msra.mxu0 0
    %926 = vmatprep.subr.bf16.mxu0 0
    %927 = vmatpush2.bf16.xpose.msra.mxu0 0
    %928 = vmatprep.subr.bf16.mxu0 0
    %929 = vmatpush2.bf16.xpose.msra.mxu0 0
    %930 = vmatprep.subr.bf16.mxu0 0
    %931 = vmatpush2.bf16.xpose.msra.mxu0 0
    %932 = vmatprep.subr.bf16.mxu0 0
    %933 = vmatpush2.bf16.xpose.msra.mxu0 0
    %934 = vmatprep.subr.bf16.mxu0 0
    %935 = vmatpush2.bf16.xpose.msra.mxu0 0
    %936 = vmatprep.mubr.bf16.mxu0 0
    %937 = vmatmul.mubr.bf16.gmra.mxu0 %v899
    %v938 = vpop.f32.mrf.mxu0
    %v939 = vadd.f32 %v160, %v938
    %v940 = vpop.f32.mrf.mxu0
    %v941 = vpop.f32.mrf.mxu0
    %v942 = vpop.f32.mrf.mxu0
    %943 = vdwg.mxu0
    %944 = vrot.lane.b32.xlu0 %v235, 104
    %v945 = vpop.permute.xlu0 %944
    %946 = vrot.lane.b32.xlu0 %v235, 72
    %v947 = vpop.permute.xlu0 %946
    %v949 = vsel %vm238, %v945, 0
    %v952 = vsel %vm238, %v947, 0
    %954 = vmatprep.subr.bf16.mxu0 0
    %955 = vmatpush1.bf16.xpose.msra.mxu0 0
    %956 = vmatprep.subr.bf16.mxu0 0
    %957 = vmatpush1.bf16.xpose.msra.mxu0 0
    %958 = vmatprep.subr.bf16.mxu0 0
    %959 = vmatpush1.bf16.xpose.msra.mxu0 0
    %960 = vmatprep.subr.bf16.mxu0 0
    %961 = vmatpush1.bf16.xpose.msra.mxu0 0
    %962 = vmatprep.subr.bf16.mxu0 0
    %963 = vmatpush1.bf16.xpose.msra.mxu0 0
    %964 = vmatprep.subr.bf16.mxu0 0
    %965 = vmatpush1.bf16.xpose.msra.mxu0 0
    %966 = vmatprep.subr.bf16.mxu0 0
    %967 = vmatpush1.bf16.xpose.msra.mxu0 0
    %968 = vmatprep.subr.bf16.mxu0 0
    %969 = vmatpush1.bf16.xpose.msra.mxu0 %v952
    %970 = vmatprep.subr.bf16.mxu0 0
    %971 = vmatpush2.bf16.xpose.msra.mxu0 0
    %972 = vmatprep.subr.bf16.mxu0 0
    %973 = vmatpush2.bf16.xpose.msra.mxu0 0
    %974 = vmatprep.subr.bf16.mxu0 0
    %975 = vmatpush2.bf16.xpose.msra.mxu0 0
    %976 = vmatprep.subr.bf16.mxu0 0
    %977 = vmatpush2.bf16.xpose.msra.mxu0 0
    %978 = vmatprep.subr.bf16.mxu0 0
    %979 = vmatpush2.bf16.xpose.msra.mxu0 0
    %980 = vmatprep.subr.bf16.mxu0 0
    %981 = vmatpush2.bf16.xpose.msra.mxu0 0
    %982 = vmatprep.subr.bf16.mxu0 0
    %983 = vmatpush2.bf16.xpose.msra.mxu0 0
    %984 = vmatprep.subr.bf16.mxu0 0
    %985 = vmatpush2.bf16.xpose.msra.mxu0 0
    %986 = vmatprep.mubr.bf16.mxu0 0
    %987 = vmatmul.mubr.bf16.gmra.mxu0 %v949
    %v988 = vpop.f32.mrf.mxu0
    %v989 = vadd.f32 %v160, %v988
    %v990 = vpop.f32.mrf.mxu0
    %v991 = vpop.f32.mrf.mxu0
    %v992 = vpop.f32.mrf.mxu0
    %993 = vdwg.mxu0
    %v994 = vsel %vm238, %v939, -inf
    %995 = vmax.xlane.f32.xlu0 %v994
    %v996 = vpop.xlane.xlu0 %995
    %v997 = vsel %vm238, %v989, -inf
    %998 = vmax.xlane.f32.xlu0 %v997
    %v999 = vpop.xlane.xlu0 %998
    %v1000 = vsub.f32 %v939, %v996
    %v1001 = vsub.f32 %v989, %v999
    %v1002 = vmul.f32 %v1000, 1.442695
    %v1003 = vpow.pop %v1002
    %v1004 = vmul.f32 %v1001, 1.442695
    %v1005 = vpow.pop %v1004
    %v1006 = vsel %vm238, %v1003, 0.0
    %1007 = vadd.xlane.f32.xlu0 %v1006
    %v1008 = vpop.xlane.xlu0 %1007
    %v1009 = vsel %vm238, %v1005, 0.0
    %1010 = vadd.xlane.f32.xlu0 %v1009
    %v1011 = vpop.xlane.xlu0 %1010
    %v1012 = vrcp.pop %v1008
    %v1013 = vrcp.pop %v1011
    %v1014 = vmul.f32 %v1003, %v1012
    %v1015 = vmul.f32 %v1005, %v1013
    %v1016 = vpack.c.bf16 %v1014, %v1014
    %v1017 = vpack.c.bf16 %v1015, %v1015
    %1018 = vrot.lane.b32.xlu0 %v234, 40
    %v1019 = vpop.permute.xlu0 %1018
    %v1021 = vsel %vm238, %v1016, 0
    %v1024 = vsel %vm362, %v1019, 0
    %1026 = vmatprep.subr.bf16.mxu0 0
    %1027 = vmatpush1.bf16.msra.mxu0 0
    %1028 = vmatprep.subr.bf16.mxu0 0
    %1029 = vmatpush1.bf16.msra.mxu0 0
    %1030 = vmatprep.subr.bf16.mxu0 0
    %1031 = vmatpush1.bf16.msra.mxu0 0
    %1032 = vmatprep.subr.bf16.mxu0 0
    %1033 = vmatpush1.bf16.msra.mxu0 0
    %1034 = vmatprep.subr.bf16.mxu0 0
    %1035 = vmatpush1.bf16.msra.mxu0 0
    %1036 = vmatprep.subr.bf16.mxu0 0
    %1037 = vmatpush1.bf16.msra.mxu0 0
    %1038 = vmatprep.subr.bf16.mxu0 0
    %1039 = vmatpush1.bf16.msra.mxu0 0
    %1040 = vmatprep.subr.bf16.mxu0 0
    %1041 = vmatpush1.bf16.msra.mxu0 %v1024
    %1042 = vmatprep.subr.bf16.mxu0 0
    %1043 = vmatpush2.bf16.msra.mxu0 0
    %1044 = vmatprep.subr.bf16.mxu0 0
    %1045 = vmatpush2.bf16.msra.mxu0 0
    %1046 = vmatprep.subr.bf16.mxu0 0
    %1047 = vmatpush2.bf16.msra.mxu0 0
    %1048 = vmatprep.subr.bf16.mxu0 0
    %1049 = vmatpush2.bf16.msra.mxu0 0
    %1050 = vmatprep.subr.bf16.mxu0 0
    %1051 = vmatpush2.bf16.msra.mxu0 0
    %1052 = vmatprep.subr.bf16.mxu0 0
    %1053 = vmatpush2.bf16.msra.mxu0 0
    %1054 = vmatprep.subr.bf16.mxu0 0
    %1055 = vmatpush2.bf16.msra.mxu0 0
    %1056 = vmatprep.subr.bf16.mxu0 0
    %1057 = vmatpush2.bf16.msra.mxu0 0
    %1058 = vmatprep.mubr.bf16.mxu0 0
    %1059 = vmatmul.mubr.bf16.gmra.mxu0 %v1021
    %v1060 = vpop.f32.mrf.mxu0
    %v1061 = vadd.f32 0.0, %v1060
    %v1062 = vpop.f32.mrf.mxu0
    %v1063 = vpop.f32.mrf.mxu0
    %v1064 = vpop.f32.mrf.mxu0
    %1065 = vdwg.mxu0
    %1066 = vrot.lane.b32.xlu0 %v235, 40
    %v1067 = vpop.permute.xlu0 %1066
    %v1069 = vsel %vm238, %v1017, 0
    %v1072 = vsel %vm362, %v1067, 0
    %1074 = vmatprep.subr.bf16.mxu0 0
    %1075 = vmatpush1.bf16.msra.mxu0 0
    %1076 = vmatprep.subr.bf16.mxu0 0
    %1077 = vmatpush1.bf16.msra.mxu0 0
    %1078 = vmatprep.subr.bf16.mxu0 0
    %1079 = vmatpush1.bf16.msra.mxu0 0
    %1080 = vmatprep.subr.bf16.mxu0 0
    %1081 = vmatpush1.bf16.msra.mxu0 0
    %1082 = vmatprep.subr.bf16.mxu0 0
    %1083 = vmatpush1.bf16.msra.mxu0 0
    %1084 = vmatprep.subr.bf16.mxu0 0
    %1085 = vmatpush1.bf16.msra.mxu0 0
    %1086 = vmatprep.subr.bf16.mxu0 0
    %1087 = vmatpush1.bf16.msra.mxu0 0
    %1088 = vmatprep.subr.bf16.mxu0 0
    %1089 = vmatpush1.bf16.msra.mxu0 %v1072
    %1090 = vmatprep.subr.bf16.mxu0 0
    %1091 = vmatpush2.bf16.msra.mxu0 0
    %1092 = vmatprep.subr.bf16.mxu0 0
    %1093 = vmatpush2.bf16.msra.mxu0 0
    %1094 = vmatprep.subr.bf16.mxu0 0
    %1095 = vmatpush2.bf16.msra.mxu0 0
    %1096 = vmatprep.subr.bf16.mxu0 0
    %1097 = vmatpush2.bf16.msra.mxu0 0
    %1098 = vmatprep.subr.bf16.mxu0 0
    %1099 = vmatpush2.bf16.msra.mxu0 0
    %1100 = vmatprep.subr.bf16.mxu0 0
    %1101 = vmatpush2.bf16.msra.mxu0 0
    %1102 = vmatprep.subr.bf16.mxu0 0
    %1103 = vmatpush2.bf16.msra.mxu0 0
    %1104 = vmatprep.subr.bf16.mxu0 0
    %1105 = vmatpush2.bf16.msra.mxu0 0
    %1106 = vmatprep.mubr.bf16.mxu0 0
    %1107 = vmatmul.mubr.bf16.gmra.mxu0 %v1069
    %v1108 = vpop.f32.mrf.mxu0
    %v1109 = vadd.f32 0.0, %v1108
    %v1110 = vpop.f32.mrf.mxu0
    %v1111 = vpop.f32.mrf.mxu0
    %v1112 = vpop.f32.mrf.mxu0
    %1113 = vdwg.mxu0
    %1116 = vrot.lane.b32.xlu0 %v621, 8
    %v1117 = vpop.permute.xlu0 %1116
    %1118 = vrot.lane.b32.xlu0 %v669, 8
    %v1119 = vpop.permute.xlu0 %1118
    %1124 = vrot.lane.b32.xlu0 %v841, 16
    %v1125 = vpop.permute.xlu0 %1124
    %1126 = vrot.lane.b32.xlu0 %v889, 16
    %v1127 = vpop.permute.xlu0 %1126
    %1132 = vrot.lane.b32.xlu0 %v1061, 24
    %v1133 = vpop.permute.xlu0 %1132
    %1134 = vrot.lane.b32.xlu0 %v1109, 24
    %v1135 = vpop.permute.xlu0 %1134
    %v1138 = vsel %vm238, %v401, %v1117
    %v1139 = vsel %vm238, %v449, %v1119
    %vm1140 = vcmask 130048
    %v1141 = vsel %vm1140, %v1138, %v1125
    %v1142 = vsel %vm1140, %v1139, %v1127
    %vm1143 = vcmask 195584
    %v1144 = vsel %vm1143, %v1141, %v1133
    %v1145 = vsel %vm1143, %v1142, %v1135
    %v1146 = vpack.c.bf16 %v1145, %v1144
    %v1147 = vld [vmem:[%s4] sm:$0xf]
    %v1148 = vld [vmem:[%s4 + $0x4] sm:$0xf]
    %v1149 = vld [vmem:[%s4 + $0x8] sm:$0xf]
    %v1150 = vld [vmem:[%s4 + $0xc] sm:$0xf]
    %v1151 = vld [vmem:[#allocation8] sm:$0x1]
    %v1153 = vlaneseq
    %v1154 = vshrl.u32 %v1153, 7
    %v1155 = vsub.s32 0, %v1154
    %v1156 = vrot.slane %v1151, %v1155
    %v1162 = vunpack.c.l.b16 %v1147
    %v1163 = vunpack.c.l.b16 %v1148
    %v1164 = vunpack.c.l.b16 %v1149
    %v1165 = vunpack.c.l.b16 %v1150
    %v1166 = vpack.c.b16 %v1163, %v1162
    %v1167 = vpack.c.b16 %v1165, %v1164
    %v1171 = vsel %vm185, %v1146, 0
    %1173 = vmatprep.subr.bf16.mxu0 0
    %1174 = vmatpush1.bf16.msra.mxu0 0
    %1175 = vmatprep.subr.bf16.mxu0 0
    %1176 = vmatpush1.bf16.msra.mxu0 0
    %1177 = vmatprep.subr.bf16.mxu0 0
    %1178 = vmatpush1.bf16.msra.mxu0 0
    %1179 = vmatprep.subr.bf16.mxu0 0
    %1180 = vmatpush1.bf16.msra.mxu0 0
    %1181 = vmatprep.subr.bf16.mxu0 0
    %1182 = vmatpush1.bf16.msra.mxu0 0
    %1183 = vmatprep.subr.bf16.mxu0 0
    %1184 = vmatpush1.bf16.msra.mxu0 0
    %1185 = vmatprep.subr.bf16.mxu0 0
    %1186 = vmatpush1.bf16.msra.mxu0 %v1167
    %1187 = vmatprep.subr.bf16.mxu0 0
    %1188 = vmatpush1.bf16.msra.mxu0 %v1166
    %1189 = vmatprep.subr.bf16.mxu0 0
    %1190 = vmatpush2.bf16.msra.mxu0 0
    %1191 = vmatprep.subr.bf16.mxu0 0
    %1192 = vmatpush2.bf16.msra.mxu0 0
    %1193 = vmatprep.subr.bf16.mxu0 0
    %1194 = vmatpush2.bf16.msra.mxu0 0
    %1195 = vmatprep.subr.bf16.mxu0 0
    %1196 = vmatpush2.bf16.msra.mxu0 0
    %1197 = vmatprep.subr.bf16.mxu0 0
    %1198 = vmatpush2.bf16.msra.mxu0 0
    %1199 = vmatprep.subr.bf16.mxu0 0
    %1200 = vmatpush2.bf16.msra.mxu0 0
    %1201 = vmatprep.subr.bf16.mxu0 0
    %1202 = vmatpush2.bf16.msra.mxu0 0
    %1203 = vmatprep.subr.bf16.mxu0 0
    %1204 = vmatpush2.bf16.msra.mxu0 0
    %1205 = vmatprep.mubr.bf16.mxu0 0
    %1206 = vmatmul.mubr.bf16.gmra.mxu0 %v1171
    %v1207 = vpop.f32.mrf.mxu0
    %v1208 = vadd.f32 %v1156, %v1207
    %v1209 = vpop.f32.mrf.mxu0
    %v1210 = vpop.f32.mrf.mxu0
    %v1211 = vadd.f32 %v1156, %v1210
    %v1212 = vpop.f32.mrf.mxu0
    %1213 = vdwg.mxu0
    %v1214 = vadd.f32 %v153, %v1208
    %v1215 = vadd.f32 %v154, %v1211
    %v1216 = vld [vmem:[%s10] sm:$0x1]
    %v1217 = vld [vmem:[%s11] sm:$0x1]
    %v1218 = vsel %vm185, %v1214, 0.0
    %1219 = vadd.xlane.f32.xlu0 %v1218
    %v1220 = vpop.xlane.xlu0 %1219
    %v1221 = vsel %vm185, %v1215, 0.0
    %1222 = vadd.xlane.f32.xlu0 %v1221
    %v1223 = vpop.xlane.xlu0 %1222
    %v1224 = vrcp.pop 32.0
    %v1225 = vmul.f32 %v1220, %v1224
    %v1226 = vmul.f32 %v1223, %v1224
    %v1227 = vsub.f32 %v1214, %v1225
    %v1228 = vsub.f32 %v1215, %v1226
    %v1229 = vmul.f32 %v1227, %v1227
    %v1230 = vmul.f32 %v1228, %v1228
    %v1231 = vsel %vm185, %v1229, 0.0
    %1232 = vadd.xlane.f32.xlu0 %v1231
    %v1233 = vpop.xlane.xlu0 %1232
    %v1234 = vsel %vm185, %v1230, 0.0
    %1235 = vadd.xlane.f32.xlu0 %v1234
    %v1236 = vpop.xlane.xlu0 %1235
    %v1237 = vmul.f32 %v1233, %v1224
    %v1238 = vmul.f32 %v1236, %v1224
    %v1239 = vadd.f32 %v1237, 1e-05
    %v1240 = vadd.f32 %v1238, 1e-05
    %v1241 = vrsqrt.pop %v1239
    %v1242 = vrsqrt.pop %v1240
    %v1243 = vmul.f32 %v1227, %v1241
    %v1244 = vmul.f32 %v1228, %v1242
    %v1246 = vlaneseq
    %v1247 = vshrl.u32 %v1246, 7
    %v1248 = vsub.s32 0, %v1247
    %v1249 = vrot.slane %v1216, %v1248
    %v1251 = vmul.f32 %v1243, %v1249
    %v1252 = vmul.f32 %v1244, %v1249
    %v1254 = vlaneseq
    %v1255 = vshrl.u32 %v1254, 7
    %v1256 = vsub.s32 0, %v1255
    %v1257 = vrot.slane %v1217, %v1256
    %v1259 = vadd.f32 %v1251, %v1257
    %v1260 = vadd.f32 %v1252, %v1257
    %v1261 = vpack.c.bf16 %v1260, %v1259
    %v1262 = vld [vmem:[%s6] sm:$0xf]
    %v1263 = vld [vmem:[%s6 + $0x4] sm:$0xf]
    %v1264 = vld [vmem:[%s6 + $0x8] sm:$0xf]
    %v1265 = vld [vmem:[%s6 + $0xc] sm:$0xf]
    %v1266 = vld [vmem:[#allocation10] sm:$0x1]
    %v1268 = vlaneseq
    %v1269 = vshrl.u32 %v1268, 7
    %v1270 = vsub.s32 0, %v1269
    %v1271 = vrot.slane %v1266, %v1270
    %v1277 = vunpack.c.l.b16 %v1262
    %v1278 = vunpack.c.l.b16 %v1263
    %v1279 = vunpack.c.l.b16 %v1264
    %v1280 = vunpack.c.l.b16 %v1265
    %v1281 = vpack.c.b16 %v1278, %v1277
    %v1282 = vpack.c.b16 %v1280, %v1279
    %v1286 = vsel %vm185, %v1261, 0
    %1288 = vmatprep.subr.bf16.mxu0 0
    %1289 = vmatpush1.bf16.msra.mxu0 0
    %1290 = vmatprep.subr.bf16.mxu0 0
    %1291 = vmatpush1.bf16.msra.mxu0 0
    %1292 = vmatprep.subr.bf16.mxu0 0
    %1293 = vmatpush1.bf16.msra.mxu0 0
    %1294 = vmatprep.subr.bf16.mxu0 0
    %1295 = vmatpush1.bf16.msra.mxu0 0
    %1296 = vmatprep.subr.bf16.mxu0 0
    %1297 = vmatpush1.bf16.msra.mxu0 0
    %1298 = vmatprep.subr.bf16.mxu0 0
    %1299 = vmatpush1.bf16.msra.mxu0 0
    %1300 = vmatprep.subr.bf16.mxu0 0
    %1301 = vmatpush1.bf16.msra.mxu0 %v1282
    %1302 = vmatprep.subr.bf16.mxu0 0
    %1303 = vmatpush1.bf16.msra.mxu0 %v1281
    %1304 = vmatprep.subr.bf16.mxu0 0
    %1305 = vmatpush2.bf16.msra.mxu0 0
    %1306 = vmatprep.subr.bf16.mxu0 0
    %1307 = vmatpush2.bf16.msra.mxu0 0
    %1308 = vmatprep.subr.bf16.mxu0 0
    %1309 = vmatpush2.bf16.msra.mxu0 0
    %1310 = vmatprep.subr.bf16.mxu0 0
    %1311 = vmatpush2.bf16.msra.mxu0 0
    %1312 = vmatprep.subr.bf16.mxu0 0
    %1313 = vmatpush2.bf16.msra.mxu0 0
    %1314 = vmatprep.subr.bf16.mxu0 0
    %1315 = vmatpush2.bf16.msra.mxu0 0
    %1316 = vmatprep.subr.bf16.mxu0 0
    %1317 = vmatpush2.bf16.msra.mxu0 0
    %1318 = vmatprep.subr.bf16.mxu0 0
    %1319 = vmatpush2.bf16.msra.mxu0 0
    %1320 = vmatprep.mubr.bf16.mxu0 0
    %1321 = vmatmul.mubr.bf16.gmra.mxu0 %v1286
    %v1322 = vpop.f32.mrf.mxu0
    %v1323 = vadd.f32 %v1271, %v1322
    %v1324 = vpop.f32.mrf.mxu0
    %v1325 = vpop.f32.mrf.mxu0
    %v1326 = vadd.f32 %v1271, %v1325
    %v1327 = vpop.f32.mrf.mxu0
    %1328 = vdwg.mxu0
    %v1329 = vmax.f32 %v1323, 0.0
    %v1330 = vmax.f32 %v1326, 0.0
    %v1331 = vpack.c.bf16 %v1330, %v1329
    %v1332 = vld [vmem:[%s8] sm:$0xf]
    %v1333 = vld [vmem:[%s8 + $0x4] sm:$0xf]
    %v1334 = vld [vmem:[%s8 + $0x8] sm:$0xf]
    %v1335 = vld [vmem:[%s8 + $0xc] sm:$0xf]
    %v1336 = vld [vmem:[%s8 + $0x10] sm:$0xf]
    %v1337 = vld [vmem:[%s8 + $0x14] sm:$0xf]
    %v1338 = vld [vmem:[%s8 + $0x18] sm:$0xf]
    %v1339 = vld [vmem:[%s8 + $0x1c] sm:$0xf]
    %v1340 = vld [vmem:[#allocation11] sm:$0x1]
    %v1342 = vlaneseq
    %v1343 = vshrl.u32 %v1342, 7
    %v1344 = vsub.s32 0, %v1343
    %v1345 = vrot.slane %v1340, %v1344
    %v1355 = vunpack.c.l.b16 %v1332
    %v1356 = vunpack.c.l.b16 %v1333
    %v1357 = vunpack.c.l.b16 %v1334
    %v1358 = vunpack.c.l.b16 %v1335
    %v1359 = vunpack.c.l.b16 %v1336
    %v1360 = vunpack.c.l.b16 %v1337
    %v1361 = vunpack.c.l.b16 %v1338
    %v1362 = vunpack.c.l.b16 %v1339
    %v1363 = vpack.c.b16 %v1356, %v1355
    %v1364 = vpack.c.b16 %v1358, %v1357
    %v1365 = vpack.c.b16 %v1360, %v1359
    %v1366 = vpack.c.b16 %v1362, %v1361
    %vm1371 = vcmask 523264
    %v1373 = vsel %vm1371, %v1331, 0
    %1375 = vmatprep.subr.bf16.mxu0 0
    %1376 = vmatpush1.bf16.msra.mxu0 0
    %1377 = vmatprep.subr.bf16.mxu0 0
    %1378 = vmatpush1.bf16.msra.mxu0 0
    %1379 = vmatprep.subr.bf16.mxu0 0
    %1380 = vmatpush1.bf16.msra.mxu0 0
    %1381 = vmatprep.subr.bf16.mxu0 0
    %1382 = vmatpush1.bf16.msra.mxu0 0
    %1383 = vmatprep.subr.bf16.mxu0 0
    %1384 = vmatpush1.bf16.msra.mxu0 %v1366
    %1385 = vmatprep.subr.bf16.mxu0 0
    %1386 = vmatpush1.bf16.msra.mxu0 %v1365
    %1387 = vmatprep.subr.bf16.mxu0 0
    %1388 = vmatpush1.bf16.msra.mxu0 %v1364
    %1389 = vmatprep.subr.bf16.mxu0 0
    %1390 = vmatpush1.bf16.msra.mxu0 %v1363
    %1391 = vmatprep.subr.bf16.mxu0 0
    %1392 = vmatpush2.bf16.msra.mxu0 0
    %1393 = vmatprep.subr.bf16.mxu0 0
    %1394 = vmatpush2.bf16.msra.mxu0 0
    %1395 = vmatprep.subr.bf16.mxu0 0
    %1396 = vmatpush2.bf16.msra.mxu0 0
    %1397 = vmatprep.subr.bf16.mxu0 0
    %1398 = vmatpush2.bf16.msra.mxu0 0
    %1399 = vmatprep.subr.bf16.mxu0 0
    %1400 = vmatpush2.bf16.msra.mxu0 0
    %1401 = vmatprep.subr.bf16.mxu0 0
    %1402 = vmatpush2.bf16.msra.mxu0 0
    %1403 = vmatprep.subr.bf16.mxu0 0
    %1404 = vmatpush2.bf16.msra.mxu0 0
    %1405 = vmatprep.subr.bf16.mxu0 0
    %1406 = vmatpush2.bf16.msra.mxu0 0
    %1407 = vmatprep.mubr.bf16.mxu0 0
    %1408 = vmatmul.mubr.bf16.gmra.mxu0 %v1373
    %v1409 = vpop.f32.mrf.mxu0
    %v1410 = vadd.f32 %v1345, %v1409
    %v1411 = vpop.f32.mrf.mxu0
    %v1412 = vpop.f32.mrf.mxu0
    %v1413 = vadd.f32 %v1345, %v1412
    %v1414 = vpop.f32.mrf.mxu0
    %1415 = vdwg.mxu0
    %v1416 = vadd.f32 %v1259, %v1410
    %v1417 = vadd.f32 %v1260, %v1413
    %v1418 = vld [vmem:[#allocation13] sm:$0x1]
    %v1419 = vld [vmem:[%s13] sm:$0x1]
    %v1420 = vsel %vm185, %v1416, 0.0
    %1421 = vadd.xlane.f32.xlu0 %v1420
    %v1422 = vpop.xlane.xlu0 %1421
    %v1423 = vsel %vm185, %v1417, 0.0
    %1424 = vadd.xlane.f32.xlu0 %v1423
    %v1425 = vpop.xlane.xlu0 %1424
    %v1426 = vmul.f32 %v1422, %v1224
    %v1427 = vmul.f32 %v1425, %v1224
    %v1428 = vsub.f32 %v1416, %v1426
    %v1429 = vsub.f32 %v1417, %v1427
    %v1430 = vmul.f32 %v1428, %v1428
    %v1431 = vmul.f32 %v1429, %v1429
    %v1432 = vsel %vm185, %v1430, 0.0
    %1433 = vadd.xlane.f32.xlu0 %v1432
    %v1434 = vpop.xlane.xlu0 %1433
    %v1435 = vsel %vm185, %v1431, 0.0
    %1436 = vadd.xlane.f32.xlu0 %v1435
    %v1437 = vpop.xlane.xlu0 %1436
    %v1438 = vmul.f32 %v1434, %v1224
    %v1439 = vmul.f32 %v1437, %v1224
    %v1440 = vadd.f32 %v1438, 1e-05
    %v1441 = vadd.f32 %v1439, 1e-05
    %v1442 = vrsqrt.pop %v1440
    %v1443 = vrsqrt.pop %v1441
    %v1444 = vmul.f32 %v1428, %v1442
    %v1445 = vmul.f32 %v1429, %v1443
    %v1447 = vlaneseq
    %v1448 = vshrl.u32 %v1447, 7
    %v1449 = vsub.s32 0, %v1448
    %v1450 = vrot.slane %v1418, %v1449
    %v1452 = vmul.f32 %v1444, %v1450
    %v1453 = vmul.f32 %v1445, %v1450
    %v1455 = vlaneseq
    %v1456 = vshrl.u32 %v1455, 7
    %v1457 = vsub.s32 0, %v1456
    %v1458 = vrot.slane %v1419, %v1457
    %v1460 = vadd.f32 %v1452, %v1458
    %v1461 = vadd.f32 %v1453, %v1458
    %v1462 = vpack.c.bf16 %v1461, %v1460
    %s1463 = scalar_lea.vmem %s2, 16
    %v1464 = vld [vmem:[%s1463] sm:$0xf]
    %v1465 = vld [vmem:[%s1463 + $0x4] sm:$0xf]
    %v1466 = vld [vmem:[%s1463 + $0x8] sm:$0xf]
    %v1467 = vld [vmem:[%s1463 + $0xc] sm:$0xf]
    %s1468 = scalar_lea.vmem [#allocation7], 1
    %v1469 = vld [vmem:[%s1468] sm:$0x1]
    %v1471 = vlaneseq
    %v1472 = vshrl.u32 %v1471, 7
    %v1473 = vsub.s32 0, %v1472
    %v1474 = vrot.slane %v1469, %v1473
    %v1480 = vunpack.c.l.b16 %v1464
    %v1481 = vunpack.c.l.b16 %v1465
    %v1482 = vunpack.c.l.b16 %v1466
    %v1483 = vunpack.c.l.b16 %v1467
    %v1484 = vpack.c.b16 %v1481, %v1480
    %v1485 = vpack.c.b16 %v1483, %v1482
    %v1489 = vsel %vm185, %v1462, 0
    %1491 = vmatprep.subr.bf16.mxu0 0
    %1492 = vmatpush1.bf16.msra.mxu0 0
    %1493 = vmatprep.subr.bf16.mxu0 0
    %1494 = vmatpush1.bf16.msra.mxu0 0
    %1495 = vmatprep.subr.bf16.mxu0 0
    %1496 = vmatpush1.bf16.msra.mxu0 0
    %1497 = vmatprep.subr.bf16.mxu0 0
    %1498 = vmatpush1.bf16.msra.mxu0 0
    %1499 = vmatprep.subr.bf16.mxu0 0
    %1500 = vmatpush1.bf16.msra.mxu0 0
    %1501 = vmatprep.subr.bf16.mxu0 0
    %1502 = vmatpush1.bf16.msra.mxu0 0
    %1503 = vmatprep.subr.bf16.mxu0 0
    %1504 = vmatpush1.bf16.msra.mxu0 %v1485
    %1505 = vmatprep.subr.bf16.mxu0 0
    %1506 = vmatpush1.bf16.msra.mxu0 %v1484
    %1507 = vmatprep.subr.bf16.mxu0 0
    %1508 = vmatpush2.bf16.msra.mxu0 0
    %1509 = vmatprep.subr.bf16.mxu0 0
    %1510 = vmatpush2.bf16.msra.mxu0 0
    %1511 = vmatprep.subr.bf16.mxu0 0
    %1512 = vmatpush2.bf16.msra.mxu0 0
    %1513 = vmatprep.subr.bf16.mxu0 0
    %1514 = vmatpush2.bf16.msra.mxu0 0
    %1515 = vmatprep.subr.bf16.mxu0 0
    %1516 = vmatpush2.bf16.msra.mxu0 0
    %1517 = vmatprep.subr.bf16.mxu0 0
    %1518 = vmatpush2.bf16.msra.mxu0 0
    %1519 = vmatprep.subr.bf16.mxu0 0
    %1520 = vmatpush2.bf16.msra.mxu0 0
    %1521 = vmatprep.subr.bf16.mxu0 0
    %1522 = vmatpush2.bf16.msra.mxu0 0
    %1523 = vmatprep.mubr.bf16.mxu0 0
    %1524 = vmatmul.mubr.bf16.gmra.mxu0 %v1489
    %v1525 = vpop.f32.mrf.mxu0
    %v1526 = vadd.f32 %v1474, %v1525
    %v1527 = vpop.f32.mrf.mxu0
    %v1528 = vpop.f32.mrf.mxu0
    %v1529 = vadd.f32 %v1474, %v1528
    %v1530 = vpop.f32.mrf.mxu0
    %1531 = vdwg.mxu0
    %v1532 = vpack.c.bf16 %v1529, %v1526
    %v1534 = vunpack.c.l.b16 %v1532
    %v1535 = vunpack.c.h.b16 %v1532
    %v1536 = vpack.c.b16 %v1534, %v1534
    %v1537 = vpack.c.b16 %v1535, %v1535
    %1538 = vrot.lane.b32.xlu0 %v1536, 96
    %v1539 = vpop.permute.xlu0 %1538
    %v1541 = vsel %vm238, %v1536, 0
    %v1544 = vsel %vm238, %v1539, 0
    %1546 = vmatprep.subr.bf16.mxu0 0
    %1547 = vmatpush1.bf16.xpose.msra.mxu0 0
    %1548 = vmatprep.subr.bf16.mxu0 0
    %1549 = vmatpush1.bf16.xpose.msra.mxu0 0
    %1550 = vmatprep.subr.bf16.mxu0 0
    %1551 = vmatpush1.bf16.xpose.msra.mxu0 0
    %1552 = vmatprep.subr.bf16.mxu0 0
    %1553 = vmatpush1.bf16.xpose.msra.mxu0 0
    %1554 = vmatprep.subr.bf16.mxu0 0
    %1555 = vmatpush1.bf16.xpose.msra.mxu0 0
    %1556 = vmatprep.subr.bf16.mxu0 0
    %1557 = vmatpush1.bf16.xpose.msra.mxu0 0
    %1558 = vmatprep.subr.bf16.mxu0 0
    %1559 = vmatpush1.bf16.xpose.msra.mxu0 0
    %1560 = vmatprep.subr.bf16.mxu0 0
    %1561 = vmatpush1.bf16.xpose.msra.mxu0 %v1544
    %1562 = vmatprep.subr.bf16.mxu0 0
    %1563 = vmatpush2.bf16.xpose.msra.mxu0 0
    %1564 = vmatprep.subr.bf16.mxu0 0
    %1565 = vmatpush2.bf16.xpose.msra.mxu0 0
    %1566 = vmatprep.subr.bf16.mxu0 0
    %1567 = vmatpush2.bf16.xpose.msra.mxu0 0
    %1568 = vmatprep.subr.bf16.mxu0 0
    %1569 = vmatpush2.bf16.xpose.msra.mxu0 0
    %1570 = vmatprep.subr.bf16.mxu0 0
    %1571 = vmatpush2.bf16.xpose.msra.mxu0 0
    %1572 = vmatprep.subr.bf16.mxu0 0
    %1573 = vmatpush2.bf16.xpose.msra.mxu0 0
    %1574 = vmatprep.subr.bf16.mxu0 0
    %1575 = vmatpush2.bf16.xpose.msra.mxu0 0
    %1576 = vmatprep.subr.bf16.mxu0 0
    %1577 = vmatpush2.bf16.xpose.msra.mxu0 0
    %1578 = vmatprep.mubr.bf16.mxu0 0
    %1579 = vmatmul.mubr.bf16.gmra.mxu0 %v1541
    %v1580 = vpop.f32.mrf.mxu0
    %v1581 = vadd.f32 %v160, %v1580
    %v1582 = vpop.f32.mrf.mxu0
    %v1583 = vpop.f32.mrf.mxu0
    %v1584 = vpop.f32.mrf.mxu0
    %1585 = vdwg.mxu0
    %1586 = vrot.lane.b32.xlu0 %v1537, 96
    %v1587 = vpop.permute.xlu0 %1586
    %v1589 = vsel %vm238, %v1537, 0
    %v1592 = vsel %vm238, %v1587, 0
    %1594 = vmatprep.subr.bf16.mxu0 0
    %1595 = vmatpush1.bf16.xpose.msra.mxu0 0
    %1596 = vmatprep.subr.bf16.mxu0 0
    %1597 = vmatpush1.bf16.xpose.msra.mxu0 0
    %1598 = vmatprep.subr.bf16.mxu0 0
    %1599 = vmatpush1.bf16.xpose.msra.mxu0 0
    %1600 = vmatprep.subr.bf16.mxu0 0
    %1601 = vmatpush1.bf16.xpose.msra.mxu0 0
    %1602 = vmatprep.subr.bf16.mxu0 0
    %1603 = vmatpush1.bf16.xpose.msra.mxu0 0
    %1604 = vmatprep.subr.bf16.mxu0 0
    %1605 = vmatpush1.bf16.xpose.msra.mxu0 0
    %1606 = vmatprep.subr.bf16.mxu0 0
    %1607 = vmatpush1.bf16.xpose.msra.mxu0 0
    %1608 = vmatprep.subr.bf16.mxu0 0
    %1609 = vmatpush1.bf16.xpose.msra.mxu0 %v1592
    %1610 = vmatprep.subr.bf16.mxu0 0
    %1611 = vmatpush2.bf16.xpose.msra.mxu0 0
    %1612 = vmatprep.subr.bf16.mxu0 0
    %1613 = vmatpush2.bf16.xpose.msra.mxu0 0
    %1614 = vmatprep.subr.bf16.mxu0 0
    %1615 = vmatpush2.bf16.xpose.msra.mxu0 0
    %1616 = vmatprep.subr.bf16.mxu0 0
    %1617 = vmatpush2.bf16.xpose.msra.mxu0 0
    %1618 = vmatprep.subr.bf16.mxu0 0
    %1619 = vmatpush2.bf16.xpose.msra.mxu0 0
    %1620 = vmatprep.subr.bf16.mxu0 0
    %1621 = vmatpush2.bf16.xpose.msra.mxu0 0
    %1622 = vmatprep.subr.bf16.mxu0 0
    %1623 = vmatpush2.bf16.xpose.msra.mxu0 0
    %1624 = vmatprep.subr.bf16.mxu0 0
    %1625 = vmatpush2.bf16.xpose.msra.mxu0 0
    %1626 = vmatprep.mubr.bf16.mxu0 0
    %1627 = vmatmul.mubr.bf16.gmra.mxu0 %v1589
    %v1628 = vpop.f32.mrf.mxu0
    %v1629 = vadd.f32 %v160, %v1628
    %v1630 = vpop.f32.mrf.mxu0
    %v1631 = vpop.f32.mrf.mxu0
    %v1632 = vpop.f32.mrf.mxu0
    %1633 = vdwg.mxu0
    %v1634 = vsel %vm238, %v1581, -inf
    %1635 = vmax.xlane.f32.xlu0 %v1634
    %v1636 = vpop.xlane.xlu0 %1635
    %v1637 = vsel %vm238, %v1629, -inf
    %1638 = vmax.xlane.f32.xlu0 %v1637
    %v1639 = vpop.xlane.xlu0 %1638
    %v1640 = vsub.f32 %v1581, %v1636
    %v1641 = vsub.f32 %v1629, %v1639
    %v1642 = vmul.f32 %v1640, 1.442695
    %v1643 = vpow.pop %v1642
    %v1644 = vmul.f32 %v1641, 1.442695
    %v1645 = vpow.pop %v1644
    %v1646 = vsel %vm238, %v1643, 0.0
    %1647 = vadd.xlane.f32.xlu0 %v1646
    %v1648 = vpop.xlane.xlu0 %1647
    %v1649 = vsel %vm238, %v1645, 0.0
    %1650 = vadd.xlane.f32.xlu0 %v1649
    %v1651 = vpop.xlane.xlu0 %1650
    %v1652 = vrcp.pop %v1648
    %v1653 = vrcp.pop %v1651
    %v1654 = vmul.f32 %v1643, %v1652
    %v1655 = vmul.f32 %v1645, %v1653
    %v1656 = vpack.c.bf16 %v1654, %v1654
    %v1657 = vpack.c.bf16 %v1655, %v1655
    %1658 = vrot.lane.b32.xlu0 %v1536, 64
    %v1659 = vpop.permute.xlu0 %1658
    %v1661 = vsel %vm238, %v1656, 0
    %v1664 = vsel %vm362, %v1659, 0
    %1666 = vmatprep.subr.bf16.mxu0 0
    %1667 = vmatpush1.bf16.msra.mxu0 0
    %1668 = vmatprep.subr.bf16.mxu0 0
    %1669 = vmatpush1.bf16.msra.mxu0 0
    %1670 = vmatprep.subr.bf16.mxu0 0
    %1671 = vmatpush1.bf16.msra.mxu0 0
    %1672 = vmatprep.subr.bf16.mxu0 0
    %1673 = vmatpush1.bf16.msra.mxu0 0
    %1674 = vmatprep.subr.bf16.mxu0 0
    %1675 = vmatpush1.bf16.msra.mxu0 0
    %1676 = vmatprep.subr.bf16.mxu0 0
    %1677 = vmatpush1.bf16.msra.mxu0 0
    %1678 = vmatprep.subr.bf16.mxu0 0
    %1679 = vmatpush1.bf16.msra.mxu0 0
    %1680 = vmatprep.subr.bf16.mxu0 0
    %1681 = vmatpush1.bf16.msra.mxu0 %v1664
    %1682 = vmatprep.subr.bf16.mxu0 0
    %1683 = vmatpush2.bf16.msra.mxu0 0
    %1684 = vmatprep.subr.bf16.mxu0 0
    %1685 = vmatpush2.bf16.msra.mxu0 0
    %1686 = vmatprep.subr.bf16.mxu0 0
    %1687 = vmatpush2.bf16.msra.mxu0 0
    %1688 = vmatprep.subr.bf16.mxu0 0
    %1689 = vmatpush2.bf16.msra.mxu0 0
    %1690 = vmatprep.subr.bf16.mxu0 0
    %1691 = vmatpush2.bf16.msra.mxu0 0
    %1692 = vmatprep.subr.bf16.mxu0 0
    %1693 = vmatpush2.bf16.msra.mxu0 0
    %1694 = vmatprep.subr.bf16.mxu0 0
    %1695 = vmatpush2.bf16.msra.mxu0 0
    %1696 = vmatprep.subr.bf16.mxu0 0
    %1697 = vmatpush2.bf16.msra.mxu0 0
    %1698 = vmatprep.mubr.bf16.mxu0 0
    %1699 = vmatmul.mubr.bf16.gmra.mxu0 %v1661
    %v1700 = vpop.f32.mrf.mxu0
    %v1701 = vadd.f32 0.0, %v1700
    %v1702 = vpop.f32.mrf.mxu0
    %v1703 = vpop.f32.mrf.mxu0
    %v1704 = vpop.f32.mrf.mxu0
    %1705 = vdwg.mxu0
    %1706 = vrot.lane.b32.xlu0 %v1537, 64
    %v1707 = vpop.permute.xlu0 %1706
    %v1709 = vsel %vm238, %v1657, 0
    %v1712 = vsel %vm362, %v1707, 0
    %1714 = vmatprep.subr.bf16.mxu0 0
    %1715 = vmatpush1.bf16.msra.mxu0 0
    %1716 = vmatprep.subr.bf16.mxu0 0
    %1717 = vmatpush1.bf16.msra.mxu0 0
    %1718 = vmatprep.subr.bf16.mxu0 0
    %1719 = vmatpush1.bf16.msra.mxu0 0
    %1720 = vmatprep.subr.bf16.mxu0 0
    %1721 = vmatpush1.bf16.msra.mxu0 0
    %1722 = vmatprep.subr.bf16.mxu0 0
    %1723 = vmatpush1.bf16.msra.mxu0 0
    %1724 = vmatprep.subr.bf16.mxu0 0
    %1725 = vmatpush1.bf16.msra.mxu0 0
    %1726 = vmatprep.subr.bf16.mxu0 0
    %1727 = vmatpush1.bf16.msra.mxu0 0
    %1728 = vmatprep.subr.bf16.mxu0 0
    %1729 = vmatpush1.bf16.msra.mxu0 %v1712
    %1730 = vmatprep.subr.bf16.mxu0 0
    %1731 = vmatpush2.bf16.msra.mxu0 0
    %1732 = vmatprep.subr.bf16.mxu0 0
    %1733 = vmatpush2.bf16.msra.mxu0 0
    %1734 = vmatprep.subr.bf16.mxu0 0
    %1735 = vmatpush2.bf16.msra.mxu0 0
    %1736 = vmatprep.subr.bf16.mxu0 0
    %1737 = vmatpush2.bf16.msra.mxu0 0
    %1738 = vmatprep.subr.bf16.mxu0 0
    %1739 = vmatpush2.bf16.msra.mxu0 0
    %1740 = vmatprep.subr.bf16.mxu0 0
    %1741 = vmatpush2.bf16.msra.mxu0 0
    %1742 = vmatprep.subr.bf16.mxu0 0
    %1743 = vmatpush2.bf16.msra.mxu0 0
    %1744 = vmatprep.subr.bf16.mxu0 0
    %1745 = vmatpush2.bf16.msra.mxu0 0
    %1746 = vmatprep.mubr.bf16.mxu0 0
    %1747 = vmatmul.mubr.bf16.gmra.mxu0 %v1709
    %v1748 = vpop.f32.mrf.mxu0
    %v1749 = vadd.f32 0.0, %v1748
    %v1750 = vpop.f32.mrf.mxu0
    %v1751 = vpop.f32.mrf.mxu0
    %v1752 = vpop.f32.mrf.mxu0
    %1753 = vdwg.mxu0
    %1754 = vrot.lane.b32.xlu0 %v1536, 120
    %v1755 = vpop.permute.xlu0 %1754
    %1756 = vrot.lane.b32.xlu0 %v1536, 88
    %v1757 = vpop.permute.xlu0 %1756
    %v1759 = vsel %vm238, %v1755, 0
    %v1762 = vsel %vm238, %v1757, 0
    %1764 = vmatprep.subr.bf16.mxu0 0
    %1765 = vmatpush1.bf16.xpose.msra.mxu0 0
    %1766 = vmatprep.subr.bf16.mxu0 0
    %1767 = vmatpush1.bf16.xpose.msra.mxu0 0
    %1768 = vmatprep.subr.bf16.mxu0 0
    %1769 = vmatpush1.bf16.xpose.msra.mxu0 0
    %1770 = vmatprep.subr.bf16.mxu0 0
    %1771 = vmatpush1.bf16.xpose.msra.mxu0 0
    %1772 = vmatprep.subr.bf16.mxu0 0
    %1773 = vmatpush1.bf16.xpose.msra.mxu0 0
    %1774 = vmatprep.subr.bf16.mxu0 0
    %1775 = vmatpush1.bf16.xpose.msra.mxu0 0
    %1776 = vmatprep.subr.bf16.mxu0 0
    %1777 = vmatpush1.bf16.xpose.msra.mxu0 0
    %1778 = vmatprep.subr.bf16.mxu0 0
    %1779 = vmatpush1.bf16.xpose.msra.mxu0 %v1762
    %1780 = vmatprep.subr.bf16.mxu0 0
    %1781 = vmatpush2.bf16.xpose.msra.mxu0 0
    %1782 = vmatprep.subr.bf16.mxu0 0
    %1783 = vmatpush2.bf16.xpose.msra.mxu0 0
    %1784 = vmatprep.subr.bf16.mxu0 0
    %1785 = vmatpush2.bf16.xpose.msra.mxu0 0
    %1786 = vmatprep.subr.bf16.mxu0 0
    %1787 = vmatpush2.bf16.xpose.msra.mxu0 0
    %1788 = vmatprep.subr.bf16.mxu0 0
    %1789 = vmatpush2.bf16.xpose.msra.mxu0 0
    %1790 = vmatprep.subr.bf16.mxu0 0
    %1791 = vmatpush2.bf16.xpose.msra.mxu0 0
    %1792 = vmatprep.subr.bf16.mxu0 0
    %1793 = vmatpush2.bf16.xpose.msra.mxu0 0
    %1794 = vmatprep.subr.bf16.mxu0 0
    %1795 = vmatpush2.bf16.xpose.msra.mxu0 0
    %1796 = vmatprep.mubr.bf16.mxu0 0
    %1797 = vmatmul.mubr.bf16.gmra.mxu0 %v1759
    %v1798 = vpop.f32.mrf.mxu0
    %v1799 = vadd.f32 %v160, %v1798
    %v1800 = vpop.f32.mrf.mxu0
    %v1801 = vpop.f32.mrf.mxu0
    %v1802 = vpop.f32.mrf.mxu0
    %1803 = vdwg.mxu0
    %1804 = vrot.lane.b32.xlu0 %v1537, 120
    %v1805 = vpop.permute.xlu0 %1804
    %1806 = vrot.lane.b32.xlu0 %v1537, 88
    %v1807 = vpop.permute.xlu0 %1806
    %v1809 = vsel %vm238, %v1805, 0
    %v1812 = vsel %vm238, %v1807, 0
    %1814 = vmatprep.subr.bf16.mxu0 0
    %1815 = vmatpush1.bf16.xpose.msra.mxu0 0
    %1816 = vmatprep.subr.bf16.mxu0 0
    %1817 = vmatpush1.bf16.xpose.msra.mxu0 0
    %1818 = vmatprep.subr.bf16.mxu0 0
    %1819 = vmatpush1.bf16.xpose.msra.mxu0 0
    %1820 = vmatprep.subr.bf16.mxu0 0
    %1821 = vmatpush1.bf16.xpose.msra.mxu0 0
    %1822 = vmatprep.subr.bf16.mxu0 0
    %1823 = vmatpush1.bf16.xpose.msra.mxu0 0
    %1824 = vmatprep.subr.bf16.mxu0 0
    %1825 = vmatpush1.bf16.xpose.msra.mxu0 0
    %1826 = vmatprep.subr.bf16.mxu0 0
    %1827 = vmatpush1.bf16.xpose.msra.mxu0 0
    %1828 = vmatprep.subr.bf16.mxu0 0
    %1829 = vmatpush1.bf16.xpose.msra.mxu0 %v1812
    %1830 = vmatprep.subr.bf16.mxu0 0
    %1831 = vmatpush2.bf16.xpose.msra.mxu0 0
    %1832 = vmatprep.subr.bf16.mxu0 0
    %1833 = vmatpush2.bf16.xpose.msra.mxu0 0
    %1834 = vmatprep.subr.bf16.mxu0 0
    %1835 = vmatpush2.bf16.xpose.msra.mxu0 0
    %1836 = vmatprep.subr.bf16.mxu0 0
    %1837 = vmatpush2.bf16.xpose.msra.mxu0 0
    %1838 = vmatprep.subr.bf16.mxu0 0
    %1839 = vmatpush2.bf16.xpose.msra.mxu0 0
    %1840 = vmatprep.subr.bf16.mxu0 0
    %1841 = vmatpush2.bf16.xpose.msra.mxu0 0
    %1842 = vmatprep.subr.bf16.mxu0 0
    %1843 = vmatpush2.bf16.xpose.msra.mxu0 0
    %1844 = vmatprep.subr.bf16.mxu0 0
    %1845 = vmatpush2.bf16.xpose.msra.mxu0 0
    %1846 = vmatprep.mubr.bf16.mxu0 0
    %1847 = vmatmul.mubr.bf16.gmra.mxu0 %v1809
    %v1848 = vpop.f32.mrf.mxu0
    %v1849 = vadd.f32 %v160, %v1848
    %v1850 = vpop.f32.mrf.mxu0
    %v1851 = vpop.f32.mrf.mxu0
    %v1852 = vpop.f32.mrf.mxu0
    %1853 = vdwg.mxu0
    %v1854 = vsel %vm238, %v1799, -inf
    %1855 = vmax.xlane.f32.xlu0 %v1854
    %v1856 = vpop.xlane.xlu0 %1855
    %v1857 = vsel %vm238, %v1849, -inf
    %1858 = vmax.xlane.f32.xlu0 %v1857
    %v1859 = vpop.xlane.xlu0 %1858
    %v1860 = vsub.f32 %v1799, %v1856
    %v1861 = vsub.f32 %v1849, %v1859
    %v1862 = vmul.f32 %v1860, 1.442695
    %v1863 = vpow.pop %v1862
    %v1864 = vmul.f32 %v1861, 1.442695
    %v1865 = vpow.pop %v1864
    %v1866 = vsel %vm238, %v1863, 0.0
    %1867 = vadd.xlane.f32.xlu0 %v1866
    %v1868 = vpop.xlane.xlu0 %1867
    %v1869 = vsel %vm238, %v1865, 0.0
    %1870 = vadd.xlane.f32.xlu0 %v1869
    %v1871 = vpop.xlane.xlu0 %1870
    %v1872 = vrcp.pop %v1868
    %v1873 = vrcp.pop %v1871
    %v1874 = vmul.f32 %v1863, %v1872
    %v1875 = vmul.f32 %v1865, %v1873
    %v1876 = vpack.c.bf16 %v1874, %v1874
    %v1877 = vpack.c.bf16 %v1875, %v1875
    %1878 = vrot.lane.b32.xlu0 %v1536, 56
    %v1879 = vpop.permute.xlu0 %1878
    %v1881 = vsel %vm238, %v1876, 0
    %v1884 = vsel %vm362, %v1879, 0
    %1886 = vmatprep.subr.bf16.mxu0 0
    %1887 = vmatpush1.bf16.msra.mxu0 0
    %1888 = vmatprep.subr.bf16.mxu0 0
    %1889 = vmatpush1.bf16.msra.mxu0 0
    %1890 = vmatprep.subr.bf16.mxu0 0
    %1891 = vmatpush1.bf16.msra.mxu0 0
    %1892 = vmatprep.subr.bf16.mxu0 0
    %1893 = vmatpush1.bf16.msra.mxu0 0
    %1894 = vmatprep.subr.bf16.mxu0 0
    %1895 = vmatpush1.bf16.msra.mxu0 0
    %1896 = vmatprep.subr.bf16.mxu0 0
    %1897 = vmatpush1.bf16.msra.mxu0 0
    %1898 = vmatprep.subr.bf16.mxu0 0
    %1899 = vmatpush1.bf16.msra.mxu0 0
    %1900 = vmatprep.subr.bf16.mxu0 0
    %1901 = vmatpush1.bf16.msra.mxu0 %v1884
    %1902 = vmatprep.subr.bf16.mxu0 0
    %1903 = vmatpush2.bf16.msra.mxu0 0
    %1904 = vmatprep.subr.bf16.mxu0 0
    %1905 = vmatpush2.bf16.msra.mxu0 0
    %1906 = vmatprep.subr.bf16.mxu0 0
    %1907 = vmatpush2.bf16.msra.mxu0 0
    %1908 = vmatprep.subr.bf16.mxu0 0
    %1909 = vmatpush2.bf16.msra.mxu0 0
    %1910 = vmatprep.subr.bf16.mxu0 0
    %1911 = vmatpush2.bf16.msra.mxu0 0
    %1912 = vmatprep.subr.bf16.mxu0 0
    %1913 = vmatpush2.bf16.msra.mxu0 0
    %1914 = vmatprep.subr.bf16.mxu0 0
    %1915 = vmatpush2.bf16.msra.mxu0 0
    %1916 = vmatprep.subr.bf16.mxu0 0
    %1917 = vmatpush2.bf16.msra.mxu0 0
    %1918 = vmatprep.mubr.bf16.mxu0 0
    %1919 = vmatmul.mubr.bf16.gmra.mxu0 %v1881
    %v1920 = vpop.f32.mrf.mxu0
    %v1921 = vadd.f32 0.0, %v1920
    %v1922 = vpop.f32.mrf.mxu0
    %v1923 = vpop.f32.mrf.mxu0
    %v1924 = vpop.f32.mrf.mxu0
    %1925 = vdwg.mxu0
    %1926 = vrot.lane.b32.xlu0 %v1537, 56
    %v1927 = vpop.permute.xlu0 %1926
    %v1929 = vsel %vm238, %v1877, 0
    %v1932 = vsel %vm362, %v1927, 0
    %1934 = vmatprep.subr.bf16.mxu0 0
    %1935 = vmatpush1.bf16.msra.mxu0 0
    %1936 = vmatprep.subr.bf16.mxu0 0
    %1937 = vmatpush1.bf16.msra.mxu0 0
    %1938 = vmatprep.subr.bf16.mxu0 0
    %1939 = vmatpush1.bf16.msra.mxu0 0
    %1940 = vmatprep.subr.bf16.mxu0 0
    %1941 = vmatpush1.bf16.msra.mxu0 0
    %1942 = vmatprep.subr.bf16.mxu0 0
    %1943 = vmatpush1.bf16.msra.mxu0 0
    %1944 = vmatprep.subr.bf16.mxu0 0
    %1945 = vmatpush1.bf16.msra.mxu0 0
    %1946 = vmatprep.subr.bf16.mxu0 0
    %1947 = vmatpush1.bf16.msra.mxu0 0
    %1948 = vmatprep.subr.bf16.mxu0 0
    %1949 = vmatpush1.bf16.msra.mxu0 %v1932
    %1950 = vmatprep.subr.bf16.mxu0 0
    %1951 = vmatpush2.bf16.msra.mxu0 0
    %1952 = vmatprep.subr.bf16.mxu0 0
    %1953 = vmatpush2.bf16.msra.mxu0 0
    %1954 = vmatprep.subr.bf16.mxu0 0
    %1955 = vmatpush2.bf16.msra.mxu0 0
    %1956 = vmatprep.subr.bf16.mxu0 0
    %1957 = vmatpush2.bf16.msra.mxu0 0
    %1958 = vmatprep.subr.bf16.mxu0 0
    %1959 = vmatpush2.bf16.msra.mxu0 0
    %1960 = vmatprep.subr.bf16.mxu0 0
    %1961 = vmatpush2.bf16.msra.mxu0 0
    %1962 = vmatprep.subr.bf16.mxu0 0
    %1963 = vmatpush2.bf16.msra.mxu0 0
    %1964 = vmatprep.subr.bf16.mxu0 0
    %1965 = vmatpush2.bf16.msra.mxu0 0
    %1966 = vmatprep.mubr.bf16.mxu0 0
    %1967 = vmatmul.mubr.bf16.gmra.mxu0 %v1929
    %v1968 = vpop.f32.mrf.mxu0
    %v1969 = vadd.f32 0.0, %v1968
    %v1970 = vpop.f32.mrf.mxu0
    %v1971 = vpop.f32.mrf.mxu0
    %v1972 = vpop.f32.mrf.mxu0
    %1973 = vdwg.mxu0
    %1974 = vrot.lane.b32.xlu0 %v1536, 112
    %v1975 = vpop.permute.xlu0 %1974
    %1976 = vrot.lane.b32.xlu0 %v1536, 80
    %v1977 = vpop.permute.xlu0 %1976
    %v1979 = vsel %vm238, %v1975, 0
    %v1982 = vsel %vm238, %v1977, 0
    %1984 = vmatprep.subr.bf16.mxu0 0
    %1985 = vmatpush1.bf16.xpose.msra.mxu0 0
    %1986 = vmatprep.subr.bf16.mxu0 0
    %1987 = vmatpush1.bf16.xpose.msra.mxu0 0
    %1988 = vmatprep.subr.bf16.mxu0 0
    %1989 = vmatpush1.bf16.xpose.msra.mxu0 0
    %1990 = vmatprep.subr.bf16.mxu0 0
    %1991 = vmatpush1.bf16.xpose.msra.mxu0 0
    %1992 = vmatprep.subr.bf16.mxu0 0
    %1993 = vmatpush1.bf16.xpose.msra.mxu0 0
    %1994 = vmatprep.subr.bf16.mxu0 0
    %1995 = vmatpush1.bf16.xpose.msra.mxu0 0
    %1996 = vmatprep.subr.bf16.mxu0 0
    %1997 = vmatpush1.bf16.xpose.msra.mxu0 0
    %1998 = vmatprep.subr.bf16.mxu0 0
    %1999 = vmatpush1.bf16.xpose.msra.mxu0 %v1982
    %2000 = vmatprep.subr.bf16.mxu0 0
    %2001 = vmatpush2.bf16.xpose.msra.mxu0 0
    %2002 = vmatprep.subr.bf16.mxu0 0
    %2003 = vmatpush2.bf16.xpose.msra.mxu0 0
    %2004 = vmatprep.subr.bf16.mxu0 0
    %2005 = vmatpush2.bf16.xpose.msra.mxu0 0
    %2006 = vmatprep.subr.bf16.mxu0 0
    %2007 = vmatpush2.bf16.xpose.msra.mxu0 0
    %2008 = vmatprep.subr.bf16.mxu0 0
    %2009 = vmatpush2.bf16.xpose.msra.mxu0 0
    %2010 = vmatprep.subr.bf16.mxu0 0
    %2011 = vmatpush2.bf16.xpose.msra.mxu0 0
    %2012 = vmatprep.subr.bf16.mxu0 0
    %2013 = vmatpush2.bf16.xpose.msra.mxu0 0
    %2014 = vmatprep.subr.bf16.mxu0 0
    %2015 = vmatpush2.bf16.xpose.msra.mxu0 0
    %2016 = vmatprep.mubr.bf16.mxu0 0
    %2017 = vmatmul.mubr.bf16.gmra.mxu0 %v1979
    %v2018 = vpop.f32.mrf.mxu0
    %v2019 = vadd.f32 %v160, %v2018
    %v2020 = vpop.f32.mrf.mxu0
    %v2021 = vpop.f32.mrf.mxu0
    %v2022 = vpop.f32.mrf.mxu0
    %2023 = vdwg.mxu0
    %2024 = vrot.lane.b32.xlu0 %v1537, 112
    %v2025 = vpop.permute.xlu0 %2024
    %2026 = vrot.lane.b32.xlu0 %v1537, 80
    %v2027 = vpop.permute.xlu0 %2026
    %v2029 = vsel %vm238, %v2025, 0
    %v2032 = vsel %vm238, %v2027, 0
    %2034 = vmatprep.subr.bf16.mxu0 0
    %2035 = vmatpush1.bf16.xpose.msra.mxu0 0
    %2036 = vmatprep.subr.bf16.mxu0 0
    %2037 = vmatpush1.bf16.xpose.msra.mxu0 0
    %2038 = vmatprep.subr.bf16.mxu0 0
    %2039 = vmatpush1.bf16.xpose.msra.mxu0 0
    %2040 = vmatprep.subr.bf16.mxu0 0
    %2041 = vmatpush1.bf16.xpose.msra.mxu0 0
    %2042 = vmatprep.subr.bf16.mxu0 0
    %2043 = vmatpush1.bf16.xpose.msra.mxu0 0
    %2044 = vmatprep.subr.bf16.mxu0 0
    %2045 = vmatpush1.bf16.xpose.msra.mxu0 0
    %2046 = vmatprep.subr.bf16.mxu0 0
    %2047 = vmatpush1.bf16.xpose.msra.mxu0 0
    %2048 = vmatprep.subr.bf16.mxu0 0
    %2049 = vmatpush1.bf16.xpose.msra.mxu0 %v2032
    %2050 = vmatprep.subr.bf16.mxu0 0
    %2051 = vmatpush2.bf16.xpose.msra.mxu0 0
    %2052 = vmatprep.subr.bf16.mxu0 0
    %2053 = vmatpush2.bf16.xpose.msra.mxu0 0
    %2054 = vmatprep.subr.bf16.mxu0 0
    %2055 = vmatpush2.bf16.xpose.msra.mxu0 0
    %2056 = vmatprep.subr.bf16.mxu0 0
    %2057 = vmatpush2.bf16.xpose.msra.mxu0 0
    %2058 = vmatprep.subr.bf16.mxu0 0
    %2059 = vmatpush2.bf16.xpose.msra.mxu0 0
    %2060 = vmatprep.subr.bf16.mxu0 0
    %2061 = vmatpush2.bf16.xpose.msra.mxu0 0
    %2062 = vmatprep.subr.bf16.mxu0 0
    %2063 = vmatpush2.bf16.xpose.msra.mxu0 0
    %2064 = vmatprep.subr.bf16.mxu0 0
    %2065 = vmatpush2.bf16.xpose.msra.mxu0 0
    %2066 = vmatprep.mubr.bf16.mxu0 0
    %2067 = vmatmul.mubr.bf16.gmra.mxu0 %v2029
    %v2068 = vpop.f32.mrf.mxu0
    %v2069 = vadd.f32 %v160, %v2068
    %v2070 = vpop.f32.mrf.mxu0
    %v2071 = vpop.f32.mrf.mxu0
    %v2072 = vpop.f32.mrf.mxu0
    %2073 = vdwg.mxu0
    %v2074 = vsel %vm238, %v2019, -inf
    %2075 = vmax.xlane.f32.xlu0 %v2074
    %v2076 = vpop.xlane.xlu0 %2075
    %v2077 = vsel %vm238, %v2069, -inf
    %2078 = vmax.xlane.f32.xlu0 %v2077
    %v2079 = vpop.xlane.xlu0 %2078
    %v2080 = vsub.f32 %v2019, %v2076
    %v2081 = vsub.f32 %v2069, %v2079
    %v2082 = vmul.f32 %v2080, 1.442695
    %v2083 = vpow.pop %v2082
    %v2084 = vmul.f32 %v2081, 1.442695
    %v2085 = vpow.pop %v2084
    %v2086 = vsel %vm238, %v2083, 0.0
    %2087 = vadd.xlane.f32.xlu0 %v2086
    %v2088 = vpop.xlane.xlu0 %2087
    %v2089 = vsel %vm238, %v2085, 0.0
    %2090 = vadd.xlane.f32.xlu0 %v2089
    %v2091 = vpop.xlane.xlu0 %2090
    %v2092 = vrcp.pop %v2088
    %v2093 = vrcp.pop %v2091
    %v2094 = vmul.f32 %v2083, %v2092
    %v2095 = vmul.f32 %v2085, %v2093
    %v2096 = vpack.c.bf16 %v2094, %v2094
    %v2097 = vpack.c.bf16 %v2095, %v2095
    %2098 = vrot.lane.b32.xlu0 %v1536, 48
    %v2099 = vpop.permute.xlu0 %2098
    %v2101 = vsel %vm238, %v2096, 0
    %v2104 = vsel %vm362, %v2099, 0
    %2106 = vmatprep.subr.bf16.mxu0 0
    %2107 = vmatpush1.bf16.msra.mxu0 0
    %2108 = vmatprep.subr.bf16.mxu0 0
    %2109 = vmatpush1.bf16.msra.mxu0 0
    %2110 = vmatprep.subr.bf16.mxu0 0
    %2111 = vmatpush1.bf16.msra.mxu0 0
    %2112 = vmatprep.subr.bf16.mxu0 0
    %2113 = vmatpush1.bf16.msra.mxu0 0
    %2114 = vmatprep.subr.bf16.mxu0 0
    %2115 = vmatpush1.bf16.msra.mxu0 0
    %2116 = vmatprep.subr.bf16.mxu0 0
    %2117 = vmatpush1.bf16.msra.mxu0 0
    %2118 = vmatprep.subr.bf16.mxu0 0
    %2119 = vmatpush1.bf16.msra.mxu0 0
    %2120 = vmatprep.subr.bf16.mxu0 0
    %2121 = vmatpush1.bf16.msra.mxu0 %v2104
    %2122 = vmatprep.subr.bf16.mxu0 0
    %2123 = vmatpush2.bf16.msra.mxu0 0
    %2124 = vmatprep.subr.bf16.mxu0 0
    %2125 = vmatpush2.bf16.msra.mxu0 0
    %2126 = vmatprep.subr.bf16.mxu0 0
    %2127 = vmatpush2.bf16.msra.mxu0 0
    %2128 = vmatprep.subr.bf16.mxu0 0
    %2129 = vmatpush2.bf16.msra.mxu0 0
    %2130 = vmatprep.subr.bf16.mxu0 0
    %2131 = vmatpush2.bf16.msra.mxu0 0
    %2132 = vmatprep.subr.bf16.mxu0 0
    %2133 = vmatpush2.bf16.msra.mxu0 0
    %2134 = vmatprep.subr.bf16.mxu0 0
    %2135 = vmatpush2.bf16.msra.mxu0 0
    %2136 = vmatprep.subr.bf16.mxu0 0
    %2137 = vmatpush2.bf16.msra.mxu0 0
    %2138 = vmatprep.mubr.bf16.mxu0 0
    %2139 = vmatmul.mubr.bf16.gmra.mxu0 %v2101
    %v2140 = vpop.f32.mrf.mxu0
    %v2141 = vadd.f32 0.0, %v2140
    %v2142 = vpop.f32.mrf.mxu0
    %v2143 = vpop.f32.mrf.mxu0
    %v2144 = vpop.f32.mrf.mxu0
    %2145 = vdwg.mxu0
    %2146 = vrot.lane.b32.xlu0 %v1537, 48
    %v2147 = vpop.permute.xlu0 %2146
    %v2149 = vsel %vm238, %v2097, 0
    %v2152 = vsel %vm362, %v2147, 0
    %2154 = vmatprep.subr.bf16.mxu0 0
    %2155 = vmatpush1.bf16.msra.mxu0 0
    %2156 = vmatprep.subr.bf16.mxu0 0
    %2157 = vmatpush1.bf16.msra.mxu0 0
    %2158 = vmatprep.subr.bf16.mxu0 0
    %2159 = vmatpush1.bf16.msra.mxu0 0
    %2160 = vmatprep.subr.bf16.mxu0 0
    %2161 = vmatpush1.bf16.msra.mxu0 0
    %2162 = vmatprep.subr.bf16.mxu0 0
    %2163 = vmatpush1.bf16.msra.mxu0 0
    %2164 = vmatprep.subr.bf16.mxu0 0
    %2165 = vmatpush1.bf16.msra.mxu0 0
    %2166 = vmatprep.subr.bf16.mxu0 0
    %2167 = vmatpush1.bf16.msra.mxu0 0
    %2168 = vmatprep.subr.bf16.mxu0 0
    %2169 = vmatpush1.bf16.msra.mxu0 %v2152
    %2170 = vmatprep.subr.bf16.mxu0 0
    %2171 = vmatpush2.bf16.msra.mxu0 0
    %2172 = vmatprep.subr.bf16.mxu0 0
    %2173 = vmatpush2.bf16.msra.mxu0 0
    %2174 = vmatprep.subr.bf16.mxu0 0
    %2175 = vmatpush2.bf16.msra.mxu0 0
    %2176 = vmatprep.subr.bf16.mxu0 0
    %2177 = vmatpush2.bf16.msra.mxu0 0
    %2178 = vmatprep.subr.bf16.mxu0 0
    %2179 = vmatpush2.bf16.msra.mxu0 0
    %2180 = vmatprep.subr.bf16.mxu0 0
    %2181 = vmatpush2.bf16.msra.mxu0 0
    %2182 = vmatprep.subr.bf16.mxu0 0
    %2183 = vmatpush2.bf16.msra.mxu0 0
    %2184 = vmatprep.subr.bf16.mxu0 0
    %2185 = vmatpush2.bf16.msra.mxu0 0
    %2186 = vmatprep.mubr.bf16.mxu0 0
    %2187 = vmatmul.mubr.bf16.gmra.mxu0 %v2149
    %v2188 = vpop.f32.mrf.mxu0
    %v2189 = vadd.f32 0.0, %v2188
    %v2190 = vpop.f32.mrf.mxu0
    %v2191 = vpop.f32.mrf.mxu0
    %v2192 = vpop.f32.mrf.mxu0
    %2193 = vdwg.mxu0
    %2194 = vrot.lane.b32.xlu0 %v1536, 104
    %v2195 = vpop.permute.xlu0 %2194
    %2196 = vrot.lane.b32.xlu0 %v1536, 72
    %v2197 = vpop.permute.xlu0 %2196
    %v2199 = vsel %vm238, %v2195, 0
    %v2202 = vsel %vm238, %v2197, 0
    %2204 = vmatprep.subr.bf16.mxu0 0
    %2205 = vmatpush1.bf16.xpose.msra.mxu0 0
    %2206 = vmatprep.subr.bf16.mxu0 0
    %2207 = vmatpush1.bf16.xpose.msra.mxu0 0
    %2208 = vmatprep.subr.bf16.mxu0 0
    %2209 = vmatpush1.bf16.xpose.msra.mxu0 0
    %2210 = vmatprep.subr.bf16.mxu0 0
    %2211 = vmatpush1.bf16.xpose.msra.mxu0 0
    %2212 = vmatprep.subr.bf16.mxu0 0
    %2213 = vmatpush1.bf16.xpose.msra.mxu0 0
    %2214 = vmatprep.subr.bf16.mxu0 0
    %2215 = vmatpush1.bf16.xpose.msra.mxu0 0
    %2216 = vmatprep.subr.bf16.mxu0 0
    %2217 = vmatpush1.bf16.xpose.msra.mxu0 0
    %2218 = vmatprep.subr.bf16.mxu0 0
    %2219 = vmatpush1.bf16.xpose.msra.mxu0 %v2202
    %2220 = vmatprep.subr.bf16.mxu0 0
    %2221 = vmatpush2.bf16.xpose.msra.mxu0 0
    %2222 = vmatprep.subr.bf16.mxu0 0
    %2223 = vmatpush2.bf16.xpose.msra.mxu0 0
    %2224 = vmatprep.subr.bf16.mxu0 0
    %2225 = vmatpush2.bf16.xpose.msra.mxu0 0
    %2226 = vmatprep.subr.bf16.mxu0 0
    %2227 = vmatpush2.bf16.xpose.msra.mxu0 0
    %2228 = vmatprep.subr.bf16.mxu0 0
    %2229 = vmatpush2.bf16.xpose.msra.mxu0 0
    %2230 = vmatprep.subr.bf16.mxu0 0
    %2231 = vmatpush2.bf16.xpose.msra.mxu0 0
    %2232 = vmatprep.subr.bf16.mxu0 0
    %2233 = vmatpush2.bf16.xpose.msra.mxu0 0
    %2234 = vmatprep.subr.bf16.mxu0 0
    %2235 = vmatpush2.bf16.xpose.msra.mxu0 0
    %2236 = vmatprep.mubr.bf16.mxu0 0
    %2237 = vmatmul.mubr.bf16.gmra.mxu0 %v2199
    %v2238 = vpop.f32.mrf.mxu0
    %v2239 = vadd.f32 %v160, %v2238
    %v2240 = vpop.f32.mrf.mxu0
    %v2241 = vpop.f32.mrf.mxu0
    %v2242 = vpop.f32.mrf.mxu0
    %2243 = vdwg.mxu0
    %2244 = vrot.lane.b32.xlu0 %v1537, 104
    %v2245 = vpop.permute.xlu0 %2244
    %2246 = vrot.lane.b32.xlu0 %v1537, 72
    %v2247 = vpop.permute.xlu0 %2246
    %v2249 = vsel %vm238, %v2245, 0
    %v2252 = vsel %vm238, %v2247, 0
    %2254 = vmatprep.subr.bf16.mxu0 0
    %2255 = vmatpush1.bf16.xpose.msra.mxu0 0
    %2256 = vmatprep.subr.bf16.mxu0 0
    %2257 = vmatpush1.bf16.xpose.msra.mxu0 0
    %2258 = vmatprep.subr.bf16.mxu0 0
    %2259 = vmatpush1.bf16.xpose.msra.mxu0 0
    %2260 = vmatprep.subr.bf16.mxu0 0
    %2261 = vmatpush1.bf16.xpose.msra.mxu0 0
    %2262 = vmatprep.subr.bf16.mxu0 0
    %2263 = vmatpush1.bf16.xpose.msra.mxu0 0
    %2264 = vmatprep.subr.bf16.mxu0 0
    %2265 = vmatpush1.bf16.xpose.msra.mxu0 0
    %2266 = vmatprep.subr.bf16.mxu0 0
    %2267 = vmatpush1.bf16.xpose.msra.mxu0 0
    %2268 = vmatprep.subr.bf16.mxu0 0
    %2269 = vmatpush1.bf16.xpose.msra.mxu0 %v2252
    %2270 = vmatprep.subr.bf16.mxu0 0
    %2271 = vmatpush2.bf16.xpose.msra.mxu0 0
    %2272 = vmatprep.subr.bf16.mxu0 0
    %2273 = vmatpush2.bf16.xpose.msra.mxu0 0
    %2274 = vmatprep.subr.bf16.mxu0 0
    %2275 = vmatpush2.bf16.xpose.msra.mxu0 0
    %2276 = vmatprep.subr.bf16.mxu0 0
    %2277 = vmatpush2.bf16.xpose.msra.mxu0 0
    %2278 = vmatprep.subr.bf16.mxu0 0
    %2279 = vmatpush2.bf16.xpose.msra.mxu0 0
    %2280 = vmatprep.subr.bf16.mxu0 0
    %2281 = vmatpush2.bf16.xpose.msra.mxu0 0
    %2282 = vmatprep.subr.bf16.mxu0 0
    %2283 = vmatpush2.bf16.xpose.msra.mxu0 0
    %2284 = vmatprep.subr.bf16.mxu0 0
    %2285 = vmatpush2.bf16.xpose.msra.mxu0 0
    %2286 = vmatprep.mubr.bf16.mxu0 0
    %2287 = vmatmul.mubr.bf16.gmra.mxu0 %v2249
    %v2288 = vpop.f32.mrf.mxu0
    %v2289 = vadd.f32 %v160, %v2288
    %v2290 = vpop.f32.mrf.mxu0
    %v2291 = vpop.f32.mrf.mxu0
    %v2292 = vpop.f32.mrf.mxu0
    %2293 = vdwg.mxu0
    %v2294 = vsel %vm238, %v2239, -inf
    %2295 = vmax.xlane.f32.xlu0 %v2294
    %v2296 = vpop.xlane.xlu0 %2295
    %v2297 = vsel %vm238, %v2289, -inf
    %2298 = vmax.xlane.f32.xlu0 %v2297
    %v2299 = vpop.xlane.xlu0 %2298
    %v2300 = vsub.f32 %v2239, %v2296
    %v2301 = vsub.f32 %v2289, %v2299
    %v2302 = vmul.f32 %v2300, 1.442695
    %v2303 = vpow.pop %v2302
    %v2304 = vmul.f32 %v2301, 1.442695
    %v2305 = vpow.pop %v2304
    %v2306 = vsel %vm238, %v2303, 0.0
    %2307 = vadd.xlane.f32.xlu0 %v2306
    %v2308 = vpop.xlane.xlu0 %2307
    %v2309 = vsel %vm238, %v2305, 0.0
    %2310 = vadd.xlane.f32.xlu0 %v2309
    %v2311 = vpop.xlane.xlu0 %2310
    %v2312 = vrcp.pop %v2308
    %v2313 = vrcp.pop %v2311
    %v2314 = vmul.f32 %v2303, %v2312
    %v2315 = vmul.f32 %v2305, %v2313
    %v2316 = vpack.c.bf16 %v2314, %v2314
    %v2317 = vpack.c.bf16 %v2315, %v2315
    %2318 = vrot.lane.b32.xlu0 %v1536, 40
    %v2319 = vpop.permute.xlu0 %2318
    %v2321 = vsel %vm238, %v2316, 0
    %v2324 = vsel %vm362, %v2319, 0
    %2326 = vmatprep.subr.bf16.mxu0 0
    %2327 = vmatpush1.bf16.msra.mxu0 0
    %2328 = vmatprep.subr.bf16.mxu0 0
    %2329 = vmatpush1.bf16.msra.mxu0 0
    %2330 = vmatprep.subr.bf16.mxu0 0
    %2331 = vmatpush1.bf16.msra.mxu0 0
    %2332 = vmatprep.subr.bf16.mxu0 0
    %2333 = vmatpush1.bf16.msra.mxu0 0
    %2334 = vmatprep.subr.bf16.mxu0 0
    %2335 = vmatpush1.bf16.msra.mxu0 0
    %2336 = vmatprep.subr.bf16.mxu0 0
    %2337 = vmatpush1.bf16.msra.mxu0 0
    %2338 = vmatprep.subr.bf16.mxu0 0
    %2339 = vmatpush1.bf16.msra.mxu0 0
    %2340 = vmatprep.subr.bf16.mxu0 0
    %2341 = vmatpush1.bf16.msra.mxu0 %v2324
    %2342 = vmatprep.subr.bf16.mxu0 0
    %2343 = vmatpush2.bf16.msra.mxu0 0
    %2344 = vmatprep.subr.bf16.mxu0 0
    %2345 = vmatpush2.bf16.msra.mxu0 0
    %2346 = vmatprep.subr.bf16.mxu0 0
    %2347 = vmatpush2.bf16.msra.mxu0 0
    %2348 = vmatprep.subr.bf16.mxu0 0
    %2349 = vmatpush2.bf16.msra.mxu0 0
    %2350 = vmatprep.subr.bf16.mxu0 0
    %2351 = vmatpush2.bf16.msra.mxu0 0
    %2352 = vmatprep.subr.bf16.mxu0 0
    %2353 = vmatpush2.bf16.msra.mxu0 0
    %2354 = vmatprep.subr.bf16.mxu0 0
    %2355 = vmatpush2.bf16.msra.mxu0 0
    %2356 = vmatprep.subr.bf16.mxu0 0
    %2357 = vmatpush2.bf16.msra.mxu0 0
    %2358 = vmatprep.mubr.bf16.mxu0 0
    %2359 = vmatmul.mubr.bf16.gmra.mxu0 %v2321
    %v2360 = vpop.f32.mrf.mxu0
    %v2361 = vadd.f32 0.0, %v2360
    %v2362 = vpop.f32.mrf.mxu0
    %v2363 = vpop.f32.mrf.mxu0
    %v2364 = vpop.f32.mrf.mxu0
    %2365 = vdwg.mxu0
    %2366 = vrot.lane.b32.xlu0 %v1537, 40
    %v2367 = vpop.permute.xlu0 %2366
    %v2369 = vsel %vm238, %v2317, 0
    %v2372 = vsel %vm362, %v2367, 0
    %2374 = vmatprep.subr.bf16.mxu0 0
    %2375 = vmatpush1.bf16.msra.mxu0 0
    %2376 = vmatprep.subr.bf16.mxu0 0
    %2377 = vmatpush1.bf16.msra.mxu0 0
    %2378 = vmatprep.subr.bf16.mxu0 0
    %2379 = vmatpush1.bf16.msra.mxu0 0
    %2380 = vmatprep.subr.bf16.mxu0 0
    %2381 = vmatpush1.bf16.msra.mxu0 0
    %2382 = vmatprep.subr.bf16.mxu0 0
    %2383 = vmatpush1.bf16.msra.mxu0 0
    %2384 = vmatprep.subr.bf16.mxu0 0
    %2385 = vmatpush1.bf16.msra.mxu0 0
    %2386 = vmatprep.subr.bf16.mxu0 0
    %2387 = vmatpush1.bf16.msra.mxu0 0
    %2388 = vmatprep.subr.bf16.mxu0 0
    %2389 = vmatpush1.bf16.msra.mxu0 %v2372
    %2390 = vmatprep.subr.bf16.mxu0 0
    %2391 = vmatpush2.bf16.msra.mxu0 0
    %2392 = vmatprep.subr.bf16.mxu0 0
    %2393 = vmatpush2.bf16.msra.mxu0 0
    %2394 = vmatprep.subr.bf16.mxu0 0
    %2395 = vmatpush2.bf16.msra.mxu0 0
    %2396 = vmatprep.subr.bf16.mxu0 0
    %2397 = vmatpush2.bf16.msra.mxu0 0
    %2398 = vmatprep.subr.bf16.mxu0 0
    %2399 = vmatpush2.bf16.msra.mxu0 0
    %2400 = vmatprep.subr.bf16.mxu0 0
    %2401 = vmatpush2.bf16.msra.mxu0 0
    %2402 = vmatprep.subr.bf16.mxu0 0
    %2403 = vmatpush2.bf16.msra.mxu0 0
    %2404 = vmatprep.subr.bf16.mxu0 0
    %2405 = vmatpush2.bf16.msra.mxu0 0
    %2406 = vmatprep.mubr.bf16.mxu0 0
    %2407 = vmatmul.mubr.bf16.gmra.mxu0 %v2369
    %v2408 = vpop.f32.mrf.mxu0
    %v2409 = vadd.f32 0.0, %v2408
    %v2410 = vpop.f32.mrf.mxu0
    %v2411 = vpop.f32.mrf.mxu0
    %v2412 = vpop.f32.mrf.mxu0
    %2413 = vdwg.mxu0
    %2416 = vrot.lane.b32.xlu0 %v1921, 8
    %v2417 = vpop.permute.xlu0 %2416
    %2418 = vrot.lane.b32.xlu0 %v1969, 8
    %v2419 = vpop.permute.xlu0 %2418
    %2424 = vrot.lane.b32.xlu0 %v2141, 16
    %v2425 = vpop.permute.xlu0 %2424
    %2426 = vrot.lane.b32.xlu0 %v2189, 16
    %v2427 = vpop.permute.xlu0 %2426
    %2432 = vrot.lane.b32.xlu0 %v2361, 24
    %v2433 = vpop.permute.xlu0 %2432
    %2434 = vrot.lane.b32.xlu0 %v2409, 24
    %v2435 = vpop.permute.xlu0 %2434
    %v2438 = vsel %vm238, %v1701, %v2417
    %v2439 = vsel %vm238, %v1749, %v2419
    %v2440 = vsel %vm1140, %v2438, %v2425
    %v2441 = vsel %vm1140, %v2439, %v2427
    %v2442 = vsel %vm1143, %v2440, %v2433
    %v2443 = vsel %vm1143, %v2441, %v2435
    %v2444 = vpack.c.bf16 %v2443, %v2442
    %s2445 = scalar_lea.vmem %s4, 16
    %v2446 = vld [vmem:[%s2445] sm:$0xf]
    %v2447 = vld [vmem:[%s2445 + $0x4] sm:$0xf]
    %v2448 = vld [vmem:[%s2445 + $0x8] sm:$0xf]
    %v2449 = vld [vmem:[%s2445 + $0xc] sm:$0xf]
    %s2450 = scalar_lea.vmem [#allocation8], 1
    %v2451 = vld [vmem:[%s2450] sm:$0x1]
    %v2453 = vlaneseq
    %v2454 = vshrl.u32 %v2453, 7
    %v2455 = vsub.s32 0, %v2454
    %v2456 = vrot.slane %v2451, %v2455
    %v2462 = vunpack.c.l.b16 %v2446
    %v2463 = vunpack.c.l.b16 %v2447
    %v2464 = vunpack.c.l.b16 %v2448
    %v2465 = vunpack.c.l.b16 %v2449
    %v2466 = vpack.c.b16 %v2463, %v2462
    %v2467 = vpack.c.b16 %v2465, %v2464
    %v2471 = vsel %vm185, %v2444, 0
    %2473 = vmatprep.subr.bf16.mxu0 0
    %2474 = vmatpush1.bf16.msra.mxu0 0
    %2475 = vmatprep.subr.bf16.mxu0 0
    %2476 = vmatpush1.bf16.msra.mxu0 0
    %2477 = vmatprep.subr.bf16.mxu0 0
    %2478 = vmatpush1.bf16.msra.mxu0 0
    %2479 = vmatprep.subr.bf16.mxu0 0
    %2480 = vmatpush1.bf16.msra.mxu0 0
    %2481 = vmatprep.subr.bf16.mxu0 0
    %2482 = vmatpush1.bf16.msra.mxu0 0
    %2483 = vmatprep.subr.bf16.mxu0 0
    %2484 = vmatpush1.bf16.msra.mxu0 0
    %2485 = vmatprep.subr.bf16.mxu0 0
    %2486 = vmatpush1.bf16.msra.mxu0 %v2467
    %2487 = vmatprep.subr.bf16.mxu0 0
    %2488 = vmatpush1.bf16.msra.mxu0 %v2466
    %2489 = vmatprep.subr.bf16.mxu0 0
    %2490 = vmatpush2.bf16.msra.mxu0 0
    %2491 = vmatprep.subr.bf16.mxu0 0
    %2492 = vmatpush2.bf16.msra.mxu0 0
    %2493 = vmatprep.subr.bf16.mxu0 0
    %2494 = vmatpush2.bf16.msra.mxu0 0
    %2495 = vmatprep.subr.bf16.mxu0 0
    %2496 = vmatpush2.bf16.msra.mxu0 0
    %2497 = vmatprep.subr.bf16.mxu0 0
    %2498 = vmatpush2.bf16.msra.mxu0 0
    %2499 = vmatprep.subr.bf16.mxu0 0
    %2500 = vmatpush2.bf16.msra.mxu0 0
    %2501 = vmatprep.subr.bf16.mxu0 0
    %2502 = vmatpush2.bf16.msra.mxu0 0
    %2503 = vmatprep.subr.bf16.mxu0 0
    %2504 = vmatpush2.bf16.msra.mxu0 0
    %2505 = vmatprep.mubr.bf16.mxu0 0
    %2506 = vmatmul.mubr.bf16.gmra.mxu0 %v2471
    %v2507 = vpop.f32.mrf.mxu0
    %v2508 = vadd.f32 %v2456, %v2507
    %v2509 = vpop.f32.mrf.mxu0
    %v2510 = vpop.f32.mrf.mxu0
    %v2511 = vadd.f32 %v2456, %v2510
    %v2512 = vpop.f32.mrf.mxu0
    %2513 = vdwg.mxu0
    %v2514 = vadd.f32 %v1460, %v2508
    %v2515 = vadd.f32 %v1461, %v2511
    %s2516 = scalar_lea.vmem %s10, 1
    %v2517 = vld [vmem:[%s2516] sm:$0x1]
    %s2518 = scalar_lea.vmem %s11, 1
    %v2519 = vld [vmem:[%s2518] sm:$0x1]
    %v2520 = vsel %vm185, %v2514, 0.0
    %2521 = vadd.xlane.f32.xlu0 %v2520
    %v2522 = vpop.xlane.xlu0 %2521
    %v2523 = vsel %vm185, %v2515, 0.0
    %2524 = vadd.xlane.f32.xlu0 %v2523
    %v2525 = vpop.xlane.xlu0 %2524
    %v2526 = vmul.f32 %v2522, %v1224
    %v2527 = vmul.f32 %v2525, %v1224
    %v2528 = vsub.f32 %v2514, %v2526
    %v2529 = vsub.f32 %v2515, %v2527
    %v2530 = vmul.f32 %v2528, %v2528
    %v2531 = vmul.f32 %v2529, %v2529
    %v2532 = vsel %vm185, %v2530, 0.0
    %2533 = vadd.xlane.f32.xlu0 %v2532
    %v2534 = vpop.xlane.xlu0 %2533
    %v2535 = vsel %vm185, %v2531, 0.0
    %2536 = vadd.xlane.f32.xlu0 %v2535
    %v2537 = vpop.xlane.xlu0 %2536
    %v2538 = vmul.f32 %v2534, %v1224
    %v2539 = vmul.f32 %v2537, %v1224
    %v2540 = vadd.f32 %v2538, 1e-05
    %v2541 = vadd.f32 %v2539, 1e-05
    %v2542 = vrsqrt.pop %v2540
    %v2543 = vrsqrt.pop %v2541
    %v2544 = vmul.f32 %v2528, %v2542
    %v2545 = vmul.f32 %v2529, %v2543
    %v2547 = vlaneseq
    %v2548 = vshrl.u32 %v2547, 7
    %v2549 = vsub.s32 0, %v2548
    %v2550 = vrot.slane %v2517, %v2549
    %v2552 = vmul.f32 %v2544, %v2550
    %v2553 = vmul.f32 %v2545, %v2550
    %v2555 = vlaneseq
    %v2556 = vshrl.u32 %v2555, 7
    %v2557 = vsub.s32 0, %v2556
    %v2558 = vrot.slane %v2519, %v2557
    %v2560 = vadd.f32 %v2552, %v2558
    %v2561 = vadd.f32 %v2553, %v2558
    %v2562 = vpack.c.bf16 %v2561, %v2560
    %s2563 = scalar_lea.vmem %s6, 16
    %v2564 = vld [vmem:[%s2563] sm:$0xf]
    %v2565 = vld [vmem:[%s2563 + $0x4] sm:$0xf]
    %v2566 = vld [vmem:[%s2563 + $0x8] sm:$0xf]
    %v2567 = vld [vmem:[%s2563 + $0xc] sm:$0xf]
    %s2568 = scalar_lea.vmem [#allocation10], 1
    %v2569 = vld [vmem:[%s2568] sm:$0x1]
    %v2571 = vlaneseq
    %v2572 = vshrl.u32 %v2571, 7
    %v2573 = vsub.s32 0, %v2572
    %v2574 = vrot.slane %v2569, %v2573
    %v2580 = vunpack.c.l.b16 %v2564
    %v2581 = vunpack.c.l.b16 %v2565
    %v2582 = vunpack.c.l.b16 %v2566
    %v2583 = vunpack.c.l.b16 %v2567
    %v2584 = vpack.c.b16 %v2581, %v2580
    %v2585 = vpack.c.b16 %v2583, %v2582
    %v2589 = vsel %vm185, %v2562, 0
    %2591 = vmatprep.subr.bf16.mxu0 0
    %2592 = vmatpush1.bf16.msra.mxu0 0
    %2593 = vmatprep.subr.bf16.mxu0 0
    %2594 = vmatpush1.bf16.msra.mxu0 0
    %2595 = vmatprep.subr.bf16.mxu0 0
    %2596 = vmatpush1.bf16.msra.mxu0 0
    %2597 = vmatprep.subr.bf16.mxu0 0
    %2598 = vmatpush1.bf16.msra.mxu0 0
    %2599 = vmatprep.subr.bf16.mxu0 0
    %2600 = vmatpush1.bf16.msra.mxu0 0
    %2601 = vmatprep.subr.bf16.mxu0 0
    %2602 = vmatpush1.bf16.msra.mxu0 0
    %2603 = vmatprep.subr.bf16.mxu0 0
    %2604 = vmatpush1.bf16.msra.mxu0 %v2585
    %2605 = vmatprep.subr.bf16.mxu0 0
    %2606 = vmatpush1.bf16.msra.mxu0 %v2584
    %2607 = vmatprep.subr.bf16.mxu0 0
    %2608 = vmatpush2.bf16.msra.mxu0 0
    %2609 = vmatprep.subr.bf16.mxu0 0
    %2610 = vmatpush2.bf16.msra.mxu0 0
    %2611 = vmatprep.subr.bf16.mxu0 0
    %2612 = vmatpush2.bf16.msra.mxu0 0
    %2613 = vmatprep.subr.bf16.mxu0 0
    %2614 = vmatpush2.bf16.msra.mxu0 0
    %2615 = vmatprep.subr.bf16.mxu0 0
    %2616 = vmatpush2.bf16.msra.mxu0 0
    %2617 = vmatprep.subr.bf16.mxu0 0
    %2618 = vmatpush2.bf16.msra.mxu0 0
    %2619 = vmatprep.subr.bf16.mxu0 0
    %2620 = vmatpush2.bf16.msra.mxu0 0
    %2621 = vmatprep.subr.bf16.mxu0 0
    %2622 = vmatpush2.bf16.msra.mxu0 0
    %2623 = vmatprep.mubr.bf16.mxu0 0
    %2624 = vmatmul.mubr.bf16.gmra.mxu0 %v2589
    %v2625 = vpop.f32.mrf.mxu0
    %v2626 = vadd.f32 %v2574, %v2625
    %v2627 = vpop.f32.mrf.mxu0
    %v2628 = vpop.f32.mrf.mxu0
    %v2629 = vadd.f32 %v2574, %v2628
    %v2630 = vpop.f32.mrf.mxu0
    %2631 = vdwg.mxu0
    %v2632 = vmax.f32 %v2626, 0.0
    %v2633 = vmax.f32 %v2629, 0.0
    %v2634 = vpack.c.bf16 %v2633, %v2632
    %s2635 = scalar_lea.vmem %s8, 32
    %v2636 = vld [vmem:[%s2635] sm:$0xf]
    %v2637 = vld [vmem:[%s2635 + $0x4] sm:$0xf]
    %v2638 = vld [vmem:[%s2635 + $0x8] sm:$0xf]
    %v2639 = vld [vmem:[%s2635 + $0xc] sm:$0xf]
    %v2640 = vld [vmem:[%s2635 + $0x10] sm:$0xf]
    %v2641 = vld [vmem:[%s2635 + $0x14] sm:$0xf]
    %v2642 = vld [vmem:[%s2635 + $0x18] sm:$0xf]
    %v2643 = vld [vmem:[%s2635 + $0x1c] sm:$0xf]
    %s2644 = scalar_lea.vmem [#allocation11], 1
    %v2645 = vld [vmem:[%s2644] sm:$0x1]
    %v2647 = vlaneseq
    %v2648 = vshrl.u32 %v2647, 7
    %v2649 = vsub.s32 0, %v2648
    %v2650 = vrot.slane %v2645, %v2649
    %v2660 = vunpack.c.l.b16 %v2636
    %v2661 = vunpack.c.l.b16 %v2637
    %v2662 = vunpack.c.l.b16 %v2638
    %v2663 = vunpack.c.l.b16 %v2639
    %v2664 = vunpack.c.l.b16 %v2640
    %v2665 = vunpack.c.l.b16 %v2641
    %v2666 = vunpack.c.l.b16 %v2642
    %v2667 = vunpack.c.l.b16 %v2643
    %v2668 = vpack.c.b16 %v2661, %v2660
    %v2669 = vpack.c.b16 %v2663, %v2662
    %v2670 = vpack.c.b16 %v2665, %v2664
    %v2671 = vpack.c.b16 %v2667, %v2666
    %v2677 = vsel %vm1371, %v2634, 0
    %2679 = vmatprep.subr.bf16.mxu0 0
    %2680 = vmatpush1.bf16.msra.mxu0 0
    %2681 = vmatprep.subr.bf16.mxu0 0
    %2682 = vmatpush1.bf16.msra.mxu0 0
    %2683 = vmatprep.subr.bf16.mxu0 0
    %2684 = vmatpush1.bf16.msra.mxu0 0
    %2685 = vmatprep.subr.bf16.mxu0 0
    %2686 = vmatpush1.bf16.msra.mxu0 0
    %2687 = vmatprep.subr.bf16.mxu0 0
    %2688 = vmatpush1.bf16.msra.mxu0 %v2671
    %2689 = vmatprep.subr.bf16.mxu0 0
    %2690 = vmatpush1.bf16.msra.mxu0 %v2670
    %2691 = vmatprep.subr.bf16.mxu0 0
    %2692 = vmatpush1.bf16.msra.mxu0 %v2669
    %2693 = vmatprep.subr.bf16.mxu0 0
    %2694 = vmatpush1.bf16.msra.mxu0 %v2668
    %2695 = vmatprep.subr.bf16.mxu0 0
    %2696 = vmatpush2.bf16.msra.mxu0 0
    %2697 = vmatprep.subr.bf16.mxu0 0
    %2698 = vmatpush2.bf16.msra.mxu0 0
    %2699 = vmatprep.subr.bf16.mxu0 0
    %2700 = vmatpush2.bf16.msra.mxu0 0
    %2701 = vmatprep.subr.bf16.mxu0 0
    %2702 = vmatpush2.bf16.msra.mxu0 0
    %2703 = vmatprep.subr.bf16.mxu0 0
    %2704 = vmatpush2.bf16.msra.mxu0 0
    %2705 = vmatprep.subr.bf16.mxu0 0
    %2706 = vmatpush2.bf16.msra.mxu0 0
    %2707 = vmatprep.subr.bf16.mxu0 0
    %2708 = vmatpush2.bf16.msra.mxu0 0
    %2709 = vmatprep.subr.bf16.mxu0 0
    %2710 = vmatpush2.bf16.msra.mxu0 0
    %2711 = vmatprep.mubr.bf16.mxu0 0
    %2712 = vmatmul.mubr.bf16.gmra.mxu0 %v2677
    %v2713 = vpop.f32.mrf.mxu0
    %v2714 = vadd.f32 %v2650, %v2713
    %v2715 = vpop.f32.mrf.mxu0
    %v2716 = vpop.f32.mrf.mxu0
    %v2717 = vadd.f32 %v2650, %v2716
    %v2718 = vpop.f32.mrf.mxu0
    %2719 = vdwg.mxu0
    %v2720 = vadd.f32 %v2560, %v2714
    %v2721 = vadd.f32 %v2561, %v2717
    %s2722 = scalar_lea.vmem [#allocation13], 1
    %v2723 = vld [vmem:[%s2722] sm:$0x1]
    %s2724 = scalar_lea.vmem %s13, 1
    %v2725 = vld [vmem:[%s2724] sm:$0x1]
    %v2726 = vsel %vm185, %v2720, 0.0
    %2727 = vadd.xlane.f32.xlu0 %v2726
    %v2728 = vpop.xlane.xlu0 %2727
    %v2729 = vsel %vm185, %v2721, 0.0
    %2730 = vadd.xlane.f32.xlu0 %v2729
    %v2731 = vpop.xlane.xlu0 %2730
    %v2732 = vmul.f32 %v2728, %v1224
    %v2733 = vmul.f32 %v2731, %v1224
    %v2734 = vsub.f32 %v2720, %v2732
    %v2735 = vsub.f32 %v2721, %v2733
    %v2736 = vmul.f32 %v2734, %v2734
    %v2737 = vmul.f32 %v2735, %v2735
    %v2738 = vsel %vm185, %v2736, 0.0
    %2739 = vadd.xlane.f32.xlu0 %v2738
    %v2740 = vpop.xlane.xlu0 %2739
    %v2741 = vsel %vm185, %v2737, 0.0
    %2742 = vadd.xlane.f32.xlu0 %v2741
    %v2743 = vpop.xlane.xlu0 %2742
    %v2744 = vmul.f32 %v2740, %v1224
    %v2745 = vmul.f32 %v2743, %v1224
    %v2746 = vadd.f32 %v2744, 1e-05
    %v2747 = vadd.f32 %v2745, 1e-05
    %v2748 = vrsqrt.pop %v2746
    %v2749 = vrsqrt.pop %v2747
    %v2750 = vmul.f32 %v2734, %v2748
    %v2751 = vmul.f32 %v2735, %v2749
    %v2753 = vlaneseq
    %v2754 = vshrl.u32 %v2753, 7
    %v2755 = vsub.s32 0, %v2754
    %v2756 = vrot.slane %v2723, %v2755
    %v2758 = vmul.f32 %v2750, %v2756
    %v2759 = vmul.f32 %v2751, %v2756
    %v2761 = vlaneseq
    %v2762 = vshrl.u32 %v2761, 7
    %v2763 = vsub.s32 0, %v2762
    %v2764 = vrot.slane %v2725, %v2763
    %v2766 = vadd.f32 %v2758, %v2764
    %v2767 = vadd.f32 %v2759, %v2764
    %v2768 = vpack.c.bf16 %v2767, %v2766
    %v2769 = vld [vmem:[%s14] sm:$0xf]
    %v2770 = vld [vmem:[%s14 + $0x4] sm:$0xf]
    %v2771 = vld [vmem:[%s14 + $0x8] sm:$0xf]
    %v2772 = vld [vmem:[%s14 + $0xc] sm:$0xf]
    %v2773 = vld [vmem:[%s15] sm:$0x1]
    %v2775 = vlaneseq
    %v2776 = vshrl.u32 %v2775, 7
    %v2777 = vsub.s32 0, %v2776
    %v2778 = vrot.slane %v2773, %v2777
    %v2784 = vunpack.c.l.b16 %v2769
    %v2785 = vunpack.c.l.b16 %v2770
    %v2786 = vunpack.c.l.b16 %v2771
    %v2787 = vunpack.c.l.b16 %v2772
    %v2788 = vpack.c.b16 %v2785, %v2784
    %v2789 = vpack.c.b16 %v2787, %v2786
    %v2793 = vsel %vm185, %v2768, 0
    %2795 = vmatprep.subr.bf16.mxu0 0
    %2796 = vmatpush1.bf16.msra.mxu0 0
    %2797 = vmatprep.subr.bf16.mxu0 0
    %2798 = vmatpush1.bf16.msra.mxu0 0
    %2799 = vmatprep.subr.bf16.mxu0 0
    %2800 = vmatpush1.bf16.msra.mxu0 0
    %2801 = vmatprep.subr.bf16.mxu0 0
    %2802 = vmatpush1.bf16.msra.mxu0 0
    %2803 = vmatprep.subr.bf16.mxu0 0
    %2804 = vmatpush1.bf16.msra.mxu0 0
    %2805 = vmatprep.subr.bf16.mxu0 0
    %2806 = vmatpush1.bf16.msra.mxu0 0
    %2807 = vmatprep.subr.bf16.mxu0 0
    %2808 = vmatpush1.bf16.msra.mxu0 %v2789
    %2809 = vmatprep.subr.bf16.mxu0 0
    %2810 = vmatpush1.bf16.msra.mxu0 %v2788
    %2811 = vmatprep.subr.bf16.mxu0 0
    %2812 = vmatpush2.bf16.msra.mxu0 0
    %2813 = vmatprep.subr.bf16.mxu0 0
    %2814 = vmatpush2.bf16.msra.mxu0 0
    %2815 = vmatprep.subr.bf16.mxu0 0
    %2816 = vmatpush2.bf16.msra.mxu0 0
    %2817 = vmatprep.subr.bf16.mxu0 0
    %2818 = vmatpush2.bf16.msra.mxu0 0
    %2819 = vmatprep.subr.bf16.mxu0 0
    %2820 = vmatpush2.bf16.msra.mxu0 0
    %2821 = vmatprep.subr.bf16.mxu0 0
    %2822 = vmatpush2.bf16.msra.mxu0 0
    %2823 = vmatprep.subr.bf16.mxu0 0
    %2824 = vmatpush2.bf16.msra.mxu0 0
    %2825 = vmatprep.subr.bf16.mxu0 0
    %2826 = vmatpush2.bf16.msra.mxu0 0
    %2827 = vmatprep.mubr.bf16.mxu0 0
    %2828 = vmatmul.mubr.bf16.gmra.mxu0 %v2793
    %v2829 = vpop.f32.mrf.mxu0
    %v2830 = vadd.f32 %v2778, %v2829
    %v2831 = vpop.f32.mrf.mxu0
    %v2832 = vpop.f32.mrf.mxu0
    %v2833 = vadd.f32 %v2778, %v2832
    %v2834 = vpop.f32.mrf.mxu0
    %2835 = vdwg.mxu0
    %2836 = vst [vmem:[#allocation14] sm:$0xff] %v2830
    %2837 = vst [vmem:[#allocation14 + $0x8] sm:$0xff] %v2833
    // Predicated region
    $region94: #{tpu_custom_call.1} parent=1 // pred_check
      _
    $region95: #{tpu_custom_call.1} parent=1 // pred_check_branch
      %2839 = sbr.rel (0) target = $region97
    $region96: #{tpu_custom_call.1} parent=1 // pred_region
      %s2841 = ssub.s32 256, 256
      %2842 = vsyncadd [#allocation4], %s2841
      %s2843 = sshll.u32 [#allocation14], 4
      %s2844 = int_to_ptr.vmem [resolvable:$true] %s2843
      %2849 = dma.vmem_to_hbm [thread:$0]  %s2844, 256, %s16, [#allocation4], 128, 128, 8
    $region97: #{tpu_custom_call.1} parent=1 // pred_fallthru
      _
    // Predicated region
    $region98: #{tpu_custom_call.1} parent=1 // pred_check
      _
    $region99: #{tpu_custom_call.1} parent=1 // pred_check_branch
      %2851 = sbr.rel (0) target = $region101
    $region100: #{tpu_custom_call.1} parent=1 // pred_region
      %2852 = dma.done [#allocation4], 256
    $region101: #{tpu_custom_call.1} parent=1 // pred_fallthru
      _
    %2853 = vsyncpa [#allocation3], 1
    %2854 = vsyncpa [#allocation6], 1
    %2855 = vsyncpa [#allocation9], 1
    %2856 = vsyncpa [#allocation12], 1
    %2857 = vsyncpa [#allocation4], 1

</llo_original>
